<compile_context>
chip_gen: v7x
topology: tpu7x:2x2x1
jax: 0.10.0
libtpu: 0.0.40
codegen_flags: <defaults>
</compile_context>

<pallas_src>
import functools

import jax
import jax.numpy as jnp
from jax.experimental import pallas as pl
from jax.experimental.pallas import tpu as pltpu

_MXU_DTYPE = jnp.bfloat16   # matmul operand dtype (f32 accumulation on the MXU)
_NEG_SLOPE = 0.2
_LN_EPS = 1e-5


def _round_up(x, m):
    return (x + m - 1) // m * m


def _cdiv(a, b):
    return -(-a // b)


def _act(x, kind, negative_slope=_NEG_SLOPE):
    if kind == "none":
        return x
    if kind == "relu":
        return jnp.maximum(x, 0.0)
    if kind == "leaky_relu":
        return jnp.where(x >= 0, x, negative_slope * x)
    if kind == "softplus":
        # Numerically stable softplus; matches torch.nn.Softplus() closely.
        return jnp.maximum(x, 0.0) + jnp.log(1.0 + jnp.exp(-jnp.abs(x)))
    raise ValueError(f"unknown activation: {kind}")


# ------------------------------ fused kernel --------------------------------

def _segment_kernel(*refs, descr, negative_slope, eps):
    """One fused segment: a chain of [pre_act -> matmul(+bias) -> LayerNorm ->
    post_act] layers and residual blocks executed back-to-back on one
    (tile_m, d) activation tile that never leaves VMEM."""
    x_ref, o_ref = refs[0], refs[-1]
    param_it = iter(refs[1:-1])

    def _p():
        return next(param_it)[...]

    def _layer(h, pre, post, norm):
        w = _p()                                  # (d_in, d_out), bf16, resident
        b = _p().astype(jnp.float32)              # (1, d_out)
        if norm:
            g = _p().astype(jnp.float32)
            be = _p().astype(jnp.float32)
        h = _act(h, pre, negative_slope)
        # bf16 x bf16 -> f32 accumulation on the MXU.
        y = jnp.dot(h.astype(w.dtype), w, preferred_element_type=jnp.float32) + b
        if norm:
            # Single-pass LayerNorm statistics in f32 (biased variance, eps inside).
            inv_d = 1.0 / y.shape[-1]
            mean = jnp.sum(y, axis=-1, keepdims=True) * inv_d
            var = jnp.maximum(
                jnp.sum(y * y, axis=-1, keepdims=True) * inv_d - mean * mean, 0.0)
            y = (y - mean) * jax.lax.rsqrt(var + eps) * g + be
        return _act(y, post, negative_slope)

    h = x_ref[...].astype(jnp.float32)
    for unit in descr:
        if unit[0] == "layer":
            _, pre, post, norm = unit
            h = _layer(h, pre, post, norm)
        else:  # residual block (LayerNorm variant): h = h + LN2(W2 relu(LN1(W1 h)))
            t = _layer(h, "none", "relu", True)
            h = h + _layer(t, "none", "none", True)
    o_ref[...] = h.astype(o_ref.dtype)


def _run_segment(h, descr, seg_params, *, tile_m, vmem_cap):
    n_pad, d_in = h.shape
    grid_m = n_pad // tile_m
    d_out = seg_params[-1].shape[-1]
    max_d = max(max(a.shape[-1] for a in seg_params), d_in, d_out)

    in_specs = [pl.BlockSpec((tile_m, d_in), lambda i: (i, 0))]      # activation rows
    for a in seg_params:
        # Grid-invariant parameter block: constant index_map -> DMA'd once, resident.
        in_specs.append(pl.BlockSpec(a.shape, lambda i: (0, 0)))

    # VMEM budget: double-buffered params + double-buffered in/out activation
    # blocks + f32 epilogue temporaries; clamped below the chip's physical VMEM.
    par_bytes = sum(int(a.size) * a.dtype.itemsize for a in seg_params)
    buf_bytes = 2 * par_bytes
    act_bytes = 2 * tile_m * (d_in + d_out) * h.dtype.itemsize
    tmp_bytes = 6 * tile_m * max_d * 4
    need = buf_bytes + act_bytes + tmp_bytes
    vmem_limit = int(min(int(vmem_cap * 0.85), max(32 << 20, (need * 3) // 2)))

    kernel = functools.partial(_segment_kernel, descr=descr,
                               negative_slope=_NEG_SLOPE, eps=_LN_EPS)
    return pl.pallas_call(
        kernel,
        out_shape=jax.ShapeDtypeStruct((n_pad, d_out), h.dtype),
        grid_spec=pltpu.PrefetchScalarGridSpec(
            num_scalar_prefetch=0,
            grid=(grid_m,),
            in_specs=in_specs,
            out_specs=pl.BlockSpec((tile_m, d_out), lambda i: (i, 0)),
        ),
        compiler_params=pltpu.CompilerParams(
            dimension_semantics=("parallel",),
            vmem_limit_bytes=vmem_limit),
    )(h, *seg_params)


# --------------------------- layer-chain plumbing ---------------------------

def _unit_params(arrs):
    out = []
    for a in arrs:
        if a.ndim == 2:                       # weight matrix -> bf16 MXU operand
            out.append(a.astype(_MXU_DTYPE))
        else:                                 # bias / LN affine -> f32 row (1, d)
            out.append(a.astype(jnp.float32).reshape(1, -1))
    return tuple(out)


def _build_units(p):
    """Flatten the model into (descriptor, params) units; residual blocks are
    atomic so a segment boundary never splits a skip connection."""
    units = []

    def layer(w, b, g=None, be=None, pre="none", post="none"):
        norm = g is not None
        arrs = (w, b) + ((g, be) if norm else ())
        units.append((("layer", pre, post, norm), _unit_params(arrs)))

    # encoder
    layer(p["enc0_w"], p["enc0_b"])
    layer(p["enc1_w"], p["enc1_b"], p["enc1_g"], p["enc1_be"], pre="leaky_relu")
    layer(p["enc2_w"], p["enc2_b"], p["enc2_g"], p["enc2_be"],
          pre="leaky_relu", post="leaky_relu")           # fuses trailing LeakyReLU
    # residual stack
    for rb in p["res"]:
        arrs = (rb["w1"], rb["b1"], rb["g1"], rb["be1"],
                rb["w2"], rb["b2"], rb["g2"], rb["be2"])
        units.append((("res",), _unit_params(arrs)))
    # decoder
    layer(p["dec0_w"], p["dec0_b"], p["dec0_g"], p["dec0_be"], pre="relu")
    layer(p["dec1_w"], p["dec1_b"], p["dec1_g"], p["dec1_be"], pre="relu")
    layer(p["dec2_w"], p["dec2_b"], pre="relu", post="softplus")   # fuses Softplus
    return units


def _vmem_capacity_bytes():
    try:
        return int(pltpu.get_tpu_info().vmem_capacity_bytes)
    except Exception:
        return 64 * 1024 * 1024               # conservative (v7x) default


def _segment(units, weight_budget):
    segs, cur, cur_bytes = [], [], 0
    for entry, arrs in units:
        nbytes = 2 * sum(int(a.size) * a.dtype.itemsize for a in arrs)  # dbl-buffered
        if cur and cur_bytes + nbytes > weight_budget:
            segs.append(cur)
            cur, cur_bytes = [], 0
        cur.append((entry, arrs))
        cur_bytes += nbytes
    if cur:
        segs.append(cur)
    return segs


def generator_res_ae_forward(params, x, *, max_tile_m=256):
    """GeneratorResAE forward; a single fused pallas_call at demo sizes."""
    n, _ = x.shape
    units = _build_units(params)

    # Batch tiling: multiple-of-8 row tiles, >=2 grid steps when the batch allows
    # (v7x megacore), minimal zero padding, padded once for the whole network.
    n8 = _round_up(max(n, 1), 8)
    num_tiles = max(_cdiv(n8, max_tile_m), 2 if n8 >= 16 else 1)
    tile_m = _round_up(_cdiv(n8, num_tiles), 8)
    n_pad = num_tiles * tile_m
    h = jnp.pad(x, ((0, n_pad - n), (0, 0))) if n_pad != n else x

    # Fusion gate: keep as many consecutive layers as fit VMEM-resident per call.
    vmem_cap = _vmem_capacity_bytes()
    max_d = max(max(a.shape[-1] for _, arrs in units for a in arrs), x.shape[1])
    act_reserve = (2 * 2 * tile_m * max_d * x.dtype.itemsize   # in/out double buffers
                   + 6 * tile_m * max_d * 4)                   # f32 intermediates
    weight_budget = max(int(vmem_cap * 0.75) - act_reserve, 8 << 20)
    segments = _segment(units, weight_budget)

    for seg in segments:
        descr = tuple(entry for entry, _ in seg)
        seg_params = tuple(a for _, arrs in seg for a in arrs)
        h = _run_segment(h, descr, seg_params, tile_m=tile_m, vmem_cap=vmem_cap)
    return h[:n] if n_pad != n else h


# ----------------------------- parameter init -------------------------------

def _init_linear(key, d_in, d_out, dtype=jnp.float32):
    kw, kb = jax.random.split(key)
    bound = 1.0 / (d_in ** 0.5)
    w = jax.random.uniform(kw, (d_in, d_out), dtype, -bound, bound)
    b = jax.random.uniform(kb, (d_out,), dtype, -bound, bound)
    return w, b


def _init_ln(key, d, dtype=jnp.float32):
    kg, kb = jax.random.split(key)
    gamma = 1.0 + 0.1 * jax.random.normal(kg, (d,), dtype)
    beta = 0.1 * jax.random.normal(kb, (d,), dtype)
    return gamma, beta


def init_generator_params(key, input_shape, nres=4, num_filter=5000):
    # NOTE: for the real model prefer lane-dense widths (e.g. 5000->5120) so
    # output stores stay unmasked; the demo dims are already multiples of 128.
    nf = num_filter
    dims = {"enc0": (input_shape, nf), "enc1": (nf, nf // 4), "enc2": (nf // 4, nf // 8),
            "dec0": (nf // 8, nf // 4), "dec1": (nf // 4, nf), "dec2": (nf, input_shape)}
    keys = jax.random.split(key, 6 + nres)
    p = {}
    for k, (name, (di, do)) in zip(keys[:6], dims.items()):
        kl, kn = jax.random.split(k)
        p[name + "_w"], p[name + "_b"] = _init_linear(kl, di, do)
        p[name + "_g"], p[name + "_be"] = _init_ln(kn, do)
    m = nf // 8
    res = []
    for k in keys[6:]:
        k1, k2, k3, k4 = jax.random.split(k, 4)
        w1, b1 = _init_linear(k1, m, m)
        g1, be1 = _init_ln(k2, m)
        w2, b2 = _init_linear(k3, m, m)
        g2, be2 = _init_ln(k4, m)
        res.append(dict(w1=w1, b1=b1, g1=g1, be1=be1,
                        w2=w2, b2=b2, g2=g2, be2=be2))
    p["res"] = res
    return p


# ------------------------------ pure-JAX ref ---------------------------------
# Mirrors the kernel numerics (bf16 matmul operands, f32 accumulation/epilogue).

def generator_res_ae_ref(p, x):
    bf = lambda a: a.astype(jnp.bfloat16)
    dot = lambda a, w: jnp.dot(bf(a), bf(w), preferred_element_type=jnp.float32)

    def ln(y, g, be, eps=_LN_EPS):
        m = jnp.mean(y, -1, keepdims=True)
        v = jnp.mean((y - m) ** 2, -1, keepdims=True)
        return (y - m) * jax.lax.rsqrt(v + eps) * g + be

    lrelu = lambda t: jnp.where(t >= 0, t, _NEG_SLOPE * t)
    relu = lambda t: jnp.maximum(t, 0.0)
    softplus = lambda t: jnp.maximum(t, 0.0) + jnp.log(1.0 + jnp.exp(-jnp.abs(t)))

    h = dot(x, p["enc0_w"]) + p["enc0_b"]
    h = ln(dot(lrelu(h), p["enc1_w"]) + p["enc1_b"], p["enc1_g"], p["enc1_be"])
    h = ln(dot(lrelu(h), p["enc2_w"]) + p["enc2_b"], p["enc2_g"], p["enc2_be"])
    h = lrelu(h)
    for rb in p["res"]:
        t = relu(ln(dot(h, rb["w1"]) + rb["b1"], rb["g1"], rb["be1"]))
        h = h + ln(dot(t, rb["w2"]) + rb["b2"], rb["g2"], rb["be2"])
    h = ln(dot(relu(h), p["dec0_w"]) + p["dec0_b"], p["dec0_g"], p["dec0_be"])
    h = ln(dot(relu(h), p["dec1_w"]) + p["dec1_b"], p["dec1_g"], p["dec1_be"])
    h = dot(relu(h), p["dec2_w"]) + p["dec2_b"]
    return softplus(h)


if __name__ == "__main__":
    # Small shapes consistent with the module, lane-dense (multiples of 128):
    # GeneratorResAE(input_shape=128, nres=2, num_filter=1024) -> hidden dims
    # 1024 / 256 / 128; batch of 16 rows.  Whole model = ONE pallas_call.
    INPUT_SHAPE, NUM_FILTER, NRES, BATCH = 128, 1024, 2, 16

    key = jax.random.PRNGKey(0)
    kp, kx = jax.random.split(key)
    params = init_generator_params(kp, INPUT_SHAPE, nres=NRES, num_filter=NUM_FILTER)
    x = jax.random.normal(kx, (BATCH, INPUT_SHAPE), dtype=jnp.float32)

    fwd = jax.jit(generator_res_ae_forward)
    out = jax.block_until_ready(fwd(params, x))

    ref = generator_res_ae_ref(params, x)
    assert out.shape == (BATCH, INPUT_SHAPE), out.shape
    assert bool(jnp.all(jnp.isfinite(out)))
    assert jnp.allclose(out, ref, atol=5e-3, rtol=5e-3), \
        float(jnp.max(jnp.abs(out - ref)))

    print("KERNEL_OK")
</pallas_src>

<mosaic_0001>
module attributes {stable_mosaic.version = 11 : i64} {
  func.func @_segment_kernel(%arg0: i32, %arg1: memref<8x128xf32, #tpu.memory_space<vmem>>, %arg2: memref<128x1024xbf16, #tpu.memory_space<vmem>>, %arg3: memref<1x1024xf32, #tpu.memory_space<vmem>>, %arg4: memref<1024x256xbf16, #tpu.memory_space<vmem>>, %arg5: memref<1x256xf32, #tpu.memory_space<vmem>>, %arg6: memref<1x256xf32, #tpu.memory_space<vmem>>, %arg7: memref<1x256xf32, #tpu.memory_space<vmem>>, %arg8: memref<256x128xbf16, #tpu.memory_space<vmem>>, %arg9: memref<1x128xf32, #tpu.memory_space<vmem>>, %arg10: memref<1x128xf32, #tpu.memory_space<vmem>>, %arg11: memref<1x128xf32, #tpu.memory_space<vmem>>, %arg12: memref<128x128xbf16, #tpu.memory_space<vmem>>, %arg13: memref<1x128xf32, #tpu.memory_space<vmem>>, %arg14: memref<1x128xf32, #tpu.memory_space<vmem>>, %arg15: memref<1x128xf32, #tpu.memory_space<vmem>>, %arg16: memref<128x128xbf16, #tpu.memory_space<vmem>>, %arg17: memref<1x128xf32, #tpu.memory_space<vmem>>, %arg18: memref<1x128xf32, #tpu.memory_space<vmem>>, %arg19: memref<1x128xf32, #tpu.memory_space<vmem>>, %arg20: memref<128x128xbf16, #tpu.memory_space<vmem>>, %arg21: memref<1x128xf32, #tpu.memory_space<vmem>>, %arg22: memref<1x128xf32, #tpu.memory_space<vmem>>, %arg23: memref<1x128xf32, #tpu.memory_space<vmem>>, %arg24: memref<128x128xbf16, #tpu.memory_space<vmem>>, %arg25: memref<1x128xf32, #tpu.memory_space<vmem>>, %arg26: memref<1x128xf32, #tpu.memory_space<vmem>>, %arg27: memref<1x128xf32, #tpu.memory_space<vmem>>, %arg28: memref<128x256xbf16, #tpu.memory_space<vmem>>, %arg29: memref<1x256xf32, #tpu.memory_space<vmem>>, %arg30: memref<1x256xf32, #tpu.memory_space<vmem>>, %arg31: memref<1x256xf32, #tpu.memory_space<vmem>>, %arg32: memref<256x1024xbf16, #tpu.memory_space<vmem>>, %arg33: memref<1x1024xf32, #tpu.memory_space<vmem>>, %arg34: memref<1x1024xf32, #tpu.memory_space<vmem>>, %arg35: memref<1x1024xf32, #tpu.memory_space<vmem>>, %arg36: memref<1024x128xbf16, #tpu.memory_space<vmem>>, %arg37: memref<1x128xf32, #tpu.memory_space<vmem>>, %arg38: memref<8x128xf32, #tpu.memory_space<vmem>>) attributes {dimension_semantics = [#tpu.dimension_semantics<parallel>], iteration_bounds = array<i64: 2>, scalar_prefetch = 0 : i64, scratch_operands = 0 : i64, tpu.core_type = #tpu.core_type<tc>, window_params = [{transform_indices = @transform_0, window_bounds = array<i64: 8, 128>}, {pipeline_mode = #tpu.pipeline_mode<synchronous>, transform_indices = @transform_1, window_bounds = array<i64: 128, 1024>}, {pipeline_mode = #tpu.pipeline_mode<synchronous>, transform_indices = @transform_2, window_bounds = array<i64: 1, 1024>}, {pipeline_mode = #tpu.pipeline_mode<synchronous>, transform_indices = @transform_3, window_bounds = array<i64: 1024, 256>}, {pipeline_mode = #tpu.pipeline_mode<synchronous>, transform_indices = @transform_4, window_bounds = array<i64: 1, 256>}, {pipeline_mode = #tpu.pipeline_mode<synchronous>, transform_indices = @transform_5, window_bounds = array<i64: 1, 256>}, {pipeline_mode = #tpu.pipeline_mode<synchronous>, transform_indices = @transform_6, window_bounds = array<i64: 1, 256>}, {pipeline_mode = #tpu.pipeline_mode<synchronous>, transform_indices = @transform_7, window_bounds = array<i64: 256, 128>}, {pipeline_mode = #tpu.pipeline_mode<synchronous>, transform_indices = @transform_8, window_bounds = array<i64: 1, 128>}, {pipeline_mode = #tpu.pipeline_mode<synchronous>, transform_indices = @transform_9, window_bounds = array<i64: 1, 128>}, {pipeline_mode = #tpu.pipeline_mode<synchronous>, transform_indices = @transform_10, window_bounds = array<i64: 1, 128>}, {pipeline_mode = #tpu.pipeline_mode<synchronous>, transform_indices = @transform_11, window_bounds = array<i64: 128, 128>}, {pipeline_mode = #tpu.pipeline_mode<synchronous>, transform_indices = @transform_12, window_bounds = array<i64: 1, 128>}, {pipeline_mode = #tpu.pipeline_mode<synchronous>, transform_indices = @transform_13, window_bounds = array<i64: 1, 128>}, {pipeline_mode = #tpu.pipeline_mode<synchronous>, transform_indices = @transform_14, window_bounds = array<i64: 1, 128>}, {pipeline_mode = #tpu.pipeline_mode<synchronous>, transform_indices = @transform_15, window_bounds = array<i64: 128, 128>}, {pipeline_mode = #tpu.pipeline_mode<synchronous>, transform_indices = @transform_16, window_bounds = array<i64: 1, 128>}, {pipeline_mode = #tpu.pipeline_mode<synchronous>, transform_indices = @transform_17, window_bounds = array<i64: 1, 128>}, {pipeline_mode = #tpu.pipeline_mode<synchronous>, transform_indices = @transform_18, window_bounds = array<i64: 1, 128>}, {pipeline_mode = #tpu.pipeline_mode<synchronous>, transform_indices = @transform_19, window_bounds = array<i64: 128, 128>}, {pipeline_mode = #tpu.pipeline_mode<synchronous>, transform_indices = @transform_20, window_bounds = array<i64: 1, 128>}, {pipeline_mode = #tpu.pipeline_mode<synchronous>, transform_indices = @transform_21, window_bounds = array<i64: 1, 128>}, {pipeline_mode = #tpu.pipeline_mode<synchronous>, transform_indices = @transform_22, window_bounds = array<i64: 1, 128>}, {pipeline_mode = #tpu.pipeline_mode<synchronous>, transform_indices = @transform_23, window_bounds = array<i64: 128, 128>}, {pipeline_mode = #tpu.pipeline_mode<synchronous>, transform_indices = @transform_24, window_bounds = array<i64: 1, 128>}, {pipeline_mode = #tpu.pipeline_mode<synchronous>, transform_indices = @transform_25, window_bounds = array<i64: 1, 128>}, {pipeline_mode = #tpu.pipeline_mode<synchronous>, transform_indices = @transform_26, window_bounds = array<i64: 1, 128>}, {pipeline_mode = #tpu.pipeline_mode<synchronous>, transform_indices = @transform_27, window_bounds = array<i64: 128, 256>}, {pipeline_mode = #tpu.pipeline_mode<synchronous>, transform_indices = @transform_28, window_bounds = array<i64: 1, 256>}, {pipeline_mode = #tpu.pipeline_mode<synchronous>, transform_indices = @transform_29, window_bounds = array<i64: 1, 256>}, {pipeline_mode = #tpu.pipeline_mode<synchronous>, transform_indices = @transform_30, window_bounds = array<i64: 1, 256>}, {pipeline_mode = #tpu.pipeline_mode<synchronous>, transform_indices = @transform_31, window_bounds = array<i64: 256, 1024>}, {pipeline_mode = #tpu.pipeline_mode<synchronous>, transform_indices = @transform_32, window_bounds = array<i64: 1, 1024>}, {pipeline_mode = #tpu.pipeline_mode<synchronous>, transform_indices = @transform_33, window_bounds = array<i64: 1, 1024>}, {pipeline_mode = #tpu.pipeline_mode<synchronous>, transform_indices = @transform_34, window_bounds = array<i64: 1, 1024>}, {pipeline_mode = #tpu.pipeline_mode<synchronous>, transform_indices = @transform_35, window_bounds = array<i64: 1024, 128>}, {pipeline_mode = #tpu.pipeline_mode<synchronous>, transform_indices = @transform_36, window_bounds = array<i64: 1, 128>}, {transform_indices = @transform_37, window_bounds = array<i64: 8, 128>}]} {
    %c0 = arith.constant 0 : index
    %c0_0 = arith.constant 0 : index
    %0 = vector.load %arg1[%c0, %c0_0] : memref<8x128xf32, #tpu.memory_space<vmem>>, vector<8x128xf32>
    %c0_1 = arith.constant 0 : index
    %c0_2 = arith.constant 0 : index
    %1 = vector.load %arg2[%c0_1, %c0_2] : memref<128x1024xbf16, #tpu.memory_space<vmem>>, vector<128x1024xbf16>
    %c0_3 = arith.constant 0 : index
    %c0_4 = arith.constant 0 : index
    %2 = vector.load %arg3[%c0_3, %c0_4] : memref<1x1024xf32, #tpu.memory_space<vmem>>, vector<1x1024xf32>
    %3 = arith.truncf %0 : vector<8x128xf32> to vector<8x128xbf16>
    %cst = arith.constant dense<0.000000e+00> : vector<8x1024xf32>
    %4 = tpu.matmul %3, %1, %cst {dimension_numbers = #tpu.dot_dimension_numbers<[1], [0], [0], [1], [0, 0, 1, 1], [], []>} : vector<8x128xbf16>, vector<128x1024xbf16>, vector<8x1024xf32> -> vector<8x1024xf32>
    %5 = vector.broadcast %2 : vector<1x1024xf32> to vector<8x1024xf32>
    %6 = arith.addf %4, %5 : vector<8x1024xf32>
    %c0_5 = arith.constant 0 : index
    %c0_6 = arith.constant 0 : index
    %7 = vector.load %arg4[%c0_5, %c0_6] : memref<1024x256xbf16, #tpu.memory_space<vmem>>, vector<1024x256xbf16>
    %c0_7 = arith.constant 0 : index
    %c0_8 = arith.constant 0 : index
    %8 = vector.load %arg5[%c0_7, %c0_8] : memref<1x256xf32, #tpu.memory_space<vmem>>, vector<1x256xf32>
    %c0_9 = arith.constant 0 : index
    %c0_10 = arith.constant 0 : index
    %9 = vector.load %arg6[%c0_9, %c0_10] : memref<1x256xf32, #tpu.memory_space<vmem>>, vector<1x256xf32>
    %c0_11 = arith.constant 0 : index
    %c0_12 = arith.constant 0 : index
    %10 = vector.load %arg7[%c0_11, %c0_12] : memref<1x256xf32, #tpu.memory_space<vmem>>, vector<1x256xf32>
    %cst_13 = arith.constant 0.000000e+00 : f32
    %11 = vector.broadcast %cst_13 : f32 to vector<8x1024xf32>
    %12 = arith.cmpf oge, %6, %11 : vector<8x1024xf32>
    %cst_14 = arith.constant 2.000000e-01 : f32
    %13 = vector.broadcast %cst_14 : f32 to vector<8x1024xf32>
    %14 = arith.mulf %13, %6 : vector<8x1024xf32>
    %15 = arith.select %12, %6, %14 : vector<8x1024xi1>, vector<8x1024xf32>
    %16 = arith.truncf %15 : vector<8x1024xf32> to vector<8x1024xbf16>
    %cst_15 = arith.constant dense<0.000000e+00> : vector<8x256xf32>
    %17 = tpu.matmul %16, %7, %cst_15 {dimension_numbers = #tpu.dot_dimension_numbers<[1], [0], [0], [1], [0, 0, 1, 1], [], []>} : vector<8x1024xbf16>, vector<1024x256xbf16>, vector<8x256xf32> -> vector<8x256xf32>
    %18 = vector.broadcast %8 : vector<1x256xf32> to vector<8x256xf32>
    %19 = arith.addf %17, %18 : vector<8x256xf32>
    %cst_16 = arith.constant dense<0.000000e+00> : vector<8xf32>
    %20 = vector.multi_reduction <add>, %19, %cst_16 [1] : vector<8x256xf32> to vector<8xf32>
    %21 = vector.shape_cast %20 : vector<8xf32> to vector<8x1xf32>
    %cst_17 = arith.constant 3.906250e-03 : f32
    %22 = vector.broadcast %cst_17 : f32 to vector<8x1xf32>
    %23 = arith.mulf %21, %22 : vector<8x1xf32>
    %24 = arith.mulf %19, %19 : vector<8x256xf32>
    %cst_18 = arith.constant dense<0.000000e+00> : vector<8xf32>
    %25 = vector.multi_reduction <add>, %24, %cst_18 [1] : vector<8x256xf32> to vector<8xf32>
    %26 = vector.shape_cast %25 : vector<8xf32> to vector<8x1xf32>
    %cst_19 = arith.constant 3.906250e-03 : f32
    %27 = vector.broadcast %cst_19 : f32 to vector<8x1xf32>
    %28 = arith.mulf %26, %27 : vector<8x1xf32>
    %29 = arith.mulf %23, %23 : vector<8x1xf32>
    %30 = arith.subf %28, %29 : vector<8x1xf32>
    %cst_20 = arith.constant 0.000000e+00 : f32
    %31 = vector.broadcast %cst_20 : f32 to vector<8x1xf32>
    %32 = arith.maximumf %30, %31 : vector<8x1xf32>
    %33 = vector.broadcast %23 : vector<8x1xf32> to vector<8x256xf32>
    %34 = arith.subf %19, %33 : vector<8x256xf32>
    %cst_21 = arith.constant 9.99999974E-6 : f32
    %35 = vector.broadcast %cst_21 : f32 to vector<8x1xf32>
    %36 = arith.addf %32, %35 : vector<8x1xf32>
    %37 = math.rsqrt %36 : vector<8x1xf32>
    %38 = vector.broadcast %37 : vector<8x1xf32> to vector<8x256xf32>
    %39 = arith.mulf %34, %38 : vector<8x256xf32>
    %40 = vector.broadcast %9 : vector<1x256xf32> to vector<8x256xf32>
    %41 = arith.mulf %39, %40 : vector<8x256xf32>
    %42 = vector.broadcast %10 : vector<1x256xf32> to vector<8x256xf32>
    %43 = arith.addf %41, %42 : vector<8x256xf32>
    %c0_22 = arith.constant 0 : index
    %c0_23 = arith.constant 0 : index
    %44 = vector.load %arg8[%c0_22, %c0_23] : memref<256x128xbf16, #tpu.memory_space<vmem>>, vector<256x128xbf16>
    %c0_24 = arith.constant 0 : index
    %c0_25 = arith.constant 0 : index
    %45 = vector.load %arg9[%c0_24, %c0_25] : memref<1x128xf32, #tpu.memory_space<vmem>>, vector<1x128xf32>
    %c0_26 = arith.constant 0 : index
    %c0_27 = arith.constant 0 : index
    %46 = vector.load %arg10[%c0_26, %c0_27] : memref<1x128xf32, #tpu.memory_space<vmem>>, vector<1x128xf32>
    %c0_28 = arith.constant 0 : index
    %c0_29 = arith.constant 0 : index
    %47 = vector.load %arg11[%c0_28, %c0_29] : memref<1x128xf32, #tpu.memory_space<vmem>>, vector<1x128xf32>
    %cst_30 = arith.constant 0.000000e+00 : f32
    %48 = vector.broadcast %cst_30 : f32 to vector<8x256xf32>
    %49 = arith.cmpf oge, %43, %48 : vector<8x256xf32>
    %cst_31 = arith.constant 2.000000e-01 : f32
    %50 = vector.broadcast %cst_31 : f32 to vector<8x256xf32>
    %51 = arith.mulf %50, %43 : vector<8x256xf32>
    %52 = arith.select %49, %43, %51 : vector<8x256xi1>, vector<8x256xf32>
    %53 = arith.truncf %52 : vector<8x256xf32> to vector<8x256xbf16>
    %cst_32 = arith.constant dense<0.000000e+00> : vector<8x128xf32>
    %54 = tpu.matmul %53, %44, %cst_32 {dimension_numbers = #tpu.dot_dimension_numbers<[1], [0], [0], [1], [0, 0, 1, 1], [], []>} : vector<8x256xbf16>, vector<256x128xbf16>, vector<8x128xf32> -> vector<8x128xf32>
    %55 = vector.broadcast %45 : vector<1x128xf32> to vector<8x128xf32>
    %56 = arith.addf %54, %55 : vector<8x128xf32>
    %cst_33 = arith.constant dense<0.000000e+00> : vector<8xf32>
    %57 = vector.multi_reduction <add>, %56, %cst_33 [1] : vector<8x128xf32> to vector<8xf32>
    %58 = vector.shape_cast %57 : vector<8xf32> to vector<8x1xf32>
    %cst_34 = arith.constant 7.812500e-03 : f32
    %59 = vector.broadcast %cst_34 : f32 to vector<8x1xf32>
    %60 = arith.mulf %58, %59 : vector<8x1xf32>
    %61 = arith.mulf %56, %56 : vector<8x128xf32>
    %cst_35 = arith.constant dense<0.000000e+00> : vector<8xf32>
    %62 = vector.multi_reduction <add>, %61, %cst_35 [1] : vector<8x128xf32> to vector<8xf32>
    %63 = vector.shape_cast %62 : vector<8xf32> to vector<8x1xf32>
    %cst_36 = arith.constant 7.812500e-03 : f32
    %64 = vector.broadcast %cst_36 : f32 to vector<8x1xf32>
    %65 = arith.mulf %63, %64 : vector<8x1xf32>
    %66 = arith.mulf %60, %60 : vector<8x1xf32>
    %67 = arith.subf %65, %66 : vector<8x1xf32>
    %cst_37 = arith.constant 0.000000e+00 : f32
    %68 = vector.broadcast %cst_37 : f32 to vector<8x1xf32>
    %69 = arith.maximumf %67, %68 : vector<8x1xf32>
    %70 = vector.broadcast %60 : vector<8x1xf32> to vector<8x128xf32>
    %71 = arith.subf %56, %70 : vector<8x128xf32>
    %cst_38 = arith.constant 9.99999974E-6 : f32
    %72 = vector.broadcast %cst_38 : f32 to vector<8x1xf32>
    %73 = arith.addf %69, %72 : vector<8x1xf32>
    %74 = math.rsqrt %73 : vector<8x1xf32>
    %75 = vector.broadcast %74 : vector<8x1xf32> to vector<8x128xf32>
    %76 = arith.mulf %71, %75 : vector<8x128xf32>
    %77 = vector.broadcast %46 : vector<1x128xf32> to vector<8x128xf32>
    %78 = arith.mulf %76, %77 : vector<8x128xf32>
    %79 = vector.broadcast %47 : vector<1x128xf32> to vector<8x128xf32>
    %80 = arith.addf %78, %79 : vector<8x128xf32>
    %cst_39 = arith.constant 0.000000e+00 : f32
    %81 = vector.broadcast %cst_39 : f32 to vector<8x128xf32>
    %82 = arith.cmpf oge, %80, %81 : vector<8x128xf32>
    %cst_40 = arith.constant 2.000000e-01 : f32
    %83 = vector.broadcast %cst_40 : f32 to vector<8x128xf32>
    %84 = arith.mulf %83, %80 : vector<8x128xf32>
    %85 = arith.select %82, %80, %84 : vector<8x128xi1>, vector<8x128xf32>
    %c0_41 = arith.constant 0 : index
    %c0_42 = arith.constant 0 : index
    %86 = vector.load %arg12[%c0_41, %c0_42] : memref<128x128xbf16, #tpu.memory_space<vmem>>, vector<128x128xbf16>
    %c0_43 = arith.constant 0 : index
    %c0_44 = arith.constant 0 : index
    %87 = vector.load %arg13[%c0_43, %c0_44] : memref<1x128xf32, #tpu.memory_space<vmem>>, vector<1x128xf32>
    %c0_45 = arith.constant 0 : index
    %c0_46 = arith.constant 0 : index
    %88 = vector.load %arg14[%c0_45, %c0_46] : memref<1x128xf32, #tpu.memory_space<vmem>>, vector<1x128xf32>
    %c0_47 = arith.constant 0 : index
    %c0_48 = arith.constant 0 : index
    %89 = vector.load %arg15[%c0_47, %c0_48] : memref<1x128xf32, #tpu.memory_space<vmem>>, vector<1x128xf32>
    %90 = arith.truncf %85 : vector<8x128xf32> to vector<8x128xbf16>
    %cst_49 = arith.constant dense<0.000000e+00> : vector<8x128xf32>
    %91 = tpu.matmul %90, %86, %cst_49 {dimension_numbers = #tpu.dot_dimension_numbers<[1], [0], [0], [1], [0, 0, 1, 1], [], []>} : vector<8x128xbf16>, vector<128x128xbf16>, vector<8x128xf32> -> vector<8x128xf32>
    %92 = vector.broadcast %87 : vector<1x128xf32> to vector<8x128xf32>
    %93 = arith.addf %91, %92 : vector<8x128xf32>
    %cst_50 = arith.constant dense<0.000000e+00> : vector<8xf32>
    %94 = vector.multi_reduction <add>, %93, %cst_50 [1] : vector<8x128xf32> to vector<8xf32>
    %95 = vector.shape_cast %94 : vector<8xf32> to vector<8x1xf32>
    %cst_51 = arith.constant 7.812500e-03 : f32
    %96 = vector.broadcast %cst_51 : f32 to vector<8x1xf32>
    %97 = arith.mulf %95, %96 : vector<8x1xf32>
    %98 = arith.mulf %93, %93 : vector<8x128xf32>
    %cst_52 = arith.constant dense<0.000000e+00> : vector<8xf32>
    %99 = vector.multi_reduction <add>, %98, %cst_52 [1] : vector<8x128xf32> to vector<8xf32>
    %100 = vector.shape_cast %99 : vector<8xf32> to vector<8x1xf32>
    %cst_53 = arith.constant 7.812500e-03 : f32
    %101 = vector.broadcast %cst_53 : f32 to vector<8x1xf32>
    %102 = arith.mulf %100, %101 : vector<8x1xf32>
    %103 = arith.mulf %97, %97 : vector<8x1xf32>
    %104 = arith.subf %102, %103 : vector<8x1xf32>
    %cst_54 = arith.constant 0.000000e+00 : f32
    %105 = vector.broadcast %cst_54 : f32 to vector<8x1xf32>
    %106 = arith.maximumf %104, %105 : vector<8x1xf32>
    %107 = vector.broadcast %97 : vector<8x1xf32> to vector<8x128xf32>
    %108 = arith.subf %93, %107 : vector<8x128xf32>
    %cst_55 = arith.constant 9.99999974E-6 : f32
    %109 = vector.broadcast %cst_55 : f32 to vector<8x1xf32>
    %110 = arith.addf %106, %109 : vector<8x1xf32>
    %111 = math.rsqrt %110 : vector<8x1xf32>
    %112 = vector.broadcast %111 : vector<8x1xf32> to vector<8x128xf32>
    %113 = arith.mulf %108, %112 : vector<8x128xf32>
    %114 = vector.broadcast %88 : vector<1x128xf32> to vector<8x128xf32>
    %115 = arith.mulf %113, %114 : vector<8x128xf32>
    %116 = vector.broadcast %89 : vector<1x128xf32> to vector<8x128xf32>
    %117 = arith.addf %115, %116 : vector<8x128xf32>
    %cst_56 = arith.constant 0.000000e+00 : f32
    %118 = vector.broadcast %cst_56 : f32 to vector<8x128xf32>
    %119 = arith.maximumf %117, %118 : vector<8x128xf32>
    %c0_57 = arith.constant 0 : index
    %c0_58 = arith.constant 0 : index
    %120 = vector.load %arg16[%c0_57, %c0_58] : memref<128x128xbf16, #tpu.memory_space<vmem>>, vector<128x128xbf16>
    %c0_59 = arith.constant 0 : index
    %c0_60 = arith.constant 0 : index
    %121 = vector.load %arg17[%c0_59, %c0_60] : memref<1x128xf32, #tpu.memory_space<vmem>>, vector<1x128xf32>
    %c0_61 = arith.constant 0 : index
    %c0_62 = arith.constant 0 : index
    %122 = vector.load %arg18[%c0_61, %c0_62] : memref<1x128xf32, #tpu.memory_space<vmem>>, vector<1x128xf32>
    %c0_63 = arith.constant 0 : index
    %c0_64 = arith.constant 0 : index
    %123 = vector.load %arg19[%c0_63, %c0_64] : memref<1x128xf32, #tpu.memory_space<vmem>>, vector<1x128xf32>
    %124 = arith.truncf %119 : vector<8x128xf32> to vector<8x128xbf16>
    %cst_65 = arith.constant dense<0.000000e+00> : vector<8x128xf32>
    %125 = tpu.matmul %124, %120, %cst_65 {dimension_numbers = #tpu.dot_dimension_numbers<[1], [0], [0], [1], [0, 0, 1, 1], [], []>} : vector<8x128xbf16>, vector<128x128xbf16>, vector<8x128xf32> -> vector<8x128xf32>
    %126 = vector.broadcast %121 : vector<1x128xf32> to vector<8x128xf32>
    %127 = arith.addf %125, %126 : vector<8x128xf32>
    %cst_66 = arith.constant dense<0.000000e+00> : vector<8xf32>
    %128 = vector.multi_reduction <add>, %127, %cst_66 [1] : vector<8x128xf32> to vector<8xf32>
    %129 = vector.shape_cast %128 : vector<8xf32> to vector<8x1xf32>
    %cst_67 = arith.constant 7.812500e-03 : f32
    %130 = vector.broadcast %cst_67 : f32 to vector<8x1xf32>
    %131 = arith.mulf %129, %130 : vector<8x1xf32>
    %132 = arith.mulf %127, %127 : vector<8x128xf32>
    %cst_68 = arith.constant dense<0.000000e+00> : vector<8xf32>
    %133 = vector.multi_reduction <add>, %132, %cst_68 [1] : vector<8x128xf32> to vector<8xf32>
    %134 = vector.shape_cast %133 : vector<8xf32> to vector<8x1xf32>
    %cst_69 = arith.constant 7.812500e-03 : f32
    %135 = vector.broadcast %cst_69 : f32 to vector<8x1xf32>
    %136 = arith.mulf %134, %135 : vector<8x1xf32>
    %137 = arith.mulf %131, %131 : vector<8x1xf32>
    %138 = arith.subf %136, %137 : vector<8x1xf32>
    %cst_70 = arith.constant 0.000000e+00 : f32
    %139 = vector.broadcast %cst_70 : f32 to vector<8x1xf32>
    %140 = arith.maximumf %138, %139 : vector<8x1xf32>
    %141 = vector.broadcast %131 : vector<8x1xf32> to vector<8x128xf32>
    %142 = arith.subf %127, %141 : vector<8x128xf32>
    %cst_71 = arith.constant 9.99999974E-6 : f32
    %143 = vector.broadcast %cst_71 : f32 to vector<8x1xf32>
    %144 = arith.addf %140, %143 : vector<8x1xf32>
    %145 = math.rsqrt %144 : vector<8x1xf32>
    %146 = vector.broadcast %145 : vector<8x1xf32> to vector<8x128xf32>
    %147 = arith.mulf %142, %146 : vector<8x128xf32>
    %148 = vector.broadcast %122 : vector<1x128xf32> to vector<8x128xf32>
    %149 = arith.mulf %147, %148 : vector<8x128xf32>
    %150 = vector.broadcast %123 : vector<1x128xf32> to vector<8x128xf32>
    %151 = arith.addf %149, %150 : vector<8x128xf32>
    %152 = arith.addf %85, %151 : vector<8x128xf32>
    %c0_72 = arith.constant 0 : index
    %c0_73 = arith.constant 0 : index
    %153 = vector.load %arg20[%c0_72, %c0_73] : memref<128x128xbf16, #tpu.memory_space<vmem>>, vector<128x128xbf16>
    %c0_74 = arith.constant 0 : index
    %c0_75 = arith.constant 0 : index
    %154 = vector.load %arg21[%c0_74, %c0_75] : memref<1x128xf32, #tpu.memory_space<vmem>>, vector<1x128xf32>
    %c0_76 = arith.constant 0 : index
    %c0_77 = arith.constant 0 : index
    %155 = vector.load %arg22[%c0_76, %c0_77] : memref<1x128xf32, #tpu.memory_space<vmem>>, vector<1x128xf32>
    %c0_78 = arith.constant 0 : index
    %c0_79 = arith.constant 0 : index
    %156 = vector.load %arg23[%c0_78, %c0_79] : memref<1x128xf32, #tpu.memory_space<vmem>>, vector<1x128xf32>
    %157 = arith.truncf %152 : vector<8x128xf32> to vector<8x128xbf16>
    %cst_80 = arith.constant dense<0.000000e+00> : vector<8x128xf32>
    %158 = tpu.matmul %157, %153, %cst_80 {dimension_numbers = #tpu.dot_dimension_numbers<[1], [0], [0], [1], [0, 0, 1, 1], [], []>} : vector<8x128xbf16>, vector<128x128xbf16>, vector<8x128xf32> -> vector<8x128xf32>
    %159 = vector.broadcast %154 : vector<1x128xf32> to vector<8x128xf32>
    %160 = arith.addf %158, %159 : vector<8x128xf32>
    %cst_81 = arith.constant dense<0.000000e+00> : vector<8xf32>
    %161 = vector.multi_reduction <add>, %160, %cst_81 [1] : vector<8x128xf32> to vector<8xf32>
    %162 = vector.shape_cast %161 : vector<8xf32> to vector<8x1xf32>
    %cst_82 = arith.constant 7.812500e-03 : f32
    %163 = vector.broadcast %cst_82 : f32 to vector<8x1xf32>
    %164 = arith.mulf %162, %163 : vector<8x1xf32>
    %165 = arith.mulf %160, %160 : vector<8x128xf32>
    %cst_83 = arith.constant dense<0.000000e+00> : vector<8xf32>
    %166 = vector.multi_reduction <add>, %165, %cst_83 [1] : vector<8x128xf32> to vector<8xf32>
    %167 = vector.shape_cast %166 : vector<8xf32> to vector<8x1xf32>
    %cst_84 = arith.constant 7.812500e-03 : f32
    %168 = vector.broadcast %cst_84 : f32 to vector<8x1xf32>
    %169 = arith.mulf %167, %168 : vector<8x1xf32>
    %170 = arith.mulf %164, %164 : vector<8x1xf32>
    %171 = arith.subf %169, %170 : vector<8x1xf32>
    %cst_85 = arith.constant 0.000000e+00 : f32
    %172 = vector.broadcast %cst_85 : f32 to vector<8x1xf32>
    %173 = arith.maximumf %171, %172 : vector<8x1xf32>
    %174 = vector.broadcast %164 : vector<8x1xf32> to vector<8x128xf32>
    %175 = arith.subf %160, %174 : vector<8x128xf32>
    %cst_86 = arith.constant 9.99999974E-6 : f32
    %176 = vector.broadcast %cst_86 : f32 to vector<8x1xf32>
    %177 = arith.addf %173, %176 : vector<8x1xf32>
    %178 = math.rsqrt %177 : vector<8x1xf32>
    %179 = vector.broadcast %178 : vector<8x1xf32> to vector<8x128xf32>
    %180 = arith.mulf %175, %179 : vector<8x128xf32>
    %181 = vector.broadcast %155 : vector<1x128xf32> to vector<8x128xf32>
    %182 = arith.mulf %180, %181 : vector<8x128xf32>
    %183 = vector.broadcast %156 : vector<1x128xf32> to vector<8x128xf32>
    %184 = arith.addf %182, %183 : vector<8x128xf32>
    %cst_87 = arith.constant 0.000000e+00 : f32
    %185 = vector.broadcast %cst_87 : f32 to vector<8x128xf32>
    %186 = arith.maximumf %184, %185 : vector<8x128xf32>
    %c0_88 = arith.constant 0 : index
    %c0_89 = arith.constant 0 : index
    %187 = vector.load %arg24[%c0_88, %c0_89] : memref<128x128xbf16, #tpu.memory_space<vmem>>, vector<128x128xbf16>
    %c0_90 = arith.constant 0 : index
    %c0_91 = arith.constant 0 : index
    %188 = vector.load %arg25[%c0_90, %c0_91] : memref<1x128xf32, #tpu.memory_space<vmem>>, vector<1x128xf32>
    %c0_92 = arith.constant 0 : index
    %c0_93 = arith.constant 0 : index
    %189 = vector.load %arg26[%c0_92, %c0_93] : memref<1x128xf32, #tpu.memory_space<vmem>>, vector<1x128xf32>
    %c0_94 = arith.constant 0 : index
    %c0_95 = arith.constant 0 : index
    %190 = vector.load %arg27[%c0_94, %c0_95] : memref<1x128xf32, #tpu.memory_space<vmem>>, vector<1x128xf32>
    %191 = arith.truncf %186 : vector<8x128xf32> to vector<8x128xbf16>
    %cst_96 = arith.constant dense<0.000000e+00> : vector<8x128xf32>
    %192 = tpu.matmul %191, %187, %cst_96 {dimension_numbers = #tpu.dot_dimension_numbers<[1], [0], [0], [1], [0, 0, 1, 1], [], []>} : vector<8x128xbf16>, vector<128x128xbf16>, vector<8x128xf32> -> vector<8x128xf32>
    %193 = vector.broadcast %188 : vector<1x128xf32> to vector<8x128xf32>
    %194 = arith.addf %192, %193 : vector<8x128xf32>
    %cst_97 = arith.constant dense<0.000000e+00> : vector<8xf32>
    %195 = vector.multi_reduction <add>, %194, %cst_97 [1] : vector<8x128xf32> to vector<8xf32>
    %196 = vector.shape_cast %195 : vector<8xf32> to vector<8x1xf32>
    %cst_98 = arith.constant 7.812500e-03 : f32
    %197 = vector.broadcast %cst_98 : f32 to vector<8x1xf32>
    %198 = arith.mulf %196, %197 : vector<8x1xf32>
    %199 = arith.mulf %194, %194 : vector<8x128xf32>
    %cst_99 = arith.constant dense<0.000000e+00> : vector<8xf32>
    %200 = vector.multi_reduction <add>, %199, %cst_99 [1] : vector<8x128xf32> to vector<8xf32>
    %201 = vector.shape_cast %200 : vector<8xf32> to vector<8x1xf32>
    %cst_100 = arith.constant 7.812500e-03 : f32
    %202 = vector.broadcast %cst_100 : f32 to vector<8x1xf32>
    %203 = arith.mulf %201, %202 : vector<8x1xf32>
    %204 = arith.mulf %198, %198 : vector<8x1xf32>
    %205 = arith.subf %203, %204 : vector<8x1xf32>
    %cst_101 = arith.constant 0.000000e+00 : f32
    %206 = vector.broadcast %cst_101 : f32 to vector<8x1xf32>
    %207 = arith.maximumf %205, %206 : vector<8x1xf32>
    %208 = vector.broadcast %198 : vector<8x1xf32> to vector<8x128xf32>
    %209 = arith.subf %194, %208 : vector<8x128xf32>
    %cst_102 = arith.constant 9.99999974E-6 : f32
    %210 = vector.broadcast %cst_102 : f32 to vector<8x1xf32>
    %211 = arith.addf %207, %210 : vector<8x1xf32>
    %212 = math.rsqrt %211 : vector<8x1xf32>
    %213 = vector.broadcast %212 : vector<8x1xf32> to vector<8x128xf32>
    %214 = arith.mulf %209, %213 : vector<8x128xf32>
    %215 = vector.broadcast %189 : vector<1x128xf32> to vector<8x128xf32>
    %216 = arith.mulf %214, %215 : vector<8x128xf32>
    %217 = vector.broadcast %190 : vector<1x128xf32> to vector<8x128xf32>
    %218 = arith.addf %216, %217 : vector<8x128xf32>
    %219 = arith.addf %152, %218 : vector<8x128xf32>
    %c0_103 = arith.constant 0 : index
    %c0_104 = arith.constant 0 : index
    %220 = vector.load %arg28[%c0_103, %c0_104] : memref<128x256xbf16, #tpu.memory_space<vmem>>, vector<128x256xbf16>
    %c0_105 = arith.constant 0 : index
    %c0_106 = arith.constant 0 : index
    %221 = vector.load %arg29[%c0_105, %c0_106] : memref<1x256xf32, #tpu.memory_space<vmem>>, vector<1x256xf32>
    %c0_107 = arith.constant 0 : index
    %c0_108 = arith.constant 0 : index
    %222 = vector.load %arg30[%c0_107, %c0_108] : memref<1x256xf32, #tpu.memory_space<vmem>>, vector<1x256xf32>
    %c0_109 = arith.constant 0 : index
    %c0_110 = arith.constant 0 : index
    %223 = vector.load %arg31[%c0_109, %c0_110] : memref<1x256xf32, #tpu.memory_space<vmem>>, vector<1x256xf32>
    %cst_111 = arith.constant 0.000000e+00 : f32
    %224 = vector.broadcast %cst_111 : f32 to vector<8x128xf32>
    %225 = arith.maximumf %219, %224 : vector<8x128xf32>
    %226 = arith.truncf %225 : vector<8x128xf32> to vector<8x128xbf16>
    %cst_112 = arith.constant dense<0.000000e+00> : vector<8x256xf32>
    %227 = tpu.matmul %226, %220, %cst_112 {dimension_numbers = #tpu.dot_dimension_numbers<[1], [0], [0], [1], [0, 0, 1, 1], [], []>} : vector<8x128xbf16>, vector<128x256xbf16>, vector<8x256xf32> -> vector<8x256xf32>
    %228 = vector.broadcast %221 : vector<1x256xf32> to vector<8x256xf32>
    %229 = arith.addf %227, %228 : vector<8x256xf32>
    %cst_113 = arith.constant dense<0.000000e+00> : vector<8xf32>
    %230 = vector.multi_reduction <add>, %229, %cst_113 [1] : vector<8x256xf32> to vector<8xf32>
    %231 = vector.shape_cast %230 : vector<8xf32> to vector<8x1xf32>
    %cst_114 = arith.constant 3.906250e-03 : f32
    %232 = vector.broadcast %cst_114 : f32 to vector<8x1xf32>
    %233 = arith.mulf %231, %232 : vector<8x1xf32>
    %234 = arith.mulf %229, %229 : vector<8x256xf32>
    %cst_115 = arith.constant dense<0.000000e+00> : vector<8xf32>
    %235 = vector.multi_reduction <add>, %234, %cst_115 [1] : vector<8x256xf32> to vector<8xf32>
    %236 = vector.shape_cast %235 : vector<8xf32> to vector<8x1xf32>
    %cst_116 = arith.constant 3.906250e-03 : f32
    %237 = vector.broadcast %cst_116 : f32 to vector<8x1xf32>
    %238 = arith.mulf %236, %237 : vector<8x1xf32>
    %239 = arith.mulf %233, %233 : vector<8x1xf32>
    %240 = arith.subf %238, %239 : vector<8x1xf32>
    %cst_117 = arith.constant 0.000000e+00 : f32
    %241 = vector.broadcast %cst_117 : f32 to vector<8x1xf32>
    %242 = arith.maximumf %240, %241 : vector<8x1xf32>
    %243 = vector.broadcast %233 : vector<8x1xf32> to vector<8x256xf32>
    %244 = arith.subf %229, %243 : vector<8x256xf32>
    %cst_118 = arith.constant 9.99999974E-6 : f32
    %245 = vector.broadcast %cst_118 : f32 to vector<8x1xf32>
    %246 = arith.addf %242, %245 : vector<8x1xf32>
    %247 = math.rsqrt %246 : vector<8x1xf32>
    %248 = vector.broadcast %247 : vector<8x1xf32> to vector<8x256xf32>
    %249 = arith.mulf %244, %248 : vector<8x256xf32>
    %250 = vector.broadcast %222 : vector<1x256xf32> to vector<8x256xf32>
    %251 = arith.mulf %249, %250 : vector<8x256xf32>
    %252 = vector.broadcast %223 : vector<1x256xf32> to vector<8x256xf32>
    %253 = arith.addf %251, %252 : vector<8x256xf32>
    %c0_119 = arith.constant 0 : index
    %c0_120 = arith.constant 0 : index
    %254 = vector.load %arg32[%c0_119, %c0_120] : memref<256x1024xbf16, #tpu.memory_space<vmem>>, vector<256x1024xbf16>
    %c0_121 = arith.constant 0 : index
    %c0_122 = arith.constant 0 : index
    %255 = vector.load %arg33[%c0_121, %c0_122] : memref<1x1024xf32, #tpu.memory_space<vmem>>, vector<1x1024xf32>
    %c0_123 = arith.constant 0 : index
    %c0_124 = arith.constant 0 : index
    %256 = vector.load %arg34[%c0_123, %c0_124] : memref<1x1024xf32, #tpu.memory_space<vmem>>, vector<1x1024xf32>
    %c0_125 = arith.constant 0 : index
    %c0_126 = arith.constant 0 : index
    %257 = vector.load %arg35[%c0_125, %c0_126] : memref<1x1024xf32, #tpu.memory_space<vmem>>, vector<1x1024xf32>
    %cst_127 = arith.constant 0.000000e+00 : f32
    %258 = vector.broadcast %cst_127 : f32 to vector<8x256xf32>
    %259 = arith.maximumf %253, %258 : vector<8x256xf32>
    %260 = arith.truncf %259 : vector<8x256xf32> to vector<8x256xbf16>
    %cst_128 = arith.constant dense<0.000000e+00> : vector<8x1024xf32>
    %261 = tpu.matmul %260, %254, %cst_128 {dimension_numbers = #tpu.dot_dimension_numbers<[1], [0], [0], [1], [0, 0, 1, 1], [], []>} : vector<8x256xbf16>, vector<256x1024xbf16>, vector<8x1024xf32> -> vector<8x1024xf32>
    %262 = vector.broadcast %255 : vector<1x1024xf32> to vector<8x1024xf32>
    %263 = arith.addf %261, %262 : vector<8x1024xf32>
    %cst_129 = arith.constant dense<0.000000e+00> : vector<8xf32>
    %264 = vector.multi_reduction <add>, %263, %cst_129 [1] : vector<8x1024xf32> to vector<8xf32>
    %265 = vector.shape_cast %264 : vector<8xf32> to vector<8x1xf32>
    %cst_130 = arith.constant 9.765625E-4 : f32
    %266 = vector.broadcast %cst_130 : f32 to vector<8x1xf32>
    %267 = arith.mulf %265, %266 : vector<8x1xf32>
    %268 = arith.mulf %263, %263 : vector<8x1024xf32>
    %cst_131 = arith.constant dense<0.000000e+00> : vector<8xf32>
    %269 = vector.multi_reduction <add>, %268, %cst_131 [1] : vector<8x1024xf32> to vector<8xf32>
    %270 = vector.shape_cast %269 : vector<8xf32> to vector<8x1xf32>
    %cst_132 = arith.constant 9.765625E-4 : f32
    %271 = vector.broadcast %cst_132 : f32 to vector<8x1xf32>
    %272 = arith.mulf %270, %271 : vector<8x1xf32>
    %273 = arith.mulf %267, %267 : vector<8x1xf32>
    %274 = arith.subf %272, %273 : vector<8x1xf32>
    %cst_133 = arith.constant 0.000000e+00 : f32
    %275 = vector.broadcast %cst_133 : f32 to vector<8x1xf32>
    %276 = arith.maximumf %274, %275 : vector<8x1xf32>
    %277 = vector.broadcast %267 : vector<8x1xf32> to vector<8x1024xf32>
    %278 = arith.subf %263, %277 : vector<8x1024xf32>
    %cst_134 = arith.constant 9.99999974E-6 : f32
    %279 = vector.broadcast %cst_134 : f32 to vector<8x1xf32>
    %280 = arith.addf %276, %279 : vector<8x1xf32>
    %281 = math.rsqrt %280 : vector<8x1xf32>
    %282 = vector.broadcast %281 : vector<8x1xf32> to vector<8x1024xf32>
    %283 = arith.mulf %278, %282 : vector<8x1024xf32>
    %284 = vector.broadcast %256 : vector<1x1024xf32> to vector<8x1024xf32>
    %285 = arith.mulf %283, %284 : vector<8x1024xf32>
    %286 = vector.broadcast %257 : vector<1x1024xf32> to vector<8x1024xf32>
    %287 = arith.addf %285, %286 : vector<8x1024xf32>
    %c0_135 = arith.constant 0 : index
    %c0_136 = arith.constant 0 : index
    %288 = vector.load %arg36[%c0_135, %c0_136] : memref<1024x128xbf16, #tpu.memory_space<vmem>>, vector<1024x128xbf16>
    %c0_137 = arith.constant 0 : index
    %c0_138 = arith.constant 0 : index
    %289 = vector.load %arg37[%c0_137, %c0_138] : memref<1x128xf32, #tpu.memory_space<vmem>>, vector<1x128xf32>
    %cst_139 = arith.constant 0.000000e+00 : f32
    %290 = vector.broadcast %cst_139 : f32 to vector<8x1024xf32>
    %291 = arith.maximumf %287, %290 : vector<8x1024xf32>
    %292 = arith.truncf %291 : vector<8x1024xf32> to vector<8x1024xbf16>
    %cst_140 = arith.constant dense<0.000000e+00> : vector<8x128xf32>
    %293 = tpu.matmul %292, %288, %cst_140 {dimension_numbers = #tpu.dot_dimension_numbers<[1], [0], [0], [1], [0, 0, 1, 1], [], []>} : vector<8x1024xbf16>, vector<1024x128xbf16>, vector<8x128xf32> -> vector<8x128xf32>
    %294 = vector.broadcast %289 : vector<1x128xf32> to vector<8x128xf32>
    %295 = arith.addf %293, %294 : vector<8x128xf32>
    %cst_141 = arith.constant 0.000000e+00 : f32
    %296 = vector.broadcast %cst_141 : f32 to vector<8x128xf32>
    %297 = arith.maximumf %295, %296 : vector<8x128xf32>
    %298 = math.absf %295 : vector<8x128xf32>
    %cst_142 = arith.constant 0.000000e+00 : f32
    %299 = vector.broadcast %cst_142 : f32 to vector<8x128xf32>
    %300 = arith.subf %299, %298 : vector<8x128xf32>
    %301 = math.exp %300 : vector<8x128xf32>
    %cst_143 = arith.constant 1.000000e+00 : f32
    %302 = vector.broadcast %cst_143 : f32 to vector<8x128xf32>
    %303 = arith.addf %302, %301 : vector<8x128xf32>
    %304 = math.log %303 : vector<8x128xf32>
    %305 = arith.addf %297, %304 : vector<8x128xf32>
    %c0_144 = arith.constant 0 : index
    %c0_145 = arith.constant 0 : index
    %306 = vector.load %arg38[%c0_144, %c0_145] : memref<8x128xf32, #tpu.memory_space<vmem>>, vector<8x128xf32>
    tpu.vector_store %arg38[%c0_144, %c0_145], %305 {strides = array<i32>} : memref<8x128xf32, #tpu.memory_space<vmem>>, vector<8x128xf32>,
    return
  }
  func.func @transform_0(%arg0: i32) -> (i32, i32) {
    %c0_i32 = arith.constant 0 : i32
    %c0_i32_0 = arith.constant 0 : i32
    return %arg0, %c0_i32 : i32, i32
  }
  func.func @transform_1(%arg0: i32) -> (i32, i32) {
    %c0_i32 = arith.constant 0 : i32
    %c0_i32_0 = arith.constant 0 : i32
    %c0_i32_1 = arith.constant 0 : i32
    return %c0_i32, %c0_i32_0 : i32, i32
  }
  func.func @transform_2(%arg0: i32) -> (i32, i32) {
    %c0_i32 = arith.constant 0 : i32
    %c0_i32_0 = arith.constant 0 : i32
    %c0_i32_1 = arith.constant 0 : i32
    return %c0_i32, %c0_i32_0 : i32, i32
  }
  func.func @transform_3(%arg0: i32) -> (i32, i32) {
    %c0_i32 = arith.constant 0 : i32
    %c0_i32_0 = arith.constant 0 : i32
    %c0_i32_1 = arith.constant 0 : i32
    return %c0_i32, %c0_i32_0 : i32, i32
  }
  func.func @transform_4(%arg0: i32) -> (i32, i32) {
    %c0_i32 = arith.constant 0 : i32
    %c0_i32_0 = arith.constant 0 : i32
    %c0_i32_1 = arith.constant 0 : i32
    return %c0_i32, %c0_i32_0 : i32, i32
  }
  func.func @transform_5(%arg0: i32) -> (i32, i32) {
    %c0_i32 = arith.constant 0 : i32
    %c0_i32_0 = arith.constant 0 : i32
    %c0_i32_1 = arith.constant 0 : i32
    return %c0_i32, %c0_i32_0 : i32, i32
  }
  func.func @transform_6(%arg0: i32) -> (i32, i32) {
    %c0_i32 = arith.constant 0 : i32
    %c0_i32_0 = arith.constant 0 : i32
    %c0_i32_1 = arith.constant 0 : i32
    return %c0_i32, %c0_i32_0 : i32, i32
  }
  func.func @transform_7(%arg0: i32) -> (i32, i32) {
    %c0_i32 = arith.constant 0 : i32
    %c0_i32_0 = arith.constant 0 : i32
    %c0_i32_1 = arith.constant 0 : i32
    return %c0_i32, %c0_i32_0 : i32, i32
  }
  func.func @transform_8(%arg0: i32) -> (i32, i32) {
    %c0_i32 = arith.constant 0 : i32
    %c0_i32_0 = arith.constant 0 : i32
    %c0_i32_1 = arith.constant 0 : i32
    return %c0_i32, %c0_i32_0 : i32, i32
  }
  func.func @transform_9(%arg0: i32) -> (i32, i32) {
    %c0_i32 = arith.constant 0 : i32
    %c0_i32_0 = arith.constant 0 : i32
    %c0_i32_1 = arith.constant 0 : i32
    return %c0_i32, %c0_i32_0 : i32, i32
  }
  func.func @transform_10(%arg0: i32) -> (i32, i32) {
    %c0_i32 = arith.constant 0 : i32
    %c0_i32_0 = arith.constant 0 : i32
    %c0_i32_1 = arith.constant 0 : i32
    return %c0_i32, %c0_i32_0 : i32, i32
  }
  func.func @transform_11(%arg0: i32) -> (i32, i32) {
    %c0_i32 = arith.constant 0 : i32
    %c0_i32_0 = arith.constant 0 : i32
    %c0_i32_1 = arith.constant 0 : i32
    return %c0_i32, %c0_i32_0 : i32, i32
  }
  func.func @transform_12(%arg0: i32) -> (i32, i32) {
    %c0_i32 = arith.constant 0 : i32
    %c0_i32_0 = arith.constant 0 : i32
    %c0_i32_1 = arith.constant 0 : i32
    return %c0_i32, %c0_i32_0 : i32, i32
  }
  func.func @transform_13(%arg0: i32) -> (i32, i32) {
    %c0_i32 = arith.constant 0 : i32
    %c0_i32_0 = arith.constant 0 : i32
    %c0_i32_1 = arith.constant 0 : i32
    return %c0_i32, %c0_i32_0 : i32, i32
  }
  func.func @transform_14(%arg0: i32) -> (i32, i32) {
    %c0_i32 = arith.constant 0 : i32
    %c0_i32_0 = arith.constant 0 : i32
    %c0_i32_1 = arith.constant 0 : i32
    return %c0_i32, %c0_i32_0 : i32, i32
  }
  func.func @transform_15(%arg0: i32) -> (i32, i32) {
    %c0_i32 = arith.constant 0 : i32
    %c0_i32_0 = arith.constant 0 : i32
    %c0_i32_1 = arith.constant 0 : i32
    return %c0_i32, %c0_i32_0 : i32, i32
  }
  func.func @transform_16(%arg0: i32) -> (i32, i32) {
    %c0_i32 = arith.constant 0 : i32
    %c0_i32_0 = arith.constant 0 : i32
    %c0_i32_1 = arith.constant 0 : i32
    return %c0_i32, %c0_i32_0 : i32, i32
  }
  func.func @transform_17(%arg0: i32) -> (i32, i32) {
    %c0_i32 = arith.constant 0 : i32
    %c0_i32_0 = arith.constant 0 : i32
    %c0_i32_1 = arith.constant 0 : i32
    return %c0_i32, %c0_i32_0 : i32, i32
  }
  func.func @transform_18(%arg0: i32) -> (i32, i32) {
    %c0_i32 = arith.constant 0 : i32
    %c0_i32_0 = arith.constant 0 : i32
    %c0_i32_1 = arith.constant 0 : i32
    return %c0_i32, %c0_i32_0 : i32, i32
  }
  func.func @transform_19(%arg0: i32) -> (i32, i32) {
    %c0_i32 = arith.constant 0 : i32
    %c0_i32_0 = arith.constant 0 : i32
    %c0_i32_1 = arith.constant 0 : i32
    return %c0_i32, %c0_i32_0 : i32, i32
  }
  func.func @transform_20(%arg0: i32) -> (i32, i32) {
    %c0_i32 = arith.constant 0 : i32
    %c0_i32_0 = arith.constant 0 : i32
    %c0_i32_1 = arith.constant 0 : i32
    return %c0_i32, %c0_i32_0 : i32, i32
  }
  func.func @transform_21(%arg0: i32) -> (i32, i32) {
    %c0_i32 = arith.constant 0 : i32
    %c0_i32_0 = arith.constant 0 : i32
    %c0_i32_1 = arith.constant 0 : i32
    return %c0_i32, %c0_i32_0 : i32, i32
  }
  func.func @transform_22(%arg0: i32) -> (i32, i32) {
    %c0_i32 = arith.constant 0 : i32
    %c0_i32_0 = arith.constant 0 : i32
    %c0_i32_1 = arith.constant 0 : i32
    return %c0_i32, %c0_i32_0 : i32, i32
  }
  func.func @transform_23(%arg0: i32) -> (i32, i32) {
    %c0_i32 = arith.constant 0 : i32
    %c0_i32_0 = arith.constant 0 : i32
    %c0_i32_1 = arith.constant 0 : i32
    return %c0_i32, %c0_i32_0 : i32, i32
  }
  func.func @transform_24(%arg0: i32) -> (i32, i32) {
    %c0_i32 = arith.constant 0 : i32
    %c0_i32_0 = arith.constant 0 : i32
    %c0_i32_1 = arith.constant 0 : i32
    return %c0_i32, %c0_i32_0 : i32, i32
  }
  func.func @transform_25(%arg0: i32) -> (i32, i32) {
    %c0_i32 = arith.constant 0 : i32
    %c0_i32_0 = arith.constant 0 : i32
    %c0_i32_1 = arith.constant 0 : i32
    return %c0_i32, %c0_i32_0 : i32, i32
  }
  func.func @transform_26(%arg0: i32) -> (i32, i32) {
    %c0_i32 = arith.constant 0 : i32
    %c0_i32_0 = arith.constant 0 : i32
    %c0_i32_1 = arith.constant 0 : i32
    return %c0_i32, %c0_i32_0 : i32, i32
  }
  func.func @transform_27(%arg0: i32) -> (i32, i32) {
    %c0_i32 = arith.constant 0 : i32
    %c0_i32_0 = arith.constant 0 : i32
    %c0_i32_1 = arith.constant 0 : i32
    return %c0_i32, %c0_i32_0 : i32, i32
  }
  func.func @transform_28(%arg0: i32) -> (i32, i32) {
    %c0_i32 = arith.constant 0 : i32
    %c0_i32_0 = arith.constant 0 : i32
    %c0_i32_1 = arith.constant 0 : i32
    return %c0_i32, %c0_i32_0 : i32, i32
  }
  func.func @transform_29(%arg0: i32) -> (i32, i32) {
    %c0_i32 = arith.constant 0 : i32
    %c0_i32_0 = arith.constant 0 : i32
    %c0_i32_1 = arith.constant 0 : i32
    return %c0_i32, %c0_i32_0 : i32, i32
  }
  func.func @transform_30(%arg0: i32) -> (i32, i32) {
    %c0_i32 = arith.constant 0 : i32
    %c0_i32_0 = arith.constant 0 : i32
    %c0_i32_1 = arith.constant 0 : i32
    return %c0_i32, %c0_i32_0 : i32, i32
  }
  func.func @transform_31(%arg0: i32) -> (i32, i32) {
    %c0_i32 = arith.constant 0 : i32
    %c0_i32_0 = arith.constant 0 : i32
    %c0_i32_1 = arith.constant 0 : i32
    return %c0_i32, %c0_i32_0 : i32, i32
  }
  func.func @transform_32(%arg0: i32) -> (i32, i32) {
    %c0_i32 = arith.constant 0 : i32
    %c0_i32_0 = arith.constant 0 : i32
    %c0_i32_1 = arith.constant 0 : i32
    return %c0_i32, %c0_i32_0 : i32, i32
  }
  func.func @transform_33(%arg0: i32) -> (i32, i32) {
    %c0_i32 = arith.constant 0 : i32
    %c0_i32_0 = arith.constant 0 : i32
    %c0_i32_1 = arith.constant 0 : i32
    return %c0_i32, %c0_i32_0 : i32, i32
  }
  func.func @transform_34(%arg0: i32) -> (i32, i32) {
    %c0_i32 = arith.constant 0 : i32
    %c0_i32_0 = arith.constant 0 : i32
    %c0_i32_1 = arith.constant 0 : i32
    return %c0_i32, %c0_i32_0 : i32, i32
  }
  func.func @transform_35(%arg0: i32) -> (i32, i32) {
    %c0_i32 = arith.constant 0 : i32
    %c0_i32_0 = arith.constant 0 : i32
    %c0_i32_1 = arith.constant 0 : i32
    return %c0_i32, %c0_i32_0 : i32, i32
  }
  func.func @transform_36(%arg0: i32) -> (i32, i32) {
    %c0_i32 = arith.constant 0 : i32
    %c0_i32_0 = arith.constant 0 : i32
    %c0_i32_1 = arith.constant 0 : i32
    return %c0_i32, %c0_i32_0 : i32, i32
  }
  func.func @transform_37(%arg0: i32) -> (i32, i32) {
    %c0_i32 = arith.constant 0 : i32
    %c0_i32_0 = arith.constant 0 : i32
    return %arg0, %c0_i32 : i32, i32
  }
}

</mosaic_0001>

<llo_original>
// kernel: generator_res_ae_forward.1
$region0: #{generator_res_ae_forward.1}
  #allocation0 [shape = 'u32[]', space=smem, size = 0x4, offset = 0x4, fixed_abs, tag = 'smem constant byte address 0x4 - core index']
  #allocation1 [shape = 'u32[144,128]{1,0:T(1,128)}', space=vmem, size = 0x12000, scoped, tag = 'internal scratch']
  %s0 = inlined_call_operand.smem [shape: u32[38], index: -1, kind: input, shape index: {}]
  %s1 = sld [smem:[%s0]]
  %s2 = scalar_lea.smem %s0, 1
  %s3 = sld [smem:[%s2]]
  %s4 = scalar_lea.smem %s0, 2
  %s5 = sld [smem:[%s4]]
  %s6 = scalar_lea.smem %s0, 3
  %s7 = sld [smem:[%s6]]
  %s8 = scalar_lea.smem %s0, 4
  %s9 = sld [smem:[%s8]]
  %s10 = scalar_lea.smem %s0, 5
  %s11 = sld [smem:[%s10]]
  %s12 = scalar_lea.smem %s0, 6
  %s13 = sld [smem:[%s12]]
  %s14 = scalar_lea.smem %s0, 7
  %s15 = sld [smem:[%s14]]
  %s16 = scalar_lea.smem %s0, 8
  %s17 = sld [smem:[%s16]]
  %s18 = scalar_lea.smem %s0, 9
  %s19 = sld [smem:[%s18]]
  %s20 = scalar_lea.smem %s0, 10
  %s21 = sld [smem:[%s20]]
  %s22 = scalar_lea.smem %s0, 11
  %s23 = sld [smem:[%s22]]
  %s24 = scalar_lea.smem %s0, 12
  %s25 = sld [smem:[%s24]]
  %s26 = scalar_lea.smem %s0, 13
  %s27 = sld [smem:[%s26]]
  %s28 = scalar_lea.smem %s0, 14
  %s29 = sld [smem:[%s28]]
  %s30 = scalar_lea.smem %s0, 15
  %s31 = sld [smem:[%s30]]
  %s32 = scalar_lea.smem %s0, 16
  %s33 = sld [smem:[%s32]]
  %s34 = scalar_lea.smem %s0, 17
  %s35 = sld [smem:[%s34]]
  %s36 = scalar_lea.smem %s0, 18
  %s37 = sld [smem:[%s36]]
  %s38 = scalar_lea.smem %s0, 19
  %s39 = sld [smem:[%s38]]
  %s40 = scalar_lea.smem %s0, 20
  %s41 = sld [smem:[%s40]]
  %s42 = scalar_lea.smem %s0, 21
  %s43 = sld [smem:[%s42]]
  %s44 = scalar_lea.smem %s0, 22
  %s45 = sld [smem:[%s44]]
  %s46 = scalar_lea.smem %s0, 23
  %s47 = sld [smem:[%s46]]
  %s48 = scalar_lea.smem %s0, 24
  %s49 = sld [smem:[%s48]]
  %s50 = scalar_lea.smem %s0, 25
  %s51 = sld [smem:[%s50]]
  %s52 = scalar_lea.smem %s0, 26
  %s53 = sld [smem:[%s52]]
  %s54 = scalar_lea.smem %s0, 27
  %s55 = sld [smem:[%s54]]
  %s56 = scalar_lea.smem %s0, 28
  %s57 = sld [smem:[%s56]]
  %s58 = scalar_lea.smem %s0, 29
  %s59 = sld [smem:[%s58]]
  %s60 = scalar_lea.smem %s0, 30
  %s61 = sld [smem:[%s60]]
  %s62 = scalar_lea.smem %s0, 31
  %s63 = sld [smem:[%s62]]
  %s64 = scalar_lea.smem %s0, 32
  %s65 = sld [smem:[%s64]]
  %s66 = scalar_lea.smem %s0, 33
  %s67 = sld [smem:[%s66]]
  %s68 = scalar_lea.smem %s0, 34
  %s69 = sld [smem:[%s68]]
  %s70 = scalar_lea.smem %s0, 35
  %s71 = sld [smem:[%s70]]
  %s72 = scalar_lea.smem %s0, 36
  %s73 = sld [smem:[%s72]]
  %s74 = scalar_lea.smem %s0, 37
  %s75 = sld [smem:[%s74]]
  %s76 = sld [smem:[#allocation0]]
  $region181: #{generator_res_ae_forward.1} parent=0
    _
  %s78 = ssub.s32 1, %s76
  %s79 = scalar_select 0, %s78, %s76
  $region1: #{generator_res_ae_forward.1} parent=0
    #allocation2 [shape = 'u8[8192]{0}', space=vmem, size = 0x2000, scoped, tag = 'output window, operand 0']
    #allocation3 [shape = 's32[2]{0}', space=sflag, size = 0x8, scoped, tag = 'scoped memory for generator_res_ae_forward.1']
    %80 = vsyncpa [#allocation3], 0
    %s81 = scalar_lea.sflag [#allocation3], 1
    %82 = vsyncpa %s81, 0
    loop: start=0, step=1, limit=4
    $region2: #{generator_res_ae_forward.1} parent=1 // loop_pre_header
      _
    $region3: #{generator_res_ae_forward.1} parent=1 // loop_header
      %s84 = sphi 0, %s88
      %p85 = scmp.ge.s32.totalorder %s84, 4
      %s94 = sphi 0, %s96
      %s97 = sphi 0, %s94
      %s98 = sphi 0, %s97
      %s114 = sphi 0, %s98
      %s118 = sphi 0, %s118
      %s120 = sphi 0, %s118
      %s121 = sphi 0, %s120
      %s135 = sphi 0, %s121
      %s139 = sphi 0, %s139
      %s141 = sphi 0, %s139
      %s142 = sphi 0, %s141
      %s156 = sphi 0, %s142
      %s160 = sphi 0, %s160
      %s162 = sphi 0, %s160
      %s163 = sphi 0, %s162
      %s177 = sphi 0, %s163
      %s181 = sphi 0, %s181
      %s183 = sphi 0, %s181
      %s184 = sphi 0, %s183
      %s198 = sphi 0, %s184
      %s202 = sphi 0, %s202
      %s204 = sphi 0, %s202
      %s205 = sphi 0, %s204
      %s219 = sphi 0, %s205
      %s223 = sphi 0, %s223
      %s225 = sphi 0, %s223
      %s226 = sphi 0, %s225
      %s240 = sphi 0, %s226
      %s244 = sphi 0, %s244
      %s246 = sphi 0, %s244
      %s247 = sphi 0, %s246
      %s261 = sphi 0, %s247
      %s265 = sphi 0, %s265
      %s267 = sphi 0, %s265
      %s268 = sphi 0, %s267
      %s282 = sphi 0, %s268
      %s286 = sphi 0, %s286
      %s288 = sphi 0, %s286
      %s289 = sphi 0, %s288
      %s303 = sphi 0, %s289
      %s307 = sphi 0, %s307
      %s309 = sphi 0, %s307
      %s310 = sphi 0, %s309
      %s324 = sphi 0, %s310
      %s328 = sphi 0, %s328
      %s330 = sphi 0, %s328
      %s331 = sphi 0, %s330
      %s345 = sphi 0, %s331
      %s349 = sphi 0, %s349
      %s351 = sphi 0, %s349
      %s352 = sphi 0, %s351
      %s366 = sphi 0, %s352
      %s370 = sphi 0, %s370
      %s372 = sphi 0, %s370
      %s373 = sphi 0, %s372
      %s387 = sphi 0, %s373
      %s391 = sphi 0, %s391
      %s393 = sphi 0, %s391
      %s394 = sphi 0, %s393
      %s408 = sphi 0, %s394
      %s412 = sphi 0, %s412
      %s414 = sphi 0, %s412
      %s415 = sphi 0, %s414
      %s429 = sphi 0, %s415
      %s433 = sphi 0, %s433
      %s435 = sphi 0, %s433
      %s436 = sphi 0, %s435
      %s450 = sphi 0, %s436
      %s454 = sphi 0, %s454
      %s456 = sphi 0, %s454
      %s457 = sphi 0, %s456
      %s471 = sphi 0, %s457
      %s475 = sphi 0, %s475
      %s477 = sphi 0, %s475
      %s478 = sphi 0, %s477
      %s492 = sphi 0, %s478
      %s496 = sphi 0, %s496
      %s498 = sphi 0, %s496
      %s499 = sphi 0, %s498
      %s513 = sphi 0, %s499
      %s517 = sphi 0, %s517
      %s519 = sphi 0, %s517
      %s520 = sphi 0, %s519
      %s534 = sphi 0, %s520
      %s538 = sphi 0, %s538
      %s540 = sphi 0, %s538
      %s541 = sphi 0, %s540
      %s555 = sphi 0, %s541
      %s559 = sphi 0, %s559
      %s561 = sphi 0, %s559
      %s562 = sphi 0, %s561
      %s576 = sphi 0, %s562
      %s580 = sphi 0, %s580
      %s582 = sphi 0, %s580
      %s583 = sphi 0, %s582
      %s597 = sphi 0, %s583
      %s601 = sphi 0, %s601
      %s603 = sphi 0, %s601
      %s604 = sphi 0, %s603
      %s618 = sphi 0, %s604
      %s622 = sphi 0, %s622
      %s624 = sphi 0, %s622
      %s625 = sphi 0, %s624
      %s639 = sphi 0, %s625
      %s643 = sphi 0, %s643
      %s645 = sphi 0, %s643
      %s646 = sphi 0, %s645
      %s660 = sphi 0, %s646
      %s664 = sphi 0, %s664
      %s666 = sphi 0, %s664
      %s667 = sphi 0, %s666
      %s681 = sphi 0, %s667
      %s685 = sphi 0, %s685
      %s687 = sphi 0, %s685
      %s688 = sphi 0, %s687
      %s702 = sphi 0, %s688
      %s706 = sphi 0, %s706
      %s708 = sphi 0, %s706
      %s709 = sphi 0, %s708
      %s723 = sphi 0, %s709
      %s727 = sphi 0, %s727
      %s729 = sphi 0, %s727
      %s730 = sphi 0, %s729
      %s744 = sphi 0, %s730
      %s748 = sphi 0, %s748
      %s750 = sphi 0, %s748
      %s751 = sphi 0, %s750
      %s765 = sphi 0, %s751
      %s769 = sphi 0, %s769
      %s771 = sphi 0, %s769
      %s772 = sphi 0, %s771
      %s786 = sphi 0, %s772
      %s790 = sphi 0, %s790
      %s792 = sphi 0, %s790
      %s793 = sphi 0, %s792
      %s807 = sphi 0, %s793
      %s811 = sphi 0, %s811
      %s813 = sphi 0, %s811
      %s814 = sphi 0, %s813
      %s828 = sphi 0, %s814
      %s832 = sphi 0, %s832
      %s834 = sphi 0, %s832
      %s835 = sphi 0, %s834
      %s849 = sphi 0, %s835
      %s853 = sphi 0, %s853
      %s855 = sphi 0, %s853
      %s856 = sphi 0, %s855
      %s870 = sphi 0, %s856
      %s876 = sphi 0, %s878
      %s879 = sphi 0, %s876
      %s880 = sphi 0, %s879
      %s896 = sphi 0, %s880
    $region4: #{generator_res_ae_forward.1} parent=1 // loop_header_branch
      %87 = sbr.rel (%p85) target = $region8
    $region5: #{generator_res_ae_forward.1} parent=1 // loop_body
      %s89 = ssub.s32 %s84, 1
      %s90 = ssub.s32 %s84, 2
      %s91 = sadd.s32 %s84, 1
      %s92 = ssub.s32 %s84, %s91
      %p93 = scmp.eq.s32.totalorder %s92, 0
      %s95 = sadd.s32 %s94, 1
      %s96 = scalar_select %p93, %s94, %s95
      %p99 = pneg %p93
      %p100 = scmp.eq.s32.totalorder %s84, 1
      %p101 = por %p99, %p100
      %p102 = scmp.ne.s32.totalorder %s94, %s97
      %p103 = scmp.eq.s32.totalorder %s84, 0
      %p104 = por %p102, %p103
      %p105 = scmp.ne.s32.totalorder %s94, %s97
      %p106 = scmp.eq.s32.totalorder %s89, 1
      %p107 = por %p105, %p106
      %p108 = scmp.ne.s32.totalorder %s97, %s98
      %p109 = scmp.eq.s32.totalorder %s89, 0
      %p110 = por %p108, %p109
      %p111 = scmp.ne.s32.totalorder %s97, %s98
      %p112 = scmp.eq.s32.totalorder %s90, 1
      %p113 = por %p111, %p112
      %p115 = scmp.ne.s32.totalorder %s98, %s114
      %p116 = scmp.eq.s32.totalorder %s90, 0
      %p117 = por %p115, %p116
      %s119 = sadd.s32 %s118, 1
      %p122 = scmp.eq.s32.totalorder %s84, 1
      %p123 = scmp.ne.s32.totalorder %s118, %s120
      %p124 = scmp.eq.s32.totalorder %s84, 0
      %p125 = por %p123, %p124
      %p126 = scmp.ne.s32.totalorder %s118, %s120
      %p127 = scmp.eq.s32.totalorder %s89, 1
      %p128 = por %p126, %p127
      %p129 = scmp.ne.s32.totalorder %s120, %s121
      %p130 = scmp.eq.s32.totalorder %s89, 0
      %p131 = por %p129, %p130
      %p132 = scmp.ne.s32.totalorder %s120, %s121
      %p133 = scmp.eq.s32.totalorder %s90, 1
      %p134 = por %p132, %p133
      %p136 = scmp.ne.s32.totalorder %s121, %s135
      %p137 = scmp.eq.s32.totalorder %s90, 0
      %p138 = por %p136, %p137
      %s140 = sadd.s32 %s139, 1
      %p143 = scmp.eq.s32.totalorder %s84, 1
      %p144 = scmp.ne.s32.totalorder %s139, %s141
      %p145 = scmp.eq.s32.totalorder %s84, 0
      %p146 = por %p144, %p145
      %p147 = scmp.ne.s32.totalorder %s139, %s141
      %p148 = scmp.eq.s32.totalorder %s89, 1
      %p149 = por %p147, %p148
      %p150 = scmp.ne.s32.totalorder %s141, %s142
      %p151 = scmp.eq.s32.totalorder %s89, 0
      %p152 = por %p150, %p151
      %p153 = scmp.ne.s32.totalorder %s141, %s142
      %p154 = scmp.eq.s32.totalorder %s90, 1
      %p155 = por %p153, %p154
      %p157 = scmp.ne.s32.totalorder %s142, %s156
      %p158 = scmp.eq.s32.totalorder %s90, 0
      %p159 = por %p157, %p158
      %s161 = sadd.s32 %s160, 1
      %p164 = scmp.eq.s32.totalorder %s84, 1
      %p165 = scmp.ne.s32.totalorder %s160, %s162
      %p166 = scmp.eq.s32.totalorder %s84, 0
      %p167 = por %p165, %p166
      %p168 = scmp.ne.s32.totalorder %s160, %s162
      %p169 = scmp.eq.s32.totalorder %s89, 1
      %p170 = por %p168, %p169
      %p171 = scmp.ne.s32.totalorder %s162, %s163
      %p172 = scmp.eq.s32.totalorder %s89, 0
      %p173 = por %p171, %p172
      %p174 = scmp.ne.s32.totalorder %s162, %s163
      %p175 = scmp.eq.s32.totalorder %s90, 1
      %p176 = por %p174, %p175
      %p178 = scmp.ne.s32.totalorder %s163, %s177
      %p179 = scmp.eq.s32.totalorder %s90, 0
      %p180 = por %p178, %p179
      %s182 = sadd.s32 %s181, 1
      %p185 = scmp.eq.s32.totalorder %s84, 1
      %p186 = scmp.ne.s32.totalorder %s181, %s183
      %p187 = scmp.eq.s32.totalorder %s84, 0
      %p188 = por %p186, %p187
      %p189 = scmp.ne.s32.totalorder %s181, %s183
      %p190 = scmp.eq.s32.totalorder %s89, 1
      %p191 = por %p189, %p190
      %p192 = scmp.ne.s32.totalorder %s183, %s184
      %p193 = scmp.eq.s32.totalorder %s89, 0
      %p194 = por %p192, %p193
      %p195 = scmp.ne.s32.totalorder %s183, %s184
      %p196 = scmp.eq.s32.totalorder %s90, 1
      %p197 = por %p195, %p196
      %p199 = scmp.ne.s32.totalorder %s184, %s198
      %p200 = scmp.eq.s32.totalorder %s90, 0
      %p201 = por %p199, %p200
      %s203 = sadd.s32 %s202, 1
      %p206 = scmp.eq.s32.totalorder %s84, 1
      %p207 = scmp.ne.s32.totalorder %s202, %s204
      %p208 = scmp.eq.s32.totalorder %s84, 0
      %p209 = por %p207, %p208
      %p210 = scmp.ne.s32.totalorder %s202, %s204
      %p211 = scmp.eq.s32.totalorder %s89, 1
      %p212 = por %p210, %p211
      %p213 = scmp.ne.s32.totalorder %s204, %s205
      %p214 = scmp.eq.s32.totalorder %s89, 0
      %p215 = por %p213, %p214
      %p216 = scmp.ne.s32.totalorder %s204, %s205
      %p217 = scmp.eq.s32.totalorder %s90, 1
      %p218 = por %p216, %p217
      %p220 = scmp.ne.s32.totalorder %s205, %s219
      %p221 = scmp.eq.s32.totalorder %s90, 0
      %p222 = por %p220, %p221
      %s224 = sadd.s32 %s223, 1
      %p227 = scmp.eq.s32.totalorder %s84, 1
      %p228 = scmp.ne.s32.totalorder %s223, %s225
      %p229 = scmp.eq.s32.totalorder %s84, 0
      %p230 = por %p228, %p229
      %p231 = scmp.ne.s32.totalorder %s223, %s225
      %p232 = scmp.eq.s32.totalorder %s89, 1
      %p233 = por %p231, %p232
      %p234 = scmp.ne.s32.totalorder %s225, %s226
      %p235 = scmp.eq.s32.totalorder %s89, 0
      %p236 = por %p234, %p235
      %p237 = scmp.ne.s32.totalorder %s225, %s226
      %p238 = scmp.eq.s32.totalorder %s90, 1
      %p239 = por %p237, %p238
      %p241 = scmp.ne.s32.totalorder %s226, %s240
      %p242 = scmp.eq.s32.totalorder %s90, 0
      %p243 = por %p241, %p242
      %s245 = sadd.s32 %s244, 1
      %p248 = scmp.eq.s32.totalorder %s84, 1
      %p249 = scmp.ne.s32.totalorder %s244, %s246
      %p250 = scmp.eq.s32.totalorder %s84, 0
      %p251 = por %p249, %p250
      %p252 = scmp.ne.s32.totalorder %s244, %s246
      %p253 = scmp.eq.s32.totalorder %s89, 1
      %p254 = por %p252, %p253
      %p255 = scmp.ne.s32.totalorder %s246, %s247
      %p256 = scmp.eq.s32.totalorder %s89, 0
      %p257 = por %p255, %p256
      %p258 = scmp.ne.s32.totalorder %s246, %s247
      %p259 = scmp.eq.s32.totalorder %s90, 1
      %p260 = por %p258, %p259
      %p262 = scmp.ne.s32.totalorder %s247, %s261
      %p263 = scmp.eq.s32.totalorder %s90, 0
      %p264 = por %p262, %p263
      %s266 = sadd.s32 %s265, 1
      %p269 = scmp.eq.s32.totalorder %s84, 1
      %p270 = scmp.ne.s32.totalorder %s265, %s267
      %p271 = scmp.eq.s32.totalorder %s84, 0
      %p272 = por %p270, %p271
      %p273 = scmp.ne.s32.totalorder %s265, %s267
      %p274 = scmp.eq.s32.totalorder %s89, 1
      %p275 = por %p273, %p274
      %p276 = scmp.ne.s32.totalorder %s267, %s268
      %p277 = scmp.eq.s32.totalorder %s89, 0
      %p278 = por %p276, %p277
      %p279 = scmp.ne.s32.totalorder %s267, %s268
      %p280 = scmp.eq.s32.totalorder %s90, 1
      %p281 = por %p279, %p280
      %p283 = scmp.ne.s32.totalorder %s268, %s282
      %p284 = scmp.eq.s32.totalorder %s90, 0
      %p285 = por %p283, %p284
      %s287 = sadd.s32 %s286, 1
      %p290 = scmp.eq.s32.totalorder %s84, 1
      %p291 = scmp.ne.s32.totalorder %s286, %s288
      %p292 = scmp.eq.s32.totalorder %s84, 0
      %p293 = por %p291, %p292
      %p294 = scmp.ne.s32.totalorder %s286, %s288
      %p295 = scmp.eq.s32.totalorder %s89, 1
      %p296 = por %p294, %p295
      %p297 = scmp.ne.s32.totalorder %s288, %s289
      %p298 = scmp.eq.s32.totalorder %s89, 0
      %p299 = por %p297, %p298
      %p300 = scmp.ne.s32.totalorder %s288, %s289
      %p301 = scmp.eq.s32.totalorder %s90, 1
      %p302 = por %p300, %p301
      %p304 = scmp.ne.s32.totalorder %s289, %s303
      %p305 = scmp.eq.s32.totalorder %s90, 0
      %p306 = por %p304, %p305
      %s308 = sadd.s32 %s307, 1
      %p311 = scmp.eq.s32.totalorder %s84, 1
      %p312 = scmp.ne.s32.totalorder %s307, %s309
      %p313 = scmp.eq.s32.totalorder %s84, 0
      %p314 = por %p312, %p313
      %p315 = scmp.ne.s32.totalorder %s307, %s309
      %p316 = scmp.eq.s32.totalorder %s89, 1
      %p317 = por %p315, %p316
      %p318 = scmp.ne.s32.totalorder %s309, %s310
      %p319 = scmp.eq.s32.totalorder %s89, 0
      %p320 = por %p318, %p319
      %p321 = scmp.ne.s32.totalorder %s309, %s310
      %p322 = scmp.eq.s32.totalorder %s90, 1
      %p323 = por %p321, %p322
      %p325 = scmp.ne.s32.totalorder %s310, %s324
      %p326 = scmp.eq.s32.totalorder %s90, 0
      %p327 = por %p325, %p326
      %s329 = sadd.s32 %s328, 1
      %p332 = scmp.eq.s32.totalorder %s84, 1
      %p333 = scmp.ne.s32.totalorder %s328, %s330
      %p334 = scmp.eq.s32.totalorder %s84, 0
      %p335 = por %p333, %p334
      %p336 = scmp.ne.s32.totalorder %s328, %s330
      %p337 = scmp.eq.s32.totalorder %s89, 1
      %p338 = por %p336, %p337
      %p339 = scmp.ne.s32.totalorder %s330, %s331
      %p340 = scmp.eq.s32.totalorder %s89, 0
      %p341 = por %p339, %p340
      %p342 = scmp.ne.s32.totalorder %s330, %s331
      %p343 = scmp.eq.s32.totalorder %s90, 1
      %p344 = por %p342, %p343
      %p346 = scmp.ne.s32.totalorder %s331, %s345
      %p347 = scmp.eq.s32.totalorder %s90, 0
      %p348 = por %p346, %p347
      %s350 = sadd.s32 %s349, 1
      %p353 = scmp.eq.s32.totalorder %s84, 1
      %p354 = scmp.ne.s32.totalorder %s349, %s351
      %p355 = scmp.eq.s32.totalorder %s84, 0
      %p356 = por %p354, %p355
      %p357 = scmp.ne.s32.totalorder %s349, %s351
      %p358 = scmp.eq.s32.totalorder %s89, 1
      %p359 = por %p357, %p358
      %p360 = scmp.ne.s32.totalorder %s351, %s352
      %p361 = scmp.eq.s32.totalorder %s89, 0
      %p362 = por %p360, %p361
      %p363 = scmp.ne.s32.totalorder %s351, %s352
      %p364 = scmp.eq.s32.totalorder %s90, 1
      %p365 = por %p363, %p364
      %p367 = scmp.ne.s32.totalorder %s352, %s366
      %p368 = scmp.eq.s32.totalorder %s90, 0
      %p369 = por %p367, %p368
      %s371 = sadd.s32 %s370, 1
      %p374 = scmp.eq.s32.totalorder %s84, 1
      %p375 = scmp.ne.s32.totalorder %s370, %s372
      %p376 = scmp.eq.s32.totalorder %s84, 0
      %p377 = por %p375, %p376
      %p378 = scmp.ne.s32.totalorder %s370, %s372
      %p379 = scmp.eq.s32.totalorder %s89, 1
      %p380 = por %p378, %p379
      %p381 = scmp.ne.s32.totalorder %s372, %s373
      %p382 = scmp.eq.s32.totalorder %s89, 0
      %p383 = por %p381, %p382
      %p384 = scmp.ne.s32.totalorder %s372, %s373
      %p385 = scmp.eq.s32.totalorder %s90, 1
      %p386 = por %p384, %p385
      %p388 = scmp.ne.s32.totalorder %s373, %s387
      %p389 = scmp.eq.s32.totalorder %s90, 0
      %p390 = por %p388, %p389
      %s392 = sadd.s32 %s391, 1
      %p395 = scmp.eq.s32.totalorder %s84, 1
      %p396 = scmp.ne.s32.totalorder %s391, %s393
      %p397 = scmp.eq.s32.totalorder %s84, 0
      %p398 = por %p396, %p397
      %p399 = scmp.ne.s32.totalorder %s391, %s393
      %p400 = scmp.eq.s32.totalorder %s89, 1
      %p401 = por %p399, %p400
      %p402 = scmp.ne.s32.totalorder %s393, %s394
      %p403 = scmp.eq.s32.totalorder %s89, 0
      %p404 = por %p402, %p403
      %p405 = scmp.ne.s32.totalorder %s393, %s394
      %p406 = scmp.eq.s32.totalorder %s90, 1
      %p407 = por %p405, %p406
      %p409 = scmp.ne.s32.totalorder %s394, %s408
      %p410 = scmp.eq.s32.totalorder %s90, 0
      %p411 = por %p409, %p410
      %s413 = sadd.s32 %s412, 1
      %p416 = scmp.eq.s32.totalorder %s84, 1
      %p417 = scmp.ne.s32.totalorder %s412, %s414
      %p418 = scmp.eq.s32.totalorder %s84, 0
      %p419 = por %p417, %p418
      %p420 = scmp.ne.s32.totalorder %s412, %s414
      %p421 = scmp.eq.s32.totalorder %s89, 1
      %p422 = por %p420, %p421
      %p423 = scmp.ne.s32.totalorder %s414, %s415
      %p424 = scmp.eq.s32.totalorder %s89, 0
      %p425 = por %p423, %p424
      %p426 = scmp.ne.s32.totalorder %s414, %s415
      %p427 = scmp.eq.s32.totalorder %s90, 1
      %p428 = por %p426, %p427
      %p430 = scmp.ne.s32.totalorder %s415, %s429
      %p431 = scmp.eq.s32.totalorder %s90, 0
      %p432 = por %p430, %p431
      %s434 = sadd.s32 %s433, 1
      %p437 = scmp.eq.s32.totalorder %s84, 1
      %p438 = scmp.ne.s32.totalorder %s433, %s435
      %p439 = scmp.eq.s32.totalorder %s84, 0
      %p440 = por %p438, %p439
      %p441 = scmp.ne.s32.totalorder %s433, %s435
      %p442 = scmp.eq.s32.totalorder %s89, 1
      %p443 = por %p441, %p442
      %p444 = scmp.ne.s32.totalorder %s435, %s436
      %p445 = scmp.eq.s32.totalorder %s89, 0
      %p446 = por %p444, %p445
      %p447 = scmp.ne.s32.totalorder %s435, %s436
      %p448 = scmp.eq.s32.totalorder %s90, 1
      %p449 = por %p447, %p448
      %p451 = scmp.ne.s32.totalorder %s436, %s450
      %p452 = scmp.eq.s32.totalorder %s90, 0
      %p453 = por %p451, %p452
      %s455 = sadd.s32 %s454, 1
      %p458 = scmp.eq.s32.totalorder %s84, 1
      %p459 = scmp.ne.s32.totalorder %s454, %s456
      %p460 = scmp.eq.s32.totalorder %s84, 0
      %p461 = por %p459, %p460
      %p462 = scmp.ne.s32.totalorder %s454, %s456
      %p463 = scmp.eq.s32.totalorder %s89, 1
      %p464 = por %p462, %p463
      %p465 = scmp.ne.s32.totalorder %s456, %s457
      %p466 = scmp.eq.s32.totalorder %s89, 0
      %p467 = por %p465, %p466
      %p468 = scmp.ne.s32.totalorder %s456, %s457
      %p469 = scmp.eq.s32.totalorder %s90, 1
      %p470 = por %p468, %p469
      %p472 = scmp.ne.s32.totalorder %s457, %s471
      %p473 = scmp.eq.s32.totalorder %s90, 0
      %p474 = por %p472, %p473
      %s476 = sadd.s32 %s475, 1
      %p479 = scmp.eq.s32.totalorder %s84, 1
      %p480 = scmp.ne.s32.totalorder %s475, %s477
      %p481 = scmp.eq.s32.totalorder %s84, 0
      %p482 = por %p480, %p481
      %p483 = scmp.ne.s32.totalorder %s475, %s477
      %p484 = scmp.eq.s32.totalorder %s89, 1
      %p485 = por %p483, %p484
      %p486 = scmp.ne.s32.totalorder %s477, %s478
      %p487 = scmp.eq.s32.totalorder %s89, 0
      %p488 = por %p486, %p487
      %p489 = scmp.ne.s32.totalorder %s477, %s478
      %p490 = scmp.eq.s32.totalorder %s90, 1
      %p491 = por %p489, %p490
      %p493 = scmp.ne.s32.totalorder %s478, %s492
      %p494 = scmp.eq.s32.totalorder %s90, 0
      %p495 = por %p493, %p494
      %s497 = sadd.s32 %s496, 1
      %p500 = scmp.eq.s32.totalorder %s84, 1
      %p501 = scmp.ne.s32.totalorder %s496, %s498
      %p502 = scmp.eq.s32.totalorder %s84, 0
      %p503 = por %p501, %p502
      %p504 = scmp.ne.s32.totalorder %s496, %s498
      %p505 = scmp.eq.s32.totalorder %s89, 1
      %p506 = por %p504, %p505
      %p507 = scmp.ne.s32.totalorder %s498, %s499
      %p508 = scmp.eq.s32.totalorder %s89, 0
      %p509 = por %p507, %p508
      %p510 = scmp.ne.s32.totalorder %s498, %s499
      %p511 = scmp.eq.s32.totalorder %s90, 1
      %p512 = por %p510, %p511
      %p514 = scmp.ne.s32.totalorder %s499, %s513
      %p515 = scmp.eq.s32.totalorder %s90, 0
      %p516 = por %p514, %p515
      %s518 = sadd.s32 %s517, 1
      %p521 = scmp.eq.s32.totalorder %s84, 1
      %p522 = scmp.ne.s32.totalorder %s517, %s519
      %p523 = scmp.eq.s32.totalorder %s84, 0
      %p524 = por %p522, %p523
      %p525 = scmp.ne.s32.totalorder %s517, %s519
      %p526 = scmp.eq.s32.totalorder %s89, 1
      %p527 = por %p525, %p526
      %p528 = scmp.ne.s32.totalorder %s519, %s520
      %p529 = scmp.eq.s32.totalorder %s89, 0
      %p530 = por %p528, %p529
      %p531 = scmp.ne.s32.totalorder %s519, %s520
      %p532 = scmp.eq.s32.totalorder %s90, 1
      %p533 = por %p531, %p532
      %p535 = scmp.ne.s32.totalorder %s520, %s534
      %p536 = scmp.eq.s32.totalorder %s90, 0
      %p537 = por %p535, %p536
      %s539 = sadd.s32 %s538, 1
      %p542 = scmp.eq.s32.totalorder %s84, 1
      %p543 = scmp.ne.s32.totalorder %s538, %s540
      %p544 = scmp.eq.s32.totalorder %s84, 0
      %p545 = por %p543, %p544
      %p546 = scmp.ne.s32.totalorder %s538, %s540
      %p547 = scmp.eq.s32.totalorder %s89, 1
      %p548 = por %p546, %p547
      %p549 = scmp.ne.s32.totalorder %s540, %s541
      %p550 = scmp.eq.s32.totalorder %s89, 0
      %p551 = por %p549, %p550
      %p552 = scmp.ne.s32.totalorder %s540, %s541
      %p553 = scmp.eq.s32.totalorder %s90, 1
      %p554 = por %p552, %p553
      %p556 = scmp.ne.s32.totalorder %s541, %s555
      %p557 = scmp.eq.s32.totalorder %s90, 0
      %p558 = por %p556, %p557
      %s560 = sadd.s32 %s559, 1
      %p563 = scmp.eq.s32.totalorder %s84, 1
      %p564 = scmp.ne.s32.totalorder %s559, %s561
      %p565 = scmp.eq.s32.totalorder %s84, 0
      %p566 = por %p564, %p565
      %p567 = scmp.ne.s32.totalorder %s559, %s561
      %p568 = scmp.eq.s32.totalorder %s89, 1
      %p569 = por %p567, %p568
      %p570 = scmp.ne.s32.totalorder %s561, %s562
      %p571 = scmp.eq.s32.totalorder %s89, 0
      %p572 = por %p570, %p571
      %p573 = scmp.ne.s32.totalorder %s561, %s562
      %p574 = scmp.eq.s32.totalorder %s90, 1
      %p575 = por %p573, %p574
      %p577 = scmp.ne.s32.totalorder %s562, %s576
      %p578 = scmp.eq.s32.totalorder %s90, 0
      %p579 = por %p577, %p578
      %s581 = sadd.s32 %s580, 1
      %p584 = scmp.eq.s32.totalorder %s84, 1
      %p585 = scmp.ne.s32.totalorder %s580, %s582
      %p586 = scmp.eq.s32.totalorder %s84, 0
      %p587 = por %p585, %p586
      %p588 = scmp.ne.s32.totalorder %s580, %s582
      %p589 = scmp.eq.s32.totalorder %s89, 1
      %p590 = por %p588, %p589
      %p591 = scmp.ne.s32.totalorder %s582, %s583
      %p592 = scmp.eq.s32.totalorder %s89, 0
      %p593 = por %p591, %p592
      %p594 = scmp.ne.s32.totalorder %s582, %s583
      %p595 = scmp.eq.s32.totalorder %s90, 1
      %p596 = por %p594, %p595
      %p598 = scmp.ne.s32.totalorder %s583, %s597
      %p599 = scmp.eq.s32.totalorder %s90, 0
      %p600 = por %p598, %p599
      %s602 = sadd.s32 %s601, 1
      %p605 = scmp.eq.s32.totalorder %s84, 1
      %p606 = scmp.ne.s32.totalorder %s601, %s603
      %p607 = scmp.eq.s32.totalorder %s84, 0
      %p608 = por %p606, %p607
      %p609 = scmp.ne.s32.totalorder %s601, %s603
      %p610 = scmp.eq.s32.totalorder %s89, 1
      %p611 = por %p609, %p610
      %p612 = scmp.ne.s32.totalorder %s603, %s604
      %p613 = scmp.eq.s32.totalorder %s89, 0
      %p614 = por %p612, %p613
      %p615 = scmp.ne.s32.totalorder %s603, %s604
      %p616 = scmp.eq.s32.totalorder %s90, 1
      %p617 = por %p615, %p616
      %p619 = scmp.ne.s32.totalorder %s604, %s618
      %p620 = scmp.eq.s32.totalorder %s90, 0
      %p621 = por %p619, %p620
      %s623 = sadd.s32 %s622, 1
      %p626 = scmp.eq.s32.totalorder %s84, 1
      %p627 = scmp.ne.s32.totalorder %s622, %s624
      %p628 = scmp.eq.s32.totalorder %s84, 0
      %p629 = por %p627, %p628
      %p630 = scmp.ne.s32.totalorder %s622, %s624
      %p631 = scmp.eq.s32.totalorder %s89, 1
      %p632 = por %p630, %p631
      %p633 = scmp.ne.s32.totalorder %s624, %s625
      %p634 = scmp.eq.s32.totalorder %s89, 0
      %p635 = por %p633, %p634
      %p636 = scmp.ne.s32.totalorder %s624, %s625
      %p637 = scmp.eq.s32.totalorder %s90, 1
      %p638 = por %p636, %p637
      %p640 = scmp.ne.s32.totalorder %s625, %s639
      %p641 = scmp.eq.s32.totalorder %s90, 0
      %p642 = por %p640, %p641
      %s644 = sadd.s32 %s643, 1
      %p647 = scmp.eq.s32.totalorder %s84, 1
      %p648 = scmp.ne.s32.totalorder %s643, %s645
      %p649 = scmp.eq.s32.totalorder %s84, 0
      %p650 = por %p648, %p649
      %p651 = scmp.ne.s32.totalorder %s643, %s645
      %p652 = scmp.eq.s32.totalorder %s89, 1
      %p653 = por %p651, %p652
      %p654 = scmp.ne.s32.totalorder %s645, %s646
      %p655 = scmp.eq.s32.totalorder %s89, 0
      %p656 = por %p654, %p655
      %p657 = scmp.ne.s32.totalorder %s645, %s646
      %p658 = scmp.eq.s32.totalorder %s90, 1
      %p659 = por %p657, %p658
      %p661 = scmp.ne.s32.totalorder %s646, %s660
      %p662 = scmp.eq.s32.totalorder %s90, 0
      %p663 = por %p661, %p662
      %s665 = sadd.s32 %s664, 1
      %p668 = scmp.eq.s32.totalorder %s84, 1
      %p669 = scmp.ne.s32.totalorder %s664, %s666
      %p670 = scmp.eq.s32.totalorder %s84, 0
      %p671 = por %p669, %p670
      %p672 = scmp.ne.s32.totalorder %s664, %s666
      %p673 = scmp.eq.s32.totalorder %s89, 1
      %p674 = por %p672, %p673
      %p675 = scmp.ne.s32.totalorder %s666, %s667
      %p676 = scmp.eq.s32.totalorder %s89, 0
      %p677 = por %p675, %p676
      %p678 = scmp.ne.s32.totalorder %s666, %s667
      %p679 = scmp.eq.s32.totalorder %s90, 1
      %p680 = por %p678, %p679
      %p682 = scmp.ne.s32.totalorder %s667, %s681
      %p683 = scmp.eq.s32.totalorder %s90, 0
      %p684 = por %p682, %p683
      %s686 = sadd.s32 %s685, 1
      %p689 = scmp.eq.s32.totalorder %s84, 1
      %p690 = scmp.ne.s32.totalorder %s685, %s687
      %p691 = scmp.eq.s32.totalorder %s84, 0
      %p692 = por %p690, %p691
      %p693 = scmp.ne.s32.totalorder %s685, %s687
      %p694 = scmp.eq.s32.totalorder %s89, 1
      %p695 = por %p693, %p694
      %p696 = scmp.ne.s32.totalorder %s687, %s688
      %p697 = scmp.eq.s32.totalorder %s89, 0
      %p698 = por %p696, %p697
      %p699 = scmp.ne.s32.totalorder %s687, %s688
      %p700 = scmp.eq.s32.totalorder %s90, 1
      %p701 = por %p699, %p700
      %p703 = scmp.ne.s32.totalorder %s688, %s702
      %p704 = scmp.eq.s32.totalorder %s90, 0
      %p705 = por %p703, %p704
      %s707 = sadd.s32 %s706, 1
      %p710 = scmp.eq.s32.totalorder %s84, 1
      %p711 = scmp.ne.s32.totalorder %s706, %s708
      %p712 = scmp.eq.s32.totalorder %s84, 0
      %p713 = por %p711, %p712
      %p714 = scmp.ne.s32.totalorder %s706, %s708
      %p715 = scmp.eq.s32.totalorder %s89, 1
      %p716 = por %p714, %p715
      %p717 = scmp.ne.s32.totalorder %s708, %s709
      %p718 = scmp.eq.s32.totalorder %s89, 0
      %p719 = por %p717, %p718
      %p720 = scmp.ne.s32.totalorder %s708, %s709
      %p721 = scmp.eq.s32.totalorder %s90, 1
      %p722 = por %p720, %p721
      %p724 = scmp.ne.s32.totalorder %s709, %s723
      %p725 = scmp.eq.s32.totalorder %s90, 0
      %p726 = por %p724, %p725
      %s728 = sadd.s32 %s727, 1
      %p731 = scmp.eq.s32.totalorder %s84, 1
      %p732 = scmp.ne.s32.totalorder %s727, %s729
      %p733 = scmp.eq.s32.totalorder %s84, 0
      %p734 = por %p732, %p733
      %p735 = scmp.ne.s32.totalorder %s727, %s729
      %p736 = scmp.eq.s32.totalorder %s89, 1
      %p737 = por %p735, %p736
      %p738 = scmp.ne.s32.totalorder %s729, %s730
      %p739 = scmp.eq.s32.totalorder %s89, 0
      %p740 = por %p738, %p739
      %p741 = scmp.ne.s32.totalorder %s729, %s730
      %p742 = scmp.eq.s32.totalorder %s90, 1
      %p743 = por %p741, %p742
      %p745 = scmp.ne.s32.totalorder %s730, %s744
      %p746 = scmp.eq.s32.totalorder %s90, 0
      %p747 = por %p745, %p746
      %s749 = sadd.s32 %s748, 1
      %p752 = scmp.eq.s32.totalorder %s84, 1
      %p753 = scmp.ne.s32.totalorder %s748, %s750
      %p754 = scmp.eq.s32.totalorder %s84, 0
      %p755 = por %p753, %p754
      %p756 = scmp.ne.s32.totalorder %s748, %s750
      %p757 = scmp.eq.s32.totalorder %s89, 1
      %p758 = por %p756, %p757
      %p759 = scmp.ne.s32.totalorder %s750, %s751
      %p760 = scmp.eq.s32.totalorder %s89, 0
      %p761 = por %p759, %p760
      %p762 = scmp.ne.s32.totalorder %s750, %s751
      %p763 = scmp.eq.s32.totalorder %s90, 1
      %p764 = por %p762, %p763
      %p766 = scmp.ne.s32.totalorder %s751, %s765
      %p767 = scmp.eq.s32.totalorder %s90, 0
      %p768 = por %p766, %p767
      %s770 = sadd.s32 %s769, 1
      %p773 = scmp.eq.s32.totalorder %s84, 1
      %p774 = scmp.ne.s32.totalorder %s769, %s771
      %p775 = scmp.eq.s32.totalorder %s84, 0
      %p776 = por %p774, %p775
      %p777 = scmp.ne.s32.totalorder %s769, %s771
      %p778 = scmp.eq.s32.totalorder %s89, 1
      %p779 = por %p777, %p778
      %p780 = scmp.ne.s32.totalorder %s771, %s772
      %p781 = scmp.eq.s32.totalorder %s89, 0
      %p782 = por %p780, %p781
      %p783 = scmp.ne.s32.totalorder %s771, %s772
      %p784 = scmp.eq.s32.totalorder %s90, 1
      %p785 = por %p783, %p784
      %p787 = scmp.ne.s32.totalorder %s772, %s786
      %p788 = scmp.eq.s32.totalorder %s90, 0
      %p789 = por %p787, %p788
      %s791 = sadd.s32 %s790, 1
      %p794 = scmp.eq.s32.totalorder %s84, 1
      %p795 = scmp.ne.s32.totalorder %s790, %s792
      %p796 = scmp.eq.s32.totalorder %s84, 0
      %p797 = por %p795, %p796
      %p798 = scmp.ne.s32.totalorder %s790, %s792
      %p799 = scmp.eq.s32.totalorder %s89, 1
      %p800 = por %p798, %p799
      %p801 = scmp.ne.s32.totalorder %s792, %s793
      %p802 = scmp.eq.s32.totalorder %s89, 0
      %p803 = por %p801, %p802
      %p804 = scmp.ne.s32.totalorder %s792, %s793
      %p805 = scmp.eq.s32.totalorder %s90, 1
      %p806 = por %p804, %p805
      %p808 = scmp.ne.s32.totalorder %s793, %s807
      %p809 = scmp.eq.s32.totalorder %s90, 0
      %p810 = por %p808, %p809
      %s812 = sadd.s32 %s811, 1
      %p815 = scmp.eq.s32.totalorder %s84, 1
      %p816 = scmp.ne.s32.totalorder %s811, %s813
      %p817 = scmp.eq.s32.totalorder %s84, 0
      %p818 = por %p816, %p817
      %p819 = scmp.ne.s32.totalorder %s811, %s813
      %p820 = scmp.eq.s32.totalorder %s89, 1
      %p821 = por %p819, %p820
      %p822 = scmp.ne.s32.totalorder %s813, %s814
      %p823 = scmp.eq.s32.totalorder %s89, 0
      %p824 = por %p822, %p823
      %p825 = scmp.ne.s32.totalorder %s813, %s814
      %p826 = scmp.eq.s32.totalorder %s90, 1
      %p827 = por %p825, %p826
      %p829 = scmp.ne.s32.totalorder %s814, %s828
      %p830 = scmp.eq.s32.totalorder %s90, 0
      %p831 = por %p829, %p830
      %s833 = sadd.s32 %s832, 1
      %p836 = scmp.eq.s32.totalorder %s84, 1
      %p837 = scmp.ne.s32.totalorder %s832, %s834
      %p838 = scmp.eq.s32.totalorder %s84, 0
      %p839 = por %p837, %p838
      %p840 = scmp.ne.s32.totalorder %s832, %s834
      %p841 = scmp.eq.s32.totalorder %s89, 1
      %p842 = por %p840, %p841
      %p843 = scmp.ne.s32.totalorder %s834, %s835
      %p844 = scmp.eq.s32.totalorder %s89, 0
      %p845 = por %p843, %p844
      %p846 = scmp.ne.s32.totalorder %s834, %s835
      %p847 = scmp.eq.s32.totalorder %s90, 1
      %p848 = por %p846, %p847
      %p850 = scmp.ne.s32.totalorder %s835, %s849
      %p851 = scmp.eq.s32.totalorder %s90, 0
      %p852 = por %p850, %p851
      %s854 = sadd.s32 %s853, 1
      %p857 = scmp.eq.s32.totalorder %s84, 1
      %p858 = scmp.ne.s32.totalorder %s853, %s855
      %p859 = scmp.eq.s32.totalorder %s84, 0
      %p860 = por %p858, %p859
      %p861 = scmp.ne.s32.totalorder %s853, %s855
      %p862 = scmp.eq.s32.totalorder %s89, 1
      %p863 = por %p861, %p862
      %p864 = scmp.ne.s32.totalorder %s855, %s856
      %p865 = scmp.eq.s32.totalorder %s89, 0
      %p866 = por %p864, %p865
      %p867 = scmp.ne.s32.totalorder %s855, %s856
      %p868 = scmp.eq.s32.totalorder %s90, 1
      %p869 = por %p867, %p868
      %p871 = scmp.ne.s32.totalorder %s856, %s870
      %p872 = scmp.eq.s32.totalorder %s90, 0
      %p873 = por %p871, %p872
      %s874 = ssub.s32 %s84, %s91
      %p875 = scmp.eq.s32.totalorder %s874, 0
      %s877 = sadd.s32 %s876, 1
      %s878 = scalar_select %p875, %s876, %s877
      %p881 = pneg %p875
      %p882 = scmp.eq.s32.totalorder %s84, 1
      %p883 = por %p881, %p882
      %p884 = scmp.ne.s32.totalorder %s876, %s879
      %p885 = scmp.eq.s32.totalorder %s84, 0
      %p886 = por %p884, %p885
      %p887 = scmp.ne.s32.totalorder %s876, %s879
      %p888 = scmp.eq.s32.totalorder %s89, 1
      %p889 = por %p887, %p888
      %p890 = scmp.ne.s32.totalorder %s879, %s880
      %p891 = scmp.eq.s32.totalorder %s89, 0
      %p892 = por %p890, %p891
      %p893 = scmp.ne.s32.totalorder %s879, %s880
      %p894 = scmp.eq.s32.totalorder %s90, 1
      %p895 = por %p893, %p894
      %p897 = scmp.ne.s32.totalorder %s880, %s896
      %p898 = scmp.eq.s32.totalorder %s90, 0
      %p899 = por %p897, %p898
      %p900 = scmp.le.s32.totalorder 1, %s84
      %p901 = scmp.lt.s32.totalorder %s84, 3
      %p902 = pnand %p900, %p901
      %p903 = pneg %p902
      // Predicated region
      $region9: #{generator_res_ae_forward.1} parent=5 // pred_check
        _
      $region10: #{generator_res_ae_forward.1} parent=5 // pred_check_branch
        %905 = sbr.rel (%p902) target = $region12
      $region11: #{generator_res_ae_forward.1} parent=5 // pred_region
        %s906 = ssub.s32 %s84, 1
        // Predicated region
        $region13: #{generator_res_ae_forward.1} parent=11 // pred_check
          %p907 = pneg %p131
        $region14: #{generator_res_ae_forward.1} parent=11 // pred_check_branch
          %909 = sbr.rel (%p907) target = $region16
        $region15: #{generator_res_ae_forward.1} parent=11 // pred_region
          _
        $region16: #{generator_res_ae_forward.1} parent=11 // pred_fallthru
          _
        // Predicated region
        $region17: #{generator_res_ae_forward.1} parent=11 // pred_check
          %p910 = pneg %p152
        $region18: #{generator_res_ae_forward.1} parent=11 // pred_check_branch
          %912 = sbr.rel (%p910) target = $region20
        $region19: #{generator_res_ae_forward.1} parent=11 // pred_region
          _
        $region20: #{generator_res_ae_forward.1} parent=11 // pred_fallthru
          _
        // Predicated region
        $region21: #{generator_res_ae_forward.1} parent=11 // pred_check
          %p913 = pneg %p173
        $region22: #{generator_res_ae_forward.1} parent=11 // pred_check_branch
          %915 = sbr.rel (%p913) target = $region24
        $region23: #{generator_res_ae_forward.1} parent=11 // pred_region
          _
        $region24: #{generator_res_ae_forward.1} parent=11 // pred_fallthru
          _
        // Predicated region
        $region25: #{generator_res_ae_forward.1} parent=11 // pred_check
          %p916 = pneg %p194
        $region26: #{generator_res_ae_forward.1} parent=11 // pred_check_branch
          %918 = sbr.rel (%p916) target = $region28
        $region27: #{generator_res_ae_forward.1} parent=11 // pred_region
          _
        $region28: #{generator_res_ae_forward.1} parent=11 // pred_fallthru
          _
        // Predicated region
        $region29: #{generator_res_ae_forward.1} parent=11 // pred_check
          %p919 = pneg %p215
        $region30: #{generator_res_ae_forward.1} parent=11 // pred_check_branch
          %921 = sbr.rel (%p919) target = $region32
        $region31: #{generator_res_ae_forward.1} parent=11 // pred_region
          _
        $region32: #{generator_res_ae_forward.1} parent=11 // pred_fallthru
          _
        // Predicated region
        $region33: #{generator_res_ae_forward.1} parent=11 // pred_check
          %p922 = pneg %p236
        $region34: #{generator_res_ae_forward.1} parent=11 // pred_check_branch
          %924 = sbr.rel (%p922) target = $region36
        $region35: #{generator_res_ae_forward.1} parent=11 // pred_region
          _
        $region36: #{generator_res_ae_forward.1} parent=11 // pred_fallthru
          _
        // Predicated region
        $region37: #{generator_res_ae_forward.1} parent=11 // pred_check
          %p925 = pneg %p257
        $region38: #{generator_res_ae_forward.1} parent=11 // pred_check_branch
          %927 = sbr.rel (%p925) target = $region40
        $region39: #{generator_res_ae_forward.1} parent=11 // pred_region
          _
        $region40: #{generator_res_ae_forward.1} parent=11 // pred_fallthru
          _
        // Predicated region
        $region41: #{generator_res_ae_forward.1} parent=11 // pred_check
          %p928 = pneg %p278
        $region42: #{generator_res_ae_forward.1} parent=11 // pred_check_branch
          %930 = sbr.rel (%p928) target = $region44
        $region43: #{generator_res_ae_forward.1} parent=11 // pred_region
          _
        $region44: #{generator_res_ae_forward.1} parent=11 // pred_fallthru
          _
        // Predicated region
        $region45: #{generator_res_ae_forward.1} parent=11 // pred_check
          %p931 = pneg %p299
        $region46: #{generator_res_ae_forward.1} parent=11 // pred_check_branch
          %933 = sbr.rel (%p931) target = $region48
        $region47: #{generator_res_ae_forward.1} parent=11 // pred_region
          _
        $region48: #{generator_res_ae_forward.1} parent=11 // pred_fallthru
          _
        // Predicated region
        $region49: #{generator_res_ae_forward.1} parent=11 // pred_check
          %p934 = pneg %p320
        $region50: #{generator_res_ae_forward.1} parent=11 // pred_check_branch
          %936 = sbr.rel (%p934) target = $region52
        $region51: #{generator_res_ae_forward.1} parent=11 // pred_region
          _
        $region52: #{generator_res_ae_forward.1} parent=11 // pred_fallthru
          _
        // Predicated region
        $region53: #{generator_res_ae_forward.1} parent=11 // pred_check
          %p937 = pneg %p341
        $region54: #{generator_res_ae_forward.1} parent=11 // pred_check_branch
          %939 = sbr.rel (%p937) target = $region56
        $region55: #{generator_res_ae_forward.1} parent=11 // pred_region
          _
        $region56: #{generator_res_ae_forward.1} parent=11 // pred_fallthru
          _
        // Predicated region
        $region57: #{generator_res_ae_forward.1} parent=11 // pred_check
          %p940 = pneg %p362
        $region58: #{generator_res_ae_forward.1} parent=11 // pred_check_branch
          %942 = sbr.rel (%p940) target = $region60
        $region59: #{generator_res_ae_forward.1} parent=11 // pred_region
          _
        $region60: #{generator_res_ae_forward.1} parent=11 // pred_fallthru
          _
        // Predicated region
        $region61: #{generator_res_ae_forward.1} parent=11 // pred_check
          %p943 = pneg %p383
        $region62: #{generator_res_ae_forward.1} parent=11 // pred_check_branch
          %945 = sbr.rel (%p943) target = $region64
        $region63: #{generator_res_ae_forward.1} parent=11 // pred_region
          _
        $region64: #{generator_res_ae_forward.1} parent=11 // pred_fallthru
          _
        // Predicated region
        $region65: #{generator_res_ae_forward.1} parent=11 // pred_check
          %p946 = pneg %p404
        $region66: #{generator_res_ae_forward.1} parent=11 // pred_check_branch
          %948 = sbr.rel (%p946) target = $region68
        $region67: #{generator_res_ae_forward.1} parent=11 // pred_region
          _
        $region68: #{generator_res_ae_forward.1} parent=11 // pred_fallthru
          _
        // Predicated region
        $region69: #{generator_res_ae_forward.1} parent=11 // pred_check
          %p949 = pneg %p425
        $region70: #{generator_res_ae_forward.1} parent=11 // pred_check_branch
          %951 = sbr.rel (%p949) target = $region72
        $region71: #{generator_res_ae_forward.1} parent=11 // pred_region
          _
        $region72: #{generator_res_ae_forward.1} parent=11 // pred_fallthru
          _
        // Predicated region
        $region73: #{generator_res_ae_forward.1} parent=11 // pred_check
          %p952 = pneg %p446
        $region74: #{generator_res_ae_forward.1} parent=11 // pred_check_branch
          %954 = sbr.rel (%p952) target = $region76
        $region75: #{generator_res_ae_forward.1} parent=11 // pred_region
          _
        $region76: #{generator_res_ae_forward.1} parent=11 // pred_fallthru
          _
        // Predicated region
        $region77: #{generator_res_ae_forward.1} parent=11 // pred_check
          %p955 = pneg %p467
        $region78: #{generator_res_ae_forward.1} parent=11 // pred_check_branch
          %957 = sbr.rel (%p955) target = $region80
        $region79: #{generator_res_ae_forward.1} parent=11 // pred_region
          _
        $region80: #{generator_res_ae_forward.1} parent=11 // pred_fallthru
          _
        // Predicated region
        $region81: #{generator_res_ae_forward.1} parent=11 // pred_check
          %p958 = pneg %p488
        $region82: #{generator_res_ae_forward.1} parent=11 // pred_check_branch
          %960 = sbr.rel (%p958) target = $region84
        $region83: #{generator_res_ae_forward.1} parent=11 // pred_region
          _
        $region84: #{generator_res_ae_forward.1} parent=11 // pred_fallthru
          _
        // Predicated region
        $region85: #{generator_res_ae_forward.1} parent=11 // pred_check
          %p961 = pneg %p509
        $region86: #{generator_res_ae_forward.1} parent=11 // pred_check_branch
          %963 = sbr.rel (%p961) target = $region88
        $region87: #{generator_res_ae_forward.1} parent=11 // pred_region
          _
        $region88: #{generator_res_ae_forward.1} parent=11 // pred_fallthru
          _
        // Predicated region
        $region89: #{generator_res_ae_forward.1} parent=11 // pred_check
          %p964 = pneg %p530
        $region90: #{generator_res_ae_forward.1} parent=11 // pred_check_branch
          %966 = sbr.rel (%p964) target = $region92
        $region91: #{generator_res_ae_forward.1} parent=11 // pred_region
          _
        $region92: #{generator_res_ae_forward.1} parent=11 // pred_fallthru
          _
        // Predicated region
        $region93: #{generator_res_ae_forward.1} parent=11 // pred_check
          %p967 = pneg %p551
        $region94: #{generator_res_ae_forward.1} parent=11 // pred_check_branch
          %969 = sbr.rel (%p967) target = $region96
        $region95: #{generator_res_ae_forward.1} parent=11 // pred_region
          _
        $region96: #{generator_res_ae_forward.1} parent=11 // pred_fallthru
          _
        // Predicated region
        $region97: #{generator_res_ae_forward.1} parent=11 // pred_check
          %p970 = pneg %p572
        $region98: #{generator_res_ae_forward.1} parent=11 // pred_check_branch
          %972 = sbr.rel (%p970) target = $region100
        $region99: #{generator_res_ae_forward.1} parent=11 // pred_region
          _
        $region100: #{generator_res_ae_forward.1} parent=11 // pred_fallthru
          _
        // Predicated region
        $region101: #{generator_res_ae_forward.1} parent=11 // pred_check
          %p973 = pneg %p593
        $region102: #{generator_res_ae_forward.1} parent=11 // pred_check_branch
          %975 = sbr.rel (%p973) target = $region104
        $region103: #{generator_res_ae_forward.1} parent=11 // pred_region
          _
        $region104: #{generator_res_ae_forward.1} parent=11 // pred_fallthru
          _
        // Predicated region
        $region105: #{generator_res_ae_forward.1} parent=11 // pred_check
          %p976 = pneg %p614
        $region106: #{generator_res_ae_forward.1} parent=11 // pred_check_branch
          %978 = sbr.rel (%p976) target = $region108
        $region107: #{generator_res_ae_forward.1} parent=11 // pred_region
          _
        $region108: #{generator_res_ae_forward.1} parent=11 // pred_fallthru
          _
        // Predicated region
        $region109: #{generator_res_ae_forward.1} parent=11 // pred_check
          %p979 = pneg %p635
        $region110: #{generator_res_ae_forward.1} parent=11 // pred_check_branch
          %981 = sbr.rel (%p979) target = $region112
        $region111: #{generator_res_ae_forward.1} parent=11 // pred_region
          _
        $region112: #{generator_res_ae_forward.1} parent=11 // pred_fallthru
          _
        // Predicated region
        $region113: #{generator_res_ae_forward.1} parent=11 // pred_check
          %p982 = pneg %p656
        $region114: #{generator_res_ae_forward.1} parent=11 // pred_check_branch
          %984 = sbr.rel (%p982) target = $region116
        $region115: #{generator_res_ae_forward.1} parent=11 // pred_region
          _
        $region116: #{generator_res_ae_forward.1} parent=11 // pred_fallthru
          _
        // Predicated region
        $region117: #{generator_res_ae_forward.1} parent=11 // pred_check
          %p985 = pneg %p677
        $region118: #{generator_res_ae_forward.1} parent=11 // pred_check_branch
          %987 = sbr.rel (%p985) target = $region120
        $region119: #{generator_res_ae_forward.1} parent=11 // pred_region
          _
        $region120: #{generator_res_ae_forward.1} parent=11 // pred_fallthru
          _
        // Predicated region
        $region121: #{generator_res_ae_forward.1} parent=11 // pred_check
          %p988 = pneg %p698
        $region122: #{generator_res_ae_forward.1} parent=11 // pred_check_branch
          %990 = sbr.rel (%p988) target = $region124
        $region123: #{generator_res_ae_forward.1} parent=11 // pred_region
          _
        $region124: #{generator_res_ae_forward.1} parent=11 // pred_fallthru
          _
        // Predicated region
        $region125: #{generator_res_ae_forward.1} parent=11 // pred_check
          %p991 = pneg %p719
        $region126: #{generator_res_ae_forward.1} parent=11 // pred_check_branch
          %993 = sbr.rel (%p991) target = $region128
        $region127: #{generator_res_ae_forward.1} parent=11 // pred_region
          _
        $region128: #{generator_res_ae_forward.1} parent=11 // pred_fallthru
          _
        // Predicated region
        $region129: #{generator_res_ae_forward.1} parent=11 // pred_check
          %p994 = pneg %p740
        $region130: #{generator_res_ae_forward.1} parent=11 // pred_check_branch
          %996 = sbr.rel (%p994) target = $region132
        $region131: #{generator_res_ae_forward.1} parent=11 // pred_region
          _
        $region132: #{generator_res_ae_forward.1} parent=11 // pred_fallthru
          _
        // Predicated region
        $region133: #{generator_res_ae_forward.1} parent=11 // pred_check
          %p997 = pneg %p761
        $region134: #{generator_res_ae_forward.1} parent=11 // pred_check_branch
          %999 = sbr.rel (%p997) target = $region136
        $region135: #{generator_res_ae_forward.1} parent=11 // pred_region
          _
        $region136: #{generator_res_ae_forward.1} parent=11 // pred_fallthru
          _
        // Predicated region
        $region137: #{generator_res_ae_forward.1} parent=11 // pred_check
          %p1000 = pneg %p782
        $region138: #{generator_res_ae_forward.1} parent=11 // pred_check_branch
          %1002 = sbr.rel (%p1000) target = $region140
        $region139: #{generator_res_ae_forward.1} parent=11 // pred_region
          _
        $region140: #{generator_res_ae_forward.1} parent=11 // pred_fallthru
          _
        // Predicated region
        $region141: #{generator_res_ae_forward.1} parent=11 // pred_check
          %p1003 = pneg %p803
        $region142: #{generator_res_ae_forward.1} parent=11 // pred_check_branch
          %1005 = sbr.rel (%p1003) target = $region144
        $region143: #{generator_res_ae_forward.1} parent=11 // pred_region
          _
        $region144: #{generator_res_ae_forward.1} parent=11 // pred_fallthru
          _
        // Predicated region
        $region145: #{generator_res_ae_forward.1} parent=11 // pred_check
          %p1006 = pneg %p824
        $region146: #{generator_res_ae_forward.1} parent=11 // pred_check_branch
          %1008 = sbr.rel (%p1006) target = $region148
        $region147: #{generator_res_ae_forward.1} parent=11 // pred_region
          _
        $region148: #{generator_res_ae_forward.1} parent=11 // pred_fallthru
          _
        // Predicated region
        $region149: #{generator_res_ae_forward.1} parent=11 // pred_check
          %p1009 = pneg %p845
        $region150: #{generator_res_ae_forward.1} parent=11 // pred_check_branch
          %1011 = sbr.rel (%p1009) target = $region152
        $region151: #{generator_res_ae_forward.1} parent=11 // pred_region
          _
        $region152: #{generator_res_ae_forward.1} parent=11 // pred_fallthru
          _
        // Predicated region
        $region153: #{generator_res_ae_forward.1} parent=11 // pred_check
          %p1012 = pneg %p866
        $region154: #{generator_res_ae_forward.1} parent=11 // pred_check_branch
          %1014 = sbr.rel (%p1012) target = $region156
        $region155: #{generator_res_ae_forward.1} parent=11 // pred_region
          _
        $region156: #{generator_res_ae_forward.1} parent=11 // pred_fallthru
          _
      $region12: #{generator_res_ae_forward.1} parent=5 // pred_fallthru
        _
      %p1015 = scmp.lt.s32.totalorder %s84, 2
      // Predicated region
      $region157: #{generator_res_ae_forward.1} parent=5 // pred_check
        %p1016 = pneg %p1015
      $region158: #{generator_res_ae_forward.1} parent=5 // pred_check_branch
        %1018 = sbr.rel (%p1016) target = $region160
      $region159: #{generator_res_ae_forward.1} parent=5 // pred_region
        // Predicated region
        $region161: #{generator_res_ae_forward.1} parent=159 // pred_check
          %p1019 = pneg %p104
        $region162: #{generator_res_ae_forward.1} parent=159 // pred_check_branch
          %1021 = sbr.rel (%p1019) target = $region164
        $region163: #{generator_res_ae_forward.1} parent=159 // pred_region
          %p1022 = scmp.lt.s32.totalorder %s84, 1
          %s1023 = scalar_select %p1022, %s84, 1
          %s1024 = smul.addr %s1023, 8
          %s1025 = scalar_lea.vmem %s1, %s1024
        $region164: #{generator_res_ae_forward.1} parent=159 // pred_fallthru
          _
      $region160: #{generator_res_ae_forward.1} parent=5 // pred_fallthru
        _
      %p1026 = scmp.le.s32.totalorder 1, %s84
      %p1027 = scmp.lt.s32.totalorder %s84, 3
      %p1028 = pnand %p1026, %p1027
      %p1029 = pneg %p1028
      // Predicated region
      $region165: #{generator_res_ae_forward.1} parent=5 // pred_check
        _
      $region166: #{generator_res_ae_forward.1} parent=5 // pred_check_branch
        %1031 = sbr.rel (%p1028) target = $region168
      $region167: #{generator_res_ae_forward.1} parent=5 // pred_region
        %s1032 = ssub.s32 %s84, 1
        %p1033 = scmp.lt.s32.totalorder %s89, 1
        %s1034 = scalar_select %p1033, %s89, 1
        %s1035 = smul.addr %s1034, 8
        %s1036 = scalar_lea.vmem %s1, %s1035
        %p1037 = pneg %p110
        %p1038 = pneg %p107
        %p1039 = pneg %p131
        %p1040 = pneg %p128
        %p1041 = pneg %p152
        %p1042 = pneg %p149
        %p1043 = pneg %p173
        %p1044 = pneg %p170
        %p1045 = pneg %p194
        %p1046 = pneg %p191
        %p1047 = pneg %p215
        %p1048 = pneg %p212
        %p1049 = pneg %p236
        %p1050 = pneg %p233
        %p1051 = pneg %p257
        %p1052 = pneg %p254
        %p1053 = pneg %p278
        %p1054 = pneg %p275
        %p1055 = pneg %p299
        %p1056 = pneg %p296
        %p1057 = pneg %p320
        %p1058 = pneg %p317
        %p1059 = pneg %p341
        %p1060 = pneg %p338
        %p1061 = pneg %p362
        %p1062 = pneg %p359
        %p1063 = pneg %p383
        %p1064 = pneg %p380
        %p1065 = pneg %p404
        %p1066 = pneg %p401
        %p1067 = pneg %p425
        %p1068 = pneg %p422
        %p1069 = pneg %p446
        %p1070 = pneg %p443
        %p1071 = pneg %p467
        %p1072 = pneg %p464
        %p1073 = pneg %p488
        %p1074 = pneg %p485
        %p1075 = pneg %p509
        %p1076 = pneg %p506
        %p1077 = pneg %p530
        %p1078 = pneg %p527
        %p1079 = pneg %p551
        %p1080 = pneg %p548
        %p1081 = pneg %p572
        %p1082 = pneg %p569
        %p1083 = pneg %p593
        %p1084 = pneg %p590
        %p1085 = pneg %p614
        %p1086 = pneg %p611
        %p1087 = pneg %p635
        %p1088 = pneg %p632
        %p1089 = pneg %p656
        %p1090 = pneg %p653
        %p1091 = pneg %p677
        %p1092 = pneg %p674
        %p1093 = pneg %p698
        %p1094 = pneg %p695
        %p1095 = pneg %p719
        %p1096 = pneg %p716
        %p1097 = pneg %p740
        %p1098 = pneg %p737
        %p1099 = pneg %p761
        %p1100 = pneg %p758
        %p1101 = pneg %p782
        %p1102 = pneg %p779
        %p1103 = pneg %p803
        %p1104 = pneg %p800
        %p1105 = pneg %p824
        %p1106 = pneg %p821
        %p1107 = pneg %p845
        %p1108 = pneg %p842
        %p1109 = pneg %p866
        %p1110 = pneg %p863
        %p1111 = pneg %p892
        %p1112 = pneg %p889
        %s1113 = sand.u32 %s879, 1
        %s1114 = scalar_lea.sflag [#allocation3], %s1113
        %s1115 = sand.u32 %s879, 1
        %s1116 = smul.addr %s1115, 8
        %s1117 = scalar_lea.vmem [#allocation2], %s1116
        %p1118 = scmp.lt.s32.totalorder %s89, 1
        %s1119 = scalar_select %p1118, %s89, 1
        %s1120 = smul.addr %s1119, 8
        %s1121 = scalar_lea.vmem %s1, %s1120
        %v1123 = vld [vmem:[%s1121] sm:$0xff]
        %v1124 = vld [vmem:[%s3] sm:$0xff]
        %v1125 = vld [vmem:[%s3 + $0x8] sm:$0xff]
        %v1126 = vld [vmem:[%s3 + $0x10] sm:$0xff]
        %v1127 = vld [vmem:[%s3 + $0x18] sm:$0xff]
        %v1128 = vld [vmem:[%s3 + $0x20] sm:$0xff]
        %v1129 = vld [vmem:[%s3 + $0x28] sm:$0xff]
        %v1130 = vld [vmem:[%s3 + $0x30] sm:$0xff]
        %v1131 = vld [vmem:[%s3 + $0x38] sm:$0xff]
        %v1132 = vld [vmem:[%s3 + $0x40] sm:$0xff]
        %v1133 = vld [vmem:[%s3 + $0x48] sm:$0xff]
        %v1134 = vld [vmem:[%s3 + $0x50] sm:$0xff]
        %v1135 = vld [vmem:[%s3 + $0x58] sm:$0xff]
        %v1136 = vld [vmem:[%s3 + $0x60] sm:$0xff]
        %v1137 = vld [vmem:[%s3 + $0x68] sm:$0xff]
        %v1138 = vld [vmem:[%s3 + $0x70] sm:$0xff]
        %v1139 = vld [vmem:[%s3 + $0x78] sm:$0xff]
        %v1140 = vld [vmem:[%s3 + $0x80] sm:$0xff]
        %v1141 = vld [vmem:[%s3 + $0x88] sm:$0xff]
        %v1142 = vld [vmem:[%s3 + $0x90] sm:$0xff]
        %v1143 = vld [vmem:[%s3 + $0x98] sm:$0xff]
        %v1144 = vld [vmem:[%s3 + $0xa0] sm:$0xff]
        %v1145 = vld [vmem:[%s3 + $0xa8] sm:$0xff]
        %v1146 = vld [vmem:[%s3 + $0xb0] sm:$0xff]
        %v1147 = vld [vmem:[%s3 + $0xb8] sm:$0xff]
        %v1148 = vld [vmem:[%s3 + $0xc0] sm:$0xff]
        %v1149 = vld [vmem:[%s3 + $0xc8] sm:$0xff]
        %v1150 = vld [vmem:[%s3 + $0xd0] sm:$0xff]
        %v1151 = vld [vmem:[%s3 + $0xd8] sm:$0xff]
        %v1152 = vld [vmem:[%s3 + $0xe0] sm:$0xff]
        %v1153 = vld [vmem:[%s3 + $0xe8] sm:$0xff]
        %v1154 = vld [vmem:[%s3 + $0xf0] sm:$0xff]
        %v1155 = vld [vmem:[%s3 + $0xf8] sm:$0xff]
        %v1156 = vld [vmem:[%s3 + $0x100] sm:$0xff]
        %v1157 = vld [vmem:[%s3 + $0x108] sm:$0xff]
        %v1158 = vld [vmem:[%s3 + $0x110] sm:$0xff]
        %v1159 = vld [vmem:[%s3 + $0x118] sm:$0xff]
        %v1160 = vld [vmem:[%s3 + $0x120] sm:$0xff]
        %v1161 = vld [vmem:[%s3 + $0x128] sm:$0xff]
        %v1162 = vld [vmem:[%s3 + $0x130] sm:$0xff]
        %v1163 = vld [vmem:[%s3 + $0x138] sm:$0xff]
        %v1164 = vld [vmem:[%s3 + $0x140] sm:$0xff]
        %v1165 = vld [vmem:[%s3 + $0x148] sm:$0xff]
        %v1166 = vld [vmem:[%s3 + $0x150] sm:$0xff]
        %v1167 = vld [vmem:[%s3 + $0x158] sm:$0xff]
        %v1168 = vld [vmem:[%s3 + $0x160] sm:$0xff]
        %v1169 = vld [vmem:[%s3 + $0x168] sm:$0xff]
        %v1170 = vld [vmem:[%s3 + $0x170] sm:$0xff]
        %v1171 = vld [vmem:[%s3 + $0x178] sm:$0xff]
        %v1172 = vld [vmem:[%s3 + $0x180] sm:$0xff]
        %v1173 = vld [vmem:[%s3 + $0x188] sm:$0xff]
        %v1174 = vld [vmem:[%s3 + $0x190] sm:$0xff]
        %v1175 = vld [vmem:[%s3 + $0x198] sm:$0xff]
        %v1176 = vld [vmem:[%s3 + $0x1a0] sm:$0xff]
        %v1177 = vld [vmem:[%s3 + $0x1a8] sm:$0xff]
        %v1178 = vld [vmem:[%s3 + $0x1b0] sm:$0xff]
        %v1179 = vld [vmem:[%s3 + $0x1b8] sm:$0xff]
        %v1180 = vld [vmem:[%s3 + $0x1c0] sm:$0xff]
        %v1181 = vld [vmem:[%s3 + $0x1c8] sm:$0xff]
        %v1182 = vld [vmem:[%s3 + $0x1d0] sm:$0xff]
        %v1183 = vld [vmem:[%s3 + $0x1d8] sm:$0xff]
        %v1184 = vld [vmem:[%s3 + $0x1e0] sm:$0xff]
        %v1185 = vld [vmem:[%s3 + $0x1e8] sm:$0xff]
        %v1186 = vld [vmem:[%s3 + $0x1f0] sm:$0xff]
        %v1187 = vld [vmem:[%s3 + $0x1f8] sm:$0xff]
        %v1188 = vld [vmem:[%s5] sm:$0xff]
        %v1189 = vpack.c.bf16 %v1123, %v1123
        %v1191 = vlaneseq
        %v1192 = vshrl.u32 %v1191, 7
        %v1193 = vsub.s32 0, %v1192
        %v1194 = vrot.slane %v1188, %v1193
        %v1195 = vlaneseq
        %v1196 = vshrl.u32 %v1195, 7
        %v1197 = vsub.s32 1, %v1196
        %v1198 = vrot.slane %v1188, %v1197
        %v1199 = vlaneseq
        %v1200 = vshrl.u32 %v1199, 7
        %v1201 = vsub.s32 2, %v1200
        %v1202 = vrot.slane %v1188, %v1201
        %v1203 = vlaneseq
        %v1204 = vshrl.u32 %v1203, 7
        %v1205 = vsub.s32 3, %v1204
        %v1206 = vrot.slane %v1188, %v1205
        %v1207 = vlaneseq
        %v1208 = vshrl.u32 %v1207, 7
        %v1209 = vsub.s32 4, %v1208
        %v1210 = vrot.slane %v1188, %v1209
        %v1211 = vlaneseq
        %v1212 = vshrl.u32 %v1211, 7
        %v1213 = vsub.s32 5, %v1212
        %v1214 = vrot.slane %v1188, %v1213
        %v1215 = vlaneseq
        %v1216 = vshrl.u32 %v1215, 7
        %v1217 = vsub.s32 6, %v1216
        %v1218 = vrot.slane %v1188, %v1217
        %v1219 = vlaneseq
        %v1220 = vshrl.u32 %v1219, 7
        %v1221 = vsub.s32 7, %v1220
        %v1222 = vrot.slane %v1188, %v1221
        %v1295 = vunpack.c.l.b16 %v1124
        %v1296 = vunpack.c.h.b16 %v1124
        %v1297 = vunpack.c.l.b16 %v1125
        %v1298 = vunpack.c.h.b16 %v1125
        %v1299 = vunpack.c.l.b16 %v1126
        %v1300 = vunpack.c.h.b16 %v1126
        %v1301 = vunpack.c.l.b16 %v1127
        %v1302 = vunpack.c.h.b16 %v1127
        %v1303 = vunpack.c.l.b16 %v1128
        %v1304 = vunpack.c.h.b16 %v1128
        %v1305 = vunpack.c.l.b16 %v1129
        %v1306 = vunpack.c.h.b16 %v1129
        %v1307 = vunpack.c.l.b16 %v1130
        %v1308 = vunpack.c.h.b16 %v1130
        %v1309 = vunpack.c.l.b16 %v1131
        %v1310 = vunpack.c.h.b16 %v1131
        %v1311 = vunpack.c.l.b16 %v1132
        %v1312 = vunpack.c.h.b16 %v1132
        %v1313 = vunpack.c.l.b16 %v1133
        %v1314 = vunpack.c.h.b16 %v1133
        %v1315 = vunpack.c.l.b16 %v1134
        %v1316 = vunpack.c.h.b16 %v1134
        %v1317 = vunpack.c.l.b16 %v1135
        %v1318 = vunpack.c.h.b16 %v1135
        %v1319 = vunpack.c.l.b16 %v1136
        %v1320 = vunpack.c.h.b16 %v1136
        %v1321 = vunpack.c.l.b16 %v1137
        %v1322 = vunpack.c.h.b16 %v1137
        %v1323 = vunpack.c.l.b16 %v1138
        %v1324 = vunpack.c.h.b16 %v1138
        %v1325 = vunpack.c.l.b16 %v1139
        %v1326 = vunpack.c.h.b16 %v1139
        %v1327 = vunpack.c.l.b16 %v1140
        %v1328 = vunpack.c.h.b16 %v1140
        %v1329 = vunpack.c.l.b16 %v1141
        %v1330 = vunpack.c.h.b16 %v1141
        %v1331 = vunpack.c.l.b16 %v1142
        %v1332 = vunpack.c.h.b16 %v1142
        %v1333 = vunpack.c.l.b16 %v1143
        %v1334 = vunpack.c.h.b16 %v1143
        %v1335 = vunpack.c.l.b16 %v1144
        %v1336 = vunpack.c.h.b16 %v1144
        %v1337 = vunpack.c.l.b16 %v1145
        %v1338 = vunpack.c.h.b16 %v1145
        %v1339 = vunpack.c.l.b16 %v1146
        %v1340 = vunpack.c.h.b16 %v1146
        %v1341 = vunpack.c.l.b16 %v1147
        %v1342 = vunpack.c.h.b16 %v1147
        %v1343 = vunpack.c.l.b16 %v1148
        %v1344 = vunpack.c.h.b16 %v1148
        %v1345 = vunpack.c.l.b16 %v1149
        %v1346 = vunpack.c.h.b16 %v1149
        %v1347 = vunpack.c.l.b16 %v1150
        %v1348 = vunpack.c.h.b16 %v1150
        %v1349 = vunpack.c.l.b16 %v1151
        %v1350 = vunpack.c.h.b16 %v1151
        %v1351 = vunpack.c.l.b16 %v1152
        %v1352 = vunpack.c.h.b16 %v1152
        %v1353 = vunpack.c.l.b16 %v1153
        %v1354 = vunpack.c.h.b16 %v1153
        %v1355 = vunpack.c.l.b16 %v1154
        %v1356 = vunpack.c.h.b16 %v1154
        %v1357 = vunpack.c.l.b16 %v1155
        %v1358 = vunpack.c.h.b16 %v1155
        %v1359 = vunpack.c.l.b16 %v1156
        %v1360 = vunpack.c.h.b16 %v1156
        %v1361 = vunpack.c.l.b16 %v1157
        %v1362 = vunpack.c.h.b16 %v1157
        %v1363 = vunpack.c.l.b16 %v1158
        %v1364 = vunpack.c.h.b16 %v1158
        %v1365 = vunpack.c.l.b16 %v1159
        %v1366 = vunpack.c.h.b16 %v1159
        %v1367 = vunpack.c.l.b16 %v1160
        %v1368 = vunpack.c.h.b16 %v1160
        %v1369 = vunpack.c.l.b16 %v1161
        %v1370 = vunpack.c.h.b16 %v1161
        %v1371 = vunpack.c.l.b16 %v1162
        %v1372 = vunpack.c.h.b16 %v1162
        %v1373 = vunpack.c.l.b16 %v1163
        %v1374 = vunpack.c.h.b16 %v1163
        %v1375 = vunpack.c.l.b16 %v1164
        %v1376 = vunpack.c.h.b16 %v1164
        %v1377 = vunpack.c.l.b16 %v1165
        %v1378 = vunpack.c.h.b16 %v1165
        %v1379 = vunpack.c.l.b16 %v1166
        %v1380 = vunpack.c.h.b16 %v1166
        %v1381 = vunpack.c.l.b16 %v1167
        %v1382 = vunpack.c.h.b16 %v1167
        %v1383 = vunpack.c.l.b16 %v1168
        %v1384 = vunpack.c.h.b16 %v1168
        %v1385 = vunpack.c.l.b16 %v1169
        %v1386 = vunpack.c.h.b16 %v1169
        %v1387 = vunpack.c.l.b16 %v1170
        %v1388 = vunpack.c.h.b16 %v1170
        %v1389 = vunpack.c.l.b16 %v1171
        %v1390 = vunpack.c.h.b16 %v1171
        %v1391 = vunpack.c.l.b16 %v1172
        %v1392 = vunpack.c.h.b16 %v1172
        %v1393 = vunpack.c.l.b16 %v1173
        %v1394 = vunpack.c.h.b16 %v1173
        %v1395 = vunpack.c.l.b16 %v1174
        %v1396 = vunpack.c.h.b16 %v1174
        %v1397 = vunpack.c.l.b16 %v1175
        %v1398 = vunpack.c.h.b16 %v1175
        %v1399 = vunpack.c.l.b16 %v1176
        %v1400 = vunpack.c.h.b16 %v1176
        %v1401 = vunpack.c.l.b16 %v1177
        %v1402 = vunpack.c.h.b16 %v1177
        %v1403 = vunpack.c.l.b16 %v1178
        %v1404 = vunpack.c.h.b16 %v1178
        %v1405 = vunpack.c.l.b16 %v1179
        %v1406 = vunpack.c.h.b16 %v1179
        %v1407 = vunpack.c.l.b16 %v1180
        %v1408 = vunpack.c.h.b16 %v1180
        %v1409 = vunpack.c.l.b16 %v1181
        %v1410 = vunpack.c.h.b16 %v1181
        %v1411 = vunpack.c.l.b16 %v1182
        %v1412 = vunpack.c.h.b16 %v1182
        %v1413 = vunpack.c.l.b16 %v1183
        %v1414 = vunpack.c.h.b16 %v1183
        %v1415 = vunpack.c.l.b16 %v1184
        %v1416 = vunpack.c.h.b16 %v1184
        %v1417 = vunpack.c.l.b16 %v1185
        %v1418 = vunpack.c.h.b16 %v1185
        %v1419 = vunpack.c.l.b16 %v1186
        %v1420 = vunpack.c.h.b16 %v1186
        %v1421 = vunpack.c.l.b16 %v1187
        %v1422 = vunpack.c.h.b16 %v1187
        %v1423 = vpack.c.b16 %v1303, %v1295
        %v1424 = vpack.c.b16 %v1304, %v1296
        %v1425 = vpack.c.b16 %v1305, %v1297
        %v1426 = vpack.c.b16 %v1306, %v1298
        %v1427 = vpack.c.b16 %v1307, %v1299
        %v1428 = vpack.c.b16 %v1308, %v1300
        %v1429 = vpack.c.b16 %v1309, %v1301
        %v1430 = vpack.c.b16 %v1310, %v1302
        %v1431 = vpack.c.b16 %v1319, %v1311
        %v1432 = vpack.c.b16 %v1320, %v1312
        %v1433 = vpack.c.b16 %v1321, %v1313
        %v1434 = vpack.c.b16 %v1322, %v1314
        %v1435 = vpack.c.b16 %v1323, %v1315
        %v1436 = vpack.c.b16 %v1324, %v1316
        %v1437 = vpack.c.b16 %v1325, %v1317
        %v1438 = vpack.c.b16 %v1326, %v1318
        %v1439 = vpack.c.b16 %v1335, %v1327
        %v1440 = vpack.c.b16 %v1336, %v1328
        %v1441 = vpack.c.b16 %v1337, %v1329
        %v1442 = vpack.c.b16 %v1338, %v1330
        %v1443 = vpack.c.b16 %v1339, %v1331
        %v1444 = vpack.c.b16 %v1340, %v1332
        %v1445 = vpack.c.b16 %v1341, %v1333
        %v1446 = vpack.c.b16 %v1342, %v1334
        %v1447 = vpack.c.b16 %v1351, %v1343
        %v1448 = vpack.c.b16 %v1352, %v1344
        %v1449 = vpack.c.b16 %v1353, %v1345
        %v1450 = vpack.c.b16 %v1354, %v1346
        %v1451 = vpack.c.b16 %v1355, %v1347
        %v1452 = vpack.c.b16 %v1356, %v1348
        %v1453 = vpack.c.b16 %v1357, %v1349
        %v1454 = vpack.c.b16 %v1358, %v1350
        %v1455 = vpack.c.b16 %v1367, %v1359
        %v1456 = vpack.c.b16 %v1368, %v1360
        %v1457 = vpack.c.b16 %v1369, %v1361
        %v1458 = vpack.c.b16 %v1370, %v1362
        %v1459 = vpack.c.b16 %v1371, %v1363
        %v1460 = vpack.c.b16 %v1372, %v1364
        %v1461 = vpack.c.b16 %v1373, %v1365
        %v1462 = vpack.c.b16 %v1374, %v1366
        %v1463 = vpack.c.b16 %v1383, %v1375
        %v1464 = vpack.c.b16 %v1384, %v1376
        %v1465 = vpack.c.b16 %v1385, %v1377
        %v1466 = vpack.c.b16 %v1386, %v1378
        %v1467 = vpack.c.b16 %v1387, %v1379
        %v1468 = vpack.c.b16 %v1388, %v1380
        %v1469 = vpack.c.b16 %v1389, %v1381
        %v1470 = vpack.c.b16 %v1390, %v1382
        %v1471 = vpack.c.b16 %v1399, %v1391
        %v1472 = vpack.c.b16 %v1400, %v1392
        %v1473 = vpack.c.b16 %v1401, %v1393
        %v1474 = vpack.c.b16 %v1402, %v1394
        %v1475 = vpack.c.b16 %v1403, %v1395
        %v1476 = vpack.c.b16 %v1404, %v1396
        %v1477 = vpack.c.b16 %v1405, %v1397
        %v1478 = vpack.c.b16 %v1406, %v1398
        %v1479 = vpack.c.b16 %v1415, %v1407
        %v1480 = vpack.c.b16 %v1416, %v1408
        %v1481 = vpack.c.b16 %v1417, %v1409
        %v1482 = vpack.c.b16 %v1418, %v1410
        %v1483 = vpack.c.b16 %v1419, %v1411
        %v1484 = vpack.c.b16 %v1420, %v1412
        %v1485 = vpack.c.b16 %v1421, %v1413
        %v1486 = vpack.c.b16 %v1422, %v1414
        %1551 = vmatprep.subr.bf16.mxu0 %v1424
        %1552 = vmatpush1.bf16.msra.mxu0 %v1423
        %1553 = vmatprep.subr.bf16.mxu0 %v1432
        %1554 = vmatpush1.bf16.msra.mxu0 %v1431
        %1555 = vmatprep.subr.bf16.mxu0 %v1440
        %1556 = vmatpush1.bf16.msra.mxu0 %v1439
        %1557 = vmatprep.subr.bf16.mxu0 %v1448
        %1558 = vmatpush1.bf16.msra.mxu0 %v1447
        %1559 = vmatprep.subr.bf16.mxu0 %v1456
        %1560 = vmatpush1.bf16.msra.mxu0 %v1455
        %1561 = vmatprep.subr.bf16.mxu0 %v1464
        %1562 = vmatpush1.bf16.msra.mxu0 %v1463
        %1563 = vmatprep.subr.bf16.mxu0 %v1472
        %1564 = vmatpush1.bf16.msra.mxu0 %v1471
        %1565 = vmatprep.subr.bf16.mxu0 %v1480
        %1566 = vmatpush1.bf16.msra.mxu0 %v1479
        %1567 = vmatprep.subr.bf16.mxu0 0
        %1568 = vmatpush1.bf16.msra.mxu0 0
        %1569 = vmatprep.subr.bf16.mxu0 0
        %1570 = vmatpush1.bf16.msra.mxu0 0
        %1571 = vmatprep.subr.bf16.mxu0 0
        %1572 = vmatpush1.bf16.msra.mxu0 0
        %1573 = vmatprep.subr.bf16.mxu0 0
        %1574 = vmatpush1.bf16.msra.mxu0 0
        %1575 = vmatprep.subr.bf16.mxu0 0
        %1576 = vmatpush1.bf16.msra.mxu0 0
        %1577 = vmatprep.subr.bf16.mxu0 0
        %1578 = vmatpush1.bf16.msra.mxu0 0
        %1579 = vmatprep.subr.bf16.mxu0 0
        %1580 = vmatpush1.bf16.msra.mxu0 0
        %1581 = vmatprep.subr.bf16.mxu0 0
        %1582 = vmatpush1.bf16.msra.mxu0 0
        %1583 = vmatprep.mubr.bf16.mxu0 0
        %1584 = vmatmul.mubr.bf16.gmra.mrb[0].mxu0 %v1189
        %v1585 = vpop.f32.mrb[0].mxu0
        %v1586 = vadd.f32 %v1194, %v1585
        %v1587 = vpop.f32.mrb[0].mxu0
        %v1588 = vadd.f32 %v1198, %v1587
        %v1589 = vpop.f32.mrb[0].mxu0
        %v1590 = vpop.f32.mrb[0].mxu0
        %1591 = vdwg.mxu0
        %1592 = vmatprep.subr.bf16.mxu0 %v1426
        %1593 = vmatpush1.bf16.msra.mxu0 %v1425
        %1594 = vmatprep.subr.bf16.mxu0 %v1434
        %1595 = vmatpush1.bf16.msra.mxu0 %v1433
        %1596 = vmatprep.subr.bf16.mxu0 %v1442
        %1597 = vmatpush1.bf16.msra.mxu0 %v1441
        %1598 = vmatprep.subr.bf16.mxu0 %v1450
        %1599 = vmatpush1.bf16.msra.mxu0 %v1449
        %1600 = vmatprep.subr.bf16.mxu0 %v1458
        %1601 = vmatpush1.bf16.msra.mxu0 %v1457
        %1602 = vmatprep.subr.bf16.mxu0 %v1466
        %1603 = vmatpush1.bf16.msra.mxu0 %v1465
        %1604 = vmatprep.subr.bf16.mxu0 %v1474
        %1605 = vmatpush1.bf16.msra.mxu0 %v1473
        %1606 = vmatprep.subr.bf16.mxu0 %v1482
        %1607 = vmatpush1.bf16.msra.mxu0 %v1481
        %1608 = vmatprep.subr.bf16.mxu0 0
        %1609 = vmatpush1.bf16.msra.mxu0 0
        %1610 = vmatprep.subr.bf16.mxu0 0
        %1611 = vmatpush1.bf16.msra.mxu0 0
        %1612 = vmatprep.subr.bf16.mxu0 0
        %1613 = vmatpush1.bf16.msra.mxu0 0
        %1614 = vmatprep.subr.bf16.mxu0 0
        %1615 = vmatpush1.bf16.msra.mxu0 0
        %1616 = vmatprep.subr.bf16.mxu0 0
        %1617 = vmatpush1.bf16.msra.mxu0 0
        %1618 = vmatprep.subr.bf16.mxu0 0
        %1619 = vmatpush1.bf16.msra.mxu0 0
        %1620 = vmatprep.subr.bf16.mxu0 0
        %1621 = vmatpush1.bf16.msra.mxu0 0
        %1622 = vmatprep.subr.bf16.mxu0 0
        %1623 = vmatpush1.bf16.msra.mxu0 0
        %1624 = vmatprep.mubr.bf16.mxu0 0
        %1625 = vmatmul.mubr.bf16.gmra.mrb[0].mxu0 %v1189
        %v1626 = vpop.f32.mrb[0].mxu0
        %v1627 = vadd.f32 %v1202, %v1626
        %v1628 = vpop.f32.mrb[0].mxu0
        %v1629 = vadd.f32 %v1206, %v1628
        %v1630 = vpop.f32.mrb[0].mxu0
        %v1631 = vpop.f32.mrb[0].mxu0
        %1632 = vdwg.mxu0
        %1633 = vmatprep.subr.bf16.mxu0 %v1428
        %1634 = vmatpush1.bf16.msra.mxu0 %v1427
        %1635 = vmatprep.subr.bf16.mxu0 %v1436
        %1636 = vmatpush1.bf16.msra.mxu0 %v1435
        %1637 = vmatprep.subr.bf16.mxu0 %v1444
        %1638 = vmatpush1.bf16.msra.mxu0 %v1443
        %1639 = vmatprep.subr.bf16.mxu0 %v1452
        %1640 = vmatpush1.bf16.msra.mxu0 %v1451
        %1641 = vmatprep.subr.bf16.mxu0 %v1460
        %1642 = vmatpush1.bf16.msra.mxu0 %v1459
        %1643 = vmatprep.subr.bf16.mxu0 %v1468
        %1644 = vmatpush1.bf16.msra.mxu0 %v1467
        %1645 = vmatprep.subr.bf16.mxu0 %v1476
        %1646 = vmatpush1.bf16.msra.mxu0 %v1475
        %1647 = vmatprep.subr.bf16.mxu0 %v1484
        %1648 = vmatpush1.bf16.msra.mxu0 %v1483
        %1649 = vmatprep.subr.bf16.mxu0 0
        %1650 = vmatpush1.bf16.msra.mxu0 0
        %1651 = vmatprep.subr.bf16.mxu0 0
        %1652 = vmatpush1.bf16.msra.mxu0 0
        %1653 = vmatprep.subr.bf16.mxu0 0
        %1654 = vmatpush1.bf16.msra.mxu0 0
        %1655 = vmatprep.subr.bf16.mxu0 0
        %1656 = vmatpush1.bf16.msra.mxu0 0
        %1657 = vmatprep.subr.bf16.mxu0 0
        %1658 = vmatpush1.bf16.msra.mxu0 0
        %1659 = vmatprep.subr.bf16.mxu0 0
        %1660 = vmatpush1.bf16.msra.mxu0 0
        %1661 = vmatprep.subr.bf16.mxu0 0
        %1662 = vmatpush1.bf16.msra.mxu0 0
        %1663 = vmatprep.subr.bf16.mxu0 0
        %1664 = vmatpush1.bf16.msra.mxu0 0
        %1665 = vmatprep.mubr.bf16.mxu0 0
        %1666 = vmatmul.mubr.bf16.gmra.mrb[0].mxu0 %v1189
        %v1667 = vpop.f32.mrb[0].mxu0
        %v1668 = vadd.f32 %v1210, %v1667
        %v1669 = vpop.f32.mrb[0].mxu0
        %v1670 = vadd.f32 %v1214, %v1669
        %v1671 = vpop.f32.mrb[0].mxu0
        %v1672 = vpop.f32.mrb[0].mxu0
        %1673 = vdwg.mxu0
        %1674 = vmatprep.subr.bf16.mxu0 %v1430
        %1675 = vmatpush1.bf16.msra.mxu0 %v1429
        %1676 = vmatprep.subr.bf16.mxu0 %v1438
        %1677 = vmatpush1.bf16.msra.mxu0 %v1437
        %1678 = vmatprep.subr.bf16.mxu0 %v1446
        %1679 = vmatpush1.bf16.msra.mxu0 %v1445
        %1680 = vmatprep.subr.bf16.mxu0 %v1454
        %1681 = vmatpush1.bf16.msra.mxu0 %v1453
        %1682 = vmatprep.subr.bf16.mxu0 %v1462
        %1683 = vmatpush1.bf16.msra.mxu0 %v1461
        %1684 = vmatprep.subr.bf16.mxu0 %v1470
        %1685 = vmatpush1.bf16.msra.mxu0 %v1469
        %1686 = vmatprep.subr.bf16.mxu0 %v1478
        %1687 = vmatpush1.bf16.msra.mxu0 %v1477
        %1688 = vmatprep.subr.bf16.mxu0 %v1486
        %1689 = vmatpush1.bf16.msra.mxu0 %v1485
        %1690 = vmatprep.subr.bf16.mxu0 0
        %1691 = vmatpush1.bf16.msra.mxu0 0
        %1692 = vmatprep.subr.bf16.mxu0 0
        %1693 = vmatpush1.bf16.msra.mxu0 0
        %1694 = vmatprep.subr.bf16.mxu0 0
        %1695 = vmatpush1.bf16.msra.mxu0 0
        %1696 = vmatprep.subr.bf16.mxu0 0
        %1697 = vmatpush1.bf16.msra.mxu0 0
        %1698 = vmatprep.subr.bf16.mxu0 0
        %1699 = vmatpush1.bf16.msra.mxu0 0
        %1700 = vmatprep.subr.bf16.mxu0 0
        %1701 = vmatpush1.bf16.msra.mxu0 0
        %1702 = vmatprep.subr.bf16.mxu0 0
        %1703 = vmatpush1.bf16.msra.mxu0 0
        %1704 = vmatprep.subr.bf16.mxu0 0
        %1705 = vmatpush1.bf16.msra.mxu0 0
        %1706 = vmatprep.mubr.bf16.mxu0 0
        %1707 = vmatmul.mubr.bf16.gmra.mrb[0].mxu0 %v1189
        %v1708 = vpop.f32.mrb[0].mxu0
        %v1709 = vadd.f32 %v1218, %v1708
        %v1710 = vpop.f32.mrb[0].mxu0
        %v1711 = vadd.f32 %v1222, %v1710
        %v1712 = vpop.f32.mrb[0].mxu0
        %v1713 = vpop.f32.mrb[0].mxu0
        %1714 = vdwg.mxu0
        %v1715 = vld [vmem:[%s7] sm:$0xff]
        %v1716 = vld [vmem:[%s7 + $0x8] sm:$0xff]
        %v1717 = vld [vmem:[%s7 + $0x10] sm:$0xff]
        %v1718 = vld [vmem:[%s7 + $0x18] sm:$0xff]
        %v1719 = vld [vmem:[%s7 + $0x20] sm:$0xff]
        %v1720 = vld [vmem:[%s7 + $0x28] sm:$0xff]
        %v1721 = vld [vmem:[%s7 + $0x30] sm:$0xff]
        %v1722 = vld [vmem:[%s7 + $0x38] sm:$0xff]
        %v1723 = vld [vmem:[%s7 + $0x40] sm:$0xff]
        %v1724 = vld [vmem:[%s7 + $0x48] sm:$0xff]
        %v1725 = vld [vmem:[%s7 + $0x50] sm:$0xff]
        %v1726 = vld [vmem:[%s7 + $0x58] sm:$0xff]
        %v1727 = vld [vmem:[%s7 + $0x60] sm:$0xff]
        %v1728 = vld [vmem:[%s7 + $0x68] sm:$0xff]
        %v1729 = vld [vmem:[%s7 + $0x70] sm:$0xff]
        %v1730 = vld [vmem:[%s7 + $0x78] sm:$0xff]
        %v1731 = vld [vmem:[%s7 + $0x80] sm:$0xff]
        %v1732 = vld [vmem:[%s7 + $0x88] sm:$0xff]
        %v1733 = vld [vmem:[%s7 + $0x90] sm:$0xff]
        %v1734 = vld [vmem:[%s7 + $0x98] sm:$0xff]
        %v1735 = vld [vmem:[%s7 + $0xa0] sm:$0xff]
        %v1736 = vld [vmem:[%s7 + $0xa8] sm:$0xff]
        %v1737 = vld [vmem:[%s7 + $0xb0] sm:$0xff]
        %v1738 = vld [vmem:[%s7 + $0xb8] sm:$0xff]
        %v1739 = vld [vmem:[%s7 + $0xc0] sm:$0xff]
        %v1740 = vld [vmem:[%s7 + $0xc8] sm:$0xff]
        %v1741 = vld [vmem:[%s7 + $0xd0] sm:$0xff]
        %v1742 = vld [vmem:[%s7 + $0xd8] sm:$0xff]
        %v1743 = vld [vmem:[%s7 + $0xe0] sm:$0xff]
        %v1744 = vld [vmem:[%s7 + $0xe8] sm:$0xff]
        %v1745 = vld [vmem:[%s7 + $0xf0] sm:$0xff]
        %v1746 = vld [vmem:[%s7 + $0xf8] sm:$0xff]
        %v1747 = vld [vmem:[%s7 + $0x100] sm:$0xff]
        %v1748 = vld [vmem:[%s7 + $0x108] sm:$0xff]
        %v1749 = vld [vmem:[%s7 + $0x110] sm:$0xff]
        %v1750 = vld [vmem:[%s7 + $0x118] sm:$0xff]
        %v1751 = vld [vmem:[%s7 + $0x120] sm:$0xff]
        %v1752 = vld [vmem:[%s7 + $0x128] sm:$0xff]
        %v1753 = vld [vmem:[%s7 + $0x130] sm:$0xff]
        %v1754 = vld [vmem:[%s7 + $0x138] sm:$0xff]
        %v1755 = vld [vmem:[%s7 + $0x140] sm:$0xff]
        %v1756 = vld [vmem:[%s7 + $0x148] sm:$0xff]
        %v1757 = vld [vmem:[%s7 + $0x150] sm:$0xff]
        %v1758 = vld [vmem:[%s7 + $0x158] sm:$0xff]
        %v1759 = vld [vmem:[%s7 + $0x160] sm:$0xff]
        %v1760 = vld [vmem:[%s7 + $0x168] sm:$0xff]
        %v1761 = vld [vmem:[%s7 + $0x170] sm:$0xff]
        %v1762 = vld [vmem:[%s7 + $0x178] sm:$0xff]
        %v1763 = vld [vmem:[%s7 + $0x180] sm:$0xff]
        %v1764 = vld [vmem:[%s7 + $0x188] sm:$0xff]
        %v1765 = vld [vmem:[%s7 + $0x190] sm:$0xff]
        %v1766 = vld [vmem:[%s7 + $0x198] sm:$0xff]
        %v1767 = vld [vmem:[%s7 + $0x1a0] sm:$0xff]
        %v1768 = vld [vmem:[%s7 + $0x1a8] sm:$0xff]
        %v1769 = vld [vmem:[%s7 + $0x1b0] sm:$0xff]
        %v1770 = vld [vmem:[%s7 + $0x1b8] sm:$0xff]
        %v1771 = vld [vmem:[%s7 + $0x1c0] sm:$0xff]
        %v1772 = vld [vmem:[%s7 + $0x1c8] sm:$0xff]
        %v1773 = vld [vmem:[%s7 + $0x1d0] sm:$0xff]
        %v1774 = vld [vmem:[%s7 + $0x1d8] sm:$0xff]
        %v1775 = vld [vmem:[%s7 + $0x1e0] sm:$0xff]
        %v1776 = vld [vmem:[%s7 + $0x1e8] sm:$0xff]
        %v1777 = vld [vmem:[%s7 + $0x1f0] sm:$0xff]
        %v1778 = vld [vmem:[%s7 + $0x1f8] sm:$0xff]
        %v1779 = vld [vmem:[%s7 + $0x200] sm:$0xff]
        %v1780 = vld [vmem:[%s7 + $0x208] sm:$0xff]
        %v1781 = vld [vmem:[%s7 + $0x210] sm:$0xff]
        %v1782 = vld [vmem:[%s7 + $0x218] sm:$0xff]
        %v1783 = vld [vmem:[%s7 + $0x220] sm:$0xff]
        %v1784 = vld [vmem:[%s7 + $0x228] sm:$0xff]
        %v1785 = vld [vmem:[%s7 + $0x230] sm:$0xff]
        %v1786 = vld [vmem:[%s7 + $0x238] sm:$0xff]
        %v1787 = vld [vmem:[%s7 + $0x240] sm:$0xff]
        %v1788 = vld [vmem:[%s7 + $0x248] sm:$0xff]
        %v1789 = vld [vmem:[%s7 + $0x250] sm:$0xff]
        %v1790 = vld [vmem:[%s7 + $0x258] sm:$0xff]
        %v1791 = vld [vmem:[%s7 + $0x260] sm:$0xff]
        %v1792 = vld [vmem:[%s7 + $0x268] sm:$0xff]
        %v1793 = vld [vmem:[%s7 + $0x270] sm:$0xff]
        %v1794 = vld [vmem:[%s7 + $0x278] sm:$0xff]
        %v1795 = vld [vmem:[%s7 + $0x280] sm:$0xff]
        %v1796 = vld [vmem:[%s7 + $0x288] sm:$0xff]
        %v1797 = vld [vmem:[%s7 + $0x290] sm:$0xff]
        %v1798 = vld [vmem:[%s7 + $0x298] sm:$0xff]
        %v1799 = vld [vmem:[%s7 + $0x2a0] sm:$0xff]
        %v1800 = vld [vmem:[%s7 + $0x2a8] sm:$0xff]
        %v1801 = vld [vmem:[%s7 + $0x2b0] sm:$0xff]
        %v1802 = vld [vmem:[%s7 + $0x2b8] sm:$0xff]
        %v1803 = vld [vmem:[%s7 + $0x2c0] sm:$0xff]
        %v1804 = vld [vmem:[%s7 + $0x2c8] sm:$0xff]
        %v1805 = vld [vmem:[%s7 + $0x2d0] sm:$0xff]
        %v1806 = vld [vmem:[%s7 + $0x2d8] sm:$0xff]
        %v1807 = vld [vmem:[%s7 + $0x2e0] sm:$0xff]
        %v1808 = vld [vmem:[%s7 + $0x2e8] sm:$0xff]
        %v1809 = vld [vmem:[%s7 + $0x2f0] sm:$0xff]
        %v1810 = vld [vmem:[%s7 + $0x2f8] sm:$0xff]
        %v1811 = vld [vmem:[%s7 + $0x300] sm:$0xff]
        %v1812 = vld [vmem:[%s7 + $0x308] sm:$0xff]
        %v1813 = vld [vmem:[%s7 + $0x310] sm:$0xff]
        %v1814 = vld [vmem:[%s7 + $0x318] sm:$0xff]
        %v1815 = vld [vmem:[%s7 + $0x320] sm:$0xff]
        %v1816 = vld [vmem:[%s7 + $0x328] sm:$0xff]
        %v1817 = vld [vmem:[%s7 + $0x330] sm:$0xff]
        %v1818 = vld [vmem:[%s7 + $0x338] sm:$0xff]
        %v1819 = vld [vmem:[%s7 + $0x340] sm:$0xff]
        %v1820 = vld [vmem:[%s7 + $0x348] sm:$0xff]
        %v1821 = vld [vmem:[%s7 + $0x350] sm:$0xff]
        %v1822 = vld [vmem:[%s7 + $0x358] sm:$0xff]
        %v1823 = vld [vmem:[%s7 + $0x360] sm:$0xff]
        %v1824 = vld [vmem:[%s7 + $0x368] sm:$0xff]
        %v1825 = vld [vmem:[%s7 + $0x370] sm:$0xff]
        %v1826 = vld [vmem:[%s7 + $0x378] sm:$0xff]
        %v1827 = vld [vmem:[%s7 + $0x380] sm:$0xff]
        %v1828 = vld [vmem:[%s7 + $0x388] sm:$0xff]
        %v1829 = vld [vmem:[%s7 + $0x390] sm:$0xff]
        %v1830 = vld [vmem:[%s7 + $0x398] sm:$0xff]
        %v1831 = vld [vmem:[%s7 + $0x3a0] sm:$0xff]
        %v1832 = vld [vmem:[%s7 + $0x3a8] sm:$0xff]
        %v1833 = vld [vmem:[%s7 + $0x3b0] sm:$0xff]
        %v1834 = vld [vmem:[%s7 + $0x3b8] sm:$0xff]
        %v1835 = vld [vmem:[%s7 + $0x3c0] sm:$0xff]
        %v1836 = vld [vmem:[%s7 + $0x3c8] sm:$0xff]
        %v1837 = vld [vmem:[%s7 + $0x3d0] sm:$0xff]
        %v1838 = vld [vmem:[%s7 + $0x3d8] sm:$0xff]
        %v1839 = vld [vmem:[%s7 + $0x3e0] sm:$0xff]
        %v1840 = vld [vmem:[%s7 + $0x3e8] sm:$0xff]
        %v1841 = vld [vmem:[%s7 + $0x3f0] sm:$0xff]
        %v1842 = vld [vmem:[%s7 + $0x3f8] sm:$0xff]
        %v1843 = vld [vmem:[%s9] sm:$0x3]
        %v1844 = vld [vmem:[%s11] sm:$0x3]
        %v1845 = vld [vmem:[%s13] sm:$0x3]
        %vm1846 = vcmp.ge.f32.partialorder %v1586, 0.0
        %vm1847 = vcmp.ge.f32.partialorder %v1588, 0.0
        %vm1848 = vcmp.ge.f32.partialorder %v1627, 0.0
        %vm1849 = vcmp.ge.f32.partialorder %v1629, 0.0
        %vm1850 = vcmp.ge.f32.partialorder %v1668, 0.0
        %vm1851 = vcmp.ge.f32.partialorder %v1670, 0.0
        %vm1852 = vcmp.ge.f32.partialorder %v1709, 0.0
        %vm1853 = vcmp.ge.f32.partialorder %v1711, 0.0
        %v1854 = vmul.f32 %v1586, 0.2
        %v1855 = vmul.f32 %v1588, 0.2
        %v1856 = vmul.f32 %v1627, 0.2
        %v1857 = vmul.f32 %v1629, 0.2
        %v1858 = vmul.f32 %v1668, 0.2
        %v1859 = vmul.f32 %v1670, 0.2
        %v1860 = vmul.f32 %v1709, 0.2
        %v1861 = vmul.f32 %v1711, 0.2
        %v1862 = vsel %vm1846, %v1586, %v1854
        %v1863 = vsel %vm1847, %v1588, %v1855
        %v1864 = vsel %vm1848, %v1627, %v1856
        %v1865 = vsel %vm1849, %v1629, %v1857
        %v1866 = vsel %vm1850, %v1668, %v1858
        %v1867 = vsel %vm1851, %v1670, %v1859
        %v1868 = vsel %vm1852, %v1709, %v1860
        %v1869 = vsel %vm1853, %v1711, %v1861
        %v1870 = vpack.c.bf16 %v1862, %v1862
        %v1871 = vpack.c.bf16 %v1863, %v1863
        %v1872 = vpack.c.bf16 %v1864, %v1864
        %v1873 = vpack.c.bf16 %v1865, %v1865
        %v1874 = vpack.c.bf16 %v1866, %v1866
        %v1875 = vpack.c.bf16 %v1867, %v1867
        %v1876 = vpack.c.bf16 %v1868, %v1868
        %v1877 = vpack.c.bf16 %v1869, %v1869
        %v1879 = vlaneseq
        %v1880 = vshrl.u32 %v1879, 7
        %v1881 = vsub.s32 0, %v1880
        %v1882 = vrot.slane %v1843, %v1881
        %v1883 = vlaneseq
        %v1884 = vshrl.u32 %v1883, 7
        %v1885 = vsub.s32 1, %v1884
        %v1886 = vrot.slane %v1843, %v1885
        %v2017 = vunpack.c.l.b16 %v1715
        %v2018 = vunpack.c.h.b16 %v1715
        %v2019 = vunpack.c.l.b16 %v1716
        %v2020 = vunpack.c.h.b16 %v1716
        %v2021 = vunpack.c.l.b16 %v1717
        %v2022 = vunpack.c.h.b16 %v1717
        %v2023 = vunpack.c.l.b16 %v1718
        %v2024 = vunpack.c.h.b16 %v1718
        %v2025 = vunpack.c.l.b16 %v1719
        %v2026 = vunpack.c.h.b16 %v1719
        %v2027 = vunpack.c.l.b16 %v1720
        %v2028 = vunpack.c.h.b16 %v1720
        %v2029 = vunpack.c.l.b16 %v1721
        %v2030 = vunpack.c.h.b16 %v1721
        %v2031 = vunpack.c.l.b16 %v1722
        %v2032 = vunpack.c.h.b16 %v1722
        %v2033 = vunpack.c.l.b16 %v1723
        %v2034 = vunpack.c.h.b16 %v1723
        %v2035 = vunpack.c.l.b16 %v1724
        %v2036 = vunpack.c.h.b16 %v1724
        %v2037 = vunpack.c.l.b16 %v1725
        %v2038 = vunpack.c.h.b16 %v1725
        %v2039 = vunpack.c.l.b16 %v1726
        %v2040 = vunpack.c.h.b16 %v1726
        %v2041 = vunpack.c.l.b16 %v1727
        %v2042 = vunpack.c.h.b16 %v1727
        %v2043 = vunpack.c.l.b16 %v1728
        %v2044 = vunpack.c.h.b16 %v1728
        %v2045 = vunpack.c.l.b16 %v1729
        %v2046 = vunpack.c.h.b16 %v1729
        %v2047 = vunpack.c.l.b16 %v1730
        %v2048 = vunpack.c.h.b16 %v1730
        %v2049 = vunpack.c.l.b16 %v1731
        %v2050 = vunpack.c.h.b16 %v1731
        %v2051 = vunpack.c.l.b16 %v1732
        %v2052 = vunpack.c.h.b16 %v1732
        %v2053 = vunpack.c.l.b16 %v1733
        %v2054 = vunpack.c.h.b16 %v1733
        %v2055 = vunpack.c.l.b16 %v1734
        %v2056 = vunpack.c.h.b16 %v1734
        %v2057 = vunpack.c.l.b16 %v1735
        %v2058 = vunpack.c.h.b16 %v1735
        %v2059 = vunpack.c.l.b16 %v1736
        %v2060 = vunpack.c.h.b16 %v1736
        %v2061 = vunpack.c.l.b16 %v1737
        %v2062 = vunpack.c.h.b16 %v1737
        %v2063 = vunpack.c.l.b16 %v1738
        %v2064 = vunpack.c.h.b16 %v1738
        %v2065 = vunpack.c.l.b16 %v1739
        %v2066 = vunpack.c.h.b16 %v1739
        %v2067 = vunpack.c.l.b16 %v1740
        %v2068 = vunpack.c.h.b16 %v1740
        %v2069 = vunpack.c.l.b16 %v1741
        %v2070 = vunpack.c.h.b16 %v1741
        %v2071 = vunpack.c.l.b16 %v1742
        %v2072 = vunpack.c.h.b16 %v1742
        %v2073 = vunpack.c.l.b16 %v1743
        %v2074 = vunpack.c.h.b16 %v1743
        %v2075 = vunpack.c.l.b16 %v1744
        %v2076 = vunpack.c.h.b16 %v1744
        %v2077 = vunpack.c.l.b16 %v1745
        %v2078 = vunpack.c.h.b16 %v1745
        %v2079 = vunpack.c.l.b16 %v1746
        %v2080 = vunpack.c.h.b16 %v1746
        %v2081 = vunpack.c.l.b16 %v1747
        %v2082 = vunpack.c.h.b16 %v1747
        %v2083 = vunpack.c.l.b16 %v1748
        %v2084 = vunpack.c.h.b16 %v1748
        %v2085 = vunpack.c.l.b16 %v1749
        %v2086 = vunpack.c.h.b16 %v1749
        %v2087 = vunpack.c.l.b16 %v1750
        %v2088 = vunpack.c.h.b16 %v1750
        %v2089 = vunpack.c.l.b16 %v1751
        %v2090 = vunpack.c.h.b16 %v1751
        %v2091 = vunpack.c.l.b16 %v1752
        %v2092 = vunpack.c.h.b16 %v1752
        %v2093 = vunpack.c.l.b16 %v1753
        %v2094 = vunpack.c.h.b16 %v1753
        %v2095 = vunpack.c.l.b16 %v1754
        %v2096 = vunpack.c.h.b16 %v1754
        %v2097 = vunpack.c.l.b16 %v1755
        %v2098 = vunpack.c.h.b16 %v1755
        %v2099 = vunpack.c.l.b16 %v1756
        %v2100 = vunpack.c.h.b16 %v1756
        %v2101 = vunpack.c.l.b16 %v1757
        %v2102 = vunpack.c.h.b16 %v1757
        %v2103 = vunpack.c.l.b16 %v1758
        %v2104 = vunpack.c.h.b16 %v1758
        %v2105 = vunpack.c.l.b16 %v1759
        %v2106 = vunpack.c.h.b16 %v1759
        %v2107 = vunpack.c.l.b16 %v1760
        %v2108 = vunpack.c.h.b16 %v1760
        %v2109 = vunpack.c.l.b16 %v1761
        %v2110 = vunpack.c.h.b16 %v1761
        %v2111 = vunpack.c.l.b16 %v1762
        %v2112 = vunpack.c.h.b16 %v1762
        %v2113 = vunpack.c.l.b16 %v1763
        %v2114 = vunpack.c.h.b16 %v1763
        %v2115 = vunpack.c.l.b16 %v1764
        %v2116 = vunpack.c.h.b16 %v1764
        %v2117 = vunpack.c.l.b16 %v1765
        %v2118 = vunpack.c.h.b16 %v1765
        %v2119 = vunpack.c.l.b16 %v1766
        %v2120 = vunpack.c.h.b16 %v1766
        %v2121 = vunpack.c.l.b16 %v1767
        %v2122 = vunpack.c.h.b16 %v1767
        %v2123 = vunpack.c.l.b16 %v1768
        %v2124 = vunpack.c.h.b16 %v1768
        %v2125 = vunpack.c.l.b16 %v1769
        %v2126 = vunpack.c.h.b16 %v1769
        %v2127 = vunpack.c.l.b16 %v1770
        %v2128 = vunpack.c.h.b16 %v1770
        %v2129 = vunpack.c.l.b16 %v1771
        %v2130 = vunpack.c.h.b16 %v1771
        %v2131 = vunpack.c.l.b16 %v1772
        %v2132 = vunpack.c.h.b16 %v1772
        %v2133 = vunpack.c.l.b16 %v1773
        %v2134 = vunpack.c.h.b16 %v1773
        %v2135 = vunpack.c.l.b16 %v1774
        %v2136 = vunpack.c.h.b16 %v1774
        %v2137 = vunpack.c.l.b16 %v1775
        %v2138 = vunpack.c.h.b16 %v1775
        %v2139 = vunpack.c.l.b16 %v1776
        %v2140 = vunpack.c.h.b16 %v1776
        %v2141 = vunpack.c.l.b16 %v1777
        %v2142 = vunpack.c.h.b16 %v1777
        %v2143 = vunpack.c.l.b16 %v1778
        %v2144 = vunpack.c.h.b16 %v1778
        %v2145 = vunpack.c.l.b16 %v1779
        %v2146 = vunpack.c.h.b16 %v1779
        %v2147 = vunpack.c.l.b16 %v1780
        %v2148 = vunpack.c.h.b16 %v1780
        %v2149 = vunpack.c.l.b16 %v1781
        %v2150 = vunpack.c.h.b16 %v1781
        %v2151 = vunpack.c.l.b16 %v1782
        %v2152 = vunpack.c.h.b16 %v1782
        %v2153 = vunpack.c.l.b16 %v1783
        %v2154 = vunpack.c.h.b16 %v1783
        %v2155 = vunpack.c.l.b16 %v1784
        %v2156 = vunpack.c.h.b16 %v1784
        %v2157 = vunpack.c.l.b16 %v1785
        %v2158 = vunpack.c.h.b16 %v1785
        %v2159 = vunpack.c.l.b16 %v1786
        %v2160 = vunpack.c.h.b16 %v1786
        %v2161 = vunpack.c.l.b16 %v1787
        %v2162 = vunpack.c.h.b16 %v1787
        %v2163 = vunpack.c.l.b16 %v1788
        %v2164 = vunpack.c.h.b16 %v1788
        %v2165 = vunpack.c.l.b16 %v1789
        %v2166 = vunpack.c.h.b16 %v1789
        %v2167 = vunpack.c.l.b16 %v1790
        %v2168 = vunpack.c.h.b16 %v1790
        %v2169 = vunpack.c.l.b16 %v1791
        %v2170 = vunpack.c.h.b16 %v1791
        %v2171 = vunpack.c.l.b16 %v1792
        %v2172 = vunpack.c.h.b16 %v1792
        %v2173 = vunpack.c.l.b16 %v1793
        %v2174 = vunpack.c.h.b16 %v1793
        %v2175 = vunpack.c.l.b16 %v1794
        %v2176 = vunpack.c.h.b16 %v1794
        %v2177 = vunpack.c.l.b16 %v1795
        %v2178 = vunpack.c.h.b16 %v1795
        %v2179 = vunpack.c.l.b16 %v1796
        %v2180 = vunpack.c.h.b16 %v1796
        %v2181 = vunpack.c.l.b16 %v1797
        %v2182 = vunpack.c.h.b16 %v1797
        %v2183 = vunpack.c.l.b16 %v1798
        %v2184 = vunpack.c.h.b16 %v1798
        %v2185 = vunpack.c.l.b16 %v1799
        %v2186 = vunpack.c.h.b16 %v1799
        %v2187 = vunpack.c.l.b16 %v1800
        %v2188 = vunpack.c.h.b16 %v1800
        %v2189 = vunpack.c.l.b16 %v1801
        %v2190 = vunpack.c.h.b16 %v1801
        %v2191 = vunpack.c.l.b16 %v1802
        %v2192 = vunpack.c.h.b16 %v1802
        %v2193 = vunpack.c.l.b16 %v1803
        %v2194 = vunpack.c.h.b16 %v1803
        %v2195 = vunpack.c.l.b16 %v1804
        %v2196 = vunpack.c.h.b16 %v1804
        %v2197 = vunpack.c.l.b16 %v1805
        %v2198 = vunpack.c.h.b16 %v1805
        %v2199 = vunpack.c.l.b16 %v1806
        %v2200 = vunpack.c.h.b16 %v1806
        %v2201 = vunpack.c.l.b16 %v1807
        %v2202 = vunpack.c.h.b16 %v1807
        %v2203 = vunpack.c.l.b16 %v1808
        %v2204 = vunpack.c.h.b16 %v1808
        %v2205 = vunpack.c.l.b16 %v1809
        %v2206 = vunpack.c.h.b16 %v1809
        %v2207 = vunpack.c.l.b16 %v1810
        %v2208 = vunpack.c.h.b16 %v1810
        %v2209 = vunpack.c.l.b16 %v1811
        %v2210 = vunpack.c.h.b16 %v1811
        %v2211 = vunpack.c.l.b16 %v1812
        %v2212 = vunpack.c.h.b16 %v1812
        %v2213 = vunpack.c.l.b16 %v1813
        %v2214 = vunpack.c.h.b16 %v1813
        %v2215 = vunpack.c.l.b16 %v1814
        %v2216 = vunpack.c.h.b16 %v1814
        %v2217 = vunpack.c.l.b16 %v1815
        %v2218 = vunpack.c.h.b16 %v1815
        %v2219 = vunpack.c.l.b16 %v1816
        %v2220 = vunpack.c.h.b16 %v1816
        %v2221 = vunpack.c.l.b16 %v1817
        %v2222 = vunpack.c.h.b16 %v1817
        %v2223 = vunpack.c.l.b16 %v1818
        %v2224 = vunpack.c.h.b16 %v1818
        %v2225 = vunpack.c.l.b16 %v1819
        %v2226 = vunpack.c.h.b16 %v1819
        %v2227 = vunpack.c.l.b16 %v1820
        %v2228 = vunpack.c.h.b16 %v1820
        %v2229 = vunpack.c.l.b16 %v1821
        %v2230 = vunpack.c.h.b16 %v1821
        %v2231 = vunpack.c.l.b16 %v1822
        %v2232 = vunpack.c.h.b16 %v1822
        %v2233 = vunpack.c.l.b16 %v1823
        %v2234 = vunpack.c.h.b16 %v1823
        %v2235 = vunpack.c.l.b16 %v1824
        %v2236 = vunpack.c.h.b16 %v1824
        %v2237 = vunpack.c.l.b16 %v1825
        %v2238 = vunpack.c.h.b16 %v1825
        %v2239 = vunpack.c.l.b16 %v1826
        %v2240 = vunpack.c.h.b16 %v1826
        %v2241 = vunpack.c.l.b16 %v1827
        %v2242 = vunpack.c.h.b16 %v1827
        %v2243 = vunpack.c.l.b16 %v1828
        %v2244 = vunpack.c.h.b16 %v1828
        %v2245 = vunpack.c.l.b16 %v1829
        %v2246 = vunpack.c.h.b16 %v1829
        %v2247 = vunpack.c.l.b16 %v1830
        %v2248 = vunpack.c.h.b16 %v1830
        %v2249 = vunpack.c.l.b16 %v1831
        %v2250 = vunpack.c.h.b16 %v1831
        %v2251 = vunpack.c.l.b16 %v1832
        %v2252 = vunpack.c.h.b16 %v1832
        %v2253 = vunpack.c.l.b16 %v1833
        %v2254 = vunpack.c.h.b16 %v1833
        %v2255 = vunpack.c.l.b16 %v1834
        %v2256 = vunpack.c.h.b16 %v1834
        %v2257 = vunpack.c.l.b16 %v1835
        %v2258 = vunpack.c.h.b16 %v1835
        %v2259 = vunpack.c.l.b16 %v1836
        %v2260 = vunpack.c.h.b16 %v1836
        %v2261 = vunpack.c.l.b16 %v1837
        %v2262 = vunpack.c.h.b16 %v1837
        %v2263 = vunpack.c.l.b16 %v1838
        %v2264 = vunpack.c.h.b16 %v1838
        %v2265 = vunpack.c.l.b16 %v1839
        %v2266 = vunpack.c.h.b16 %v1839
        %v2267 = vunpack.c.l.b16 %v1840
        %v2268 = vunpack.c.h.b16 %v1840
        %v2269 = vunpack.c.l.b16 %v1841
        %v2270 = vunpack.c.h.b16 %v1841
        %v2271 = vunpack.c.l.b16 %v1842
        %v2272 = vunpack.c.h.b16 %v1842
        %v2273 = vpack.c.b16 %v2019, %v2017
        %v2274 = vpack.c.b16 %v2020, %v2018
        %v2275 = vpack.c.b16 %v2023, %v2021
        %v2276 = vpack.c.b16 %v2024, %v2022
        %v2277 = vpack.c.b16 %v2027, %v2025
        %v2278 = vpack.c.b16 %v2028, %v2026
        %v2279 = vpack.c.b16 %v2031, %v2029
        %v2280 = vpack.c.b16 %v2032, %v2030
        %v2281 = vpack.c.b16 %v2035, %v2033
        %v2282 = vpack.c.b16 %v2036, %v2034
        %v2283 = vpack.c.b16 %v2039, %v2037
        %v2284 = vpack.c.b16 %v2040, %v2038
        %v2285 = vpack.c.b16 %v2043, %v2041
        %v2286 = vpack.c.b16 %v2044, %v2042
        %v2287 = vpack.c.b16 %v2047, %v2045
        %v2288 = vpack.c.b16 %v2048, %v2046
        %v2289 = vpack.c.b16 %v2051, %v2049
        %v2290 = vpack.c.b16 %v2052, %v2050
        %v2291 = vpack.c.b16 %v2055, %v2053
        %v2292 = vpack.c.b16 %v2056, %v2054
        %v2293 = vpack.c.b16 %v2059, %v2057
        %v2294 = vpack.c.b16 %v2060, %v2058
        %v2295 = vpack.c.b16 %v2063, %v2061
        %v2296 = vpack.c.b16 %v2064, %v2062
        %v2297 = vpack.c.b16 %v2067, %v2065
        %v2298 = vpack.c.b16 %v2068, %v2066
        %v2299 = vpack.c.b16 %v2071, %v2069
        %v2300 = vpack.c.b16 %v2072, %v2070
        %v2301 = vpack.c.b16 %v2075, %v2073
        %v2302 = vpack.c.b16 %v2076, %v2074
        %v2303 = vpack.c.b16 %v2079, %v2077
        %v2304 = vpack.c.b16 %v2080, %v2078
        %v2305 = vpack.c.b16 %v2083, %v2081
        %v2306 = vpack.c.b16 %v2084, %v2082
        %v2307 = vpack.c.b16 %v2087, %v2085
        %v2308 = vpack.c.b16 %v2088, %v2086
        %v2309 = vpack.c.b16 %v2091, %v2089
        %v2310 = vpack.c.b16 %v2092, %v2090
        %v2311 = vpack.c.b16 %v2095, %v2093
        %v2312 = vpack.c.b16 %v2096, %v2094
        %v2313 = vpack.c.b16 %v2099, %v2097
        %v2314 = vpack.c.b16 %v2100, %v2098
        %v2315 = vpack.c.b16 %v2103, %v2101
        %v2316 = vpack.c.b16 %v2104, %v2102
        %v2317 = vpack.c.b16 %v2107, %v2105
        %v2318 = vpack.c.b16 %v2108, %v2106
        %v2319 = vpack.c.b16 %v2111, %v2109
        %v2320 = vpack.c.b16 %v2112, %v2110
        %v2321 = vpack.c.b16 %v2115, %v2113
        %v2322 = vpack.c.b16 %v2116, %v2114
        %v2323 = vpack.c.b16 %v2119, %v2117
        %v2324 = vpack.c.b16 %v2120, %v2118
        %v2325 = vpack.c.b16 %v2123, %v2121
        %v2326 = vpack.c.b16 %v2124, %v2122
        %v2327 = vpack.c.b16 %v2127, %v2125
        %v2328 = vpack.c.b16 %v2128, %v2126
        %v2329 = vpack.c.b16 %v2131, %v2129
        %v2330 = vpack.c.b16 %v2132, %v2130
        %v2331 = vpack.c.b16 %v2135, %v2133
        %v2332 = vpack.c.b16 %v2136, %v2134
        %v2333 = vpack.c.b16 %v2139, %v2137
        %v2334 = vpack.c.b16 %v2140, %v2138
        %v2335 = vpack.c.b16 %v2143, %v2141
        %v2336 = vpack.c.b16 %v2144, %v2142
        %v2337 = vpack.c.b16 %v2147, %v2145
        %v2338 = vpack.c.b16 %v2148, %v2146
        %v2339 = vpack.c.b16 %v2151, %v2149
        %v2340 = vpack.c.b16 %v2152, %v2150
        %v2341 = vpack.c.b16 %v2155, %v2153
        %v2342 = vpack.c.b16 %v2156, %v2154
        %v2343 = vpack.c.b16 %v2159, %v2157
        %v2344 = vpack.c.b16 %v2160, %v2158
        %v2345 = vpack.c.b16 %v2163, %v2161
        %v2346 = vpack.c.b16 %v2164, %v2162
        %v2347 = vpack.c.b16 %v2167, %v2165
        %v2348 = vpack.c.b16 %v2168, %v2166
        %v2349 = vpack.c.b16 %v2171, %v2169
        %v2350 = vpack.c.b16 %v2172, %v2170
        %v2351 = vpack.c.b16 %v2175, %v2173
        %v2352 = vpack.c.b16 %v2176, %v2174
        %v2353 = vpack.c.b16 %v2179, %v2177
        %v2354 = vpack.c.b16 %v2180, %v2178
        %v2355 = vpack.c.b16 %v2183, %v2181
        %v2356 = vpack.c.b16 %v2184, %v2182
        %v2357 = vpack.c.b16 %v2187, %v2185
        %v2358 = vpack.c.b16 %v2188, %v2186
        %v2359 = vpack.c.b16 %v2191, %v2189
        %v2360 = vpack.c.b16 %v2192, %v2190
        %v2361 = vpack.c.b16 %v2195, %v2193
        %v2362 = vpack.c.b16 %v2196, %v2194
        %v2363 = vpack.c.b16 %v2199, %v2197
        %v2364 = vpack.c.b16 %v2200, %v2198
        %v2365 = vpack.c.b16 %v2203, %v2201
        %v2366 = vpack.c.b16 %v2204, %v2202
        %v2367 = vpack.c.b16 %v2207, %v2205
        %v2368 = vpack.c.b16 %v2208, %v2206
        %v2369 = vpack.c.b16 %v2211, %v2209
        %v2370 = vpack.c.b16 %v2212, %v2210
        %v2371 = vpack.c.b16 %v2215, %v2213
        %v2372 = vpack.c.b16 %v2216, %v2214
        %v2373 = vpack.c.b16 %v2219, %v2217
        %v2374 = vpack.c.b16 %v2220, %v2218
        %v2375 = vpack.c.b16 %v2223, %v2221
        %v2376 = vpack.c.b16 %v2224, %v2222
        %v2377 = vpack.c.b16 %v2227, %v2225
        %v2378 = vpack.c.b16 %v2228, %v2226
        %v2379 = vpack.c.b16 %v2231, %v2229
        %v2380 = vpack.c.b16 %v2232, %v2230
        %v2381 = vpack.c.b16 %v2235, %v2233
        %v2382 = vpack.c.b16 %v2236, %v2234
        %v2383 = vpack.c.b16 %v2239, %v2237
        %v2384 = vpack.c.b16 %v2240, %v2238
        %v2385 = vpack.c.b16 %v2243, %v2241
        %v2386 = vpack.c.b16 %v2244, %v2242
        %v2387 = vpack.c.b16 %v2247, %v2245
        %v2388 = vpack.c.b16 %v2248, %v2246
        %v2389 = vpack.c.b16 %v2251, %v2249
        %v2390 = vpack.c.b16 %v2252, %v2250
        %v2391 = vpack.c.b16 %v2255, %v2253
        %v2392 = vpack.c.b16 %v2256, %v2254
        %v2393 = vpack.c.b16 %v2259, %v2257
        %v2394 = vpack.c.b16 %v2260, %v2258
        %v2395 = vpack.c.b16 %v2263, %v2261
        %v2396 = vpack.c.b16 %v2264, %v2262
        %v2397 = vpack.c.b16 %v2267, %v2265
        %v2398 = vpack.c.b16 %v2268, %v2266
        %v2399 = vpack.c.b16 %v2271, %v2269
        %v2400 = vpack.c.b16 %v2272, %v2270
        %2529 = vmatprep.subr.bf16.mxu0 %v2274
        %2530 = vmatpush1.bf16.msra.mxu0 %v2273
        %2531 = vmatprep.subr.bf16.mxu0 %v2276
        %2532 = vmatpush1.bf16.msra.mxu0 %v2275
        %2533 = vmatprep.subr.bf16.mxu0 %v2278
        %2534 = vmatpush1.bf16.msra.mxu0 %v2277
        %2535 = vmatprep.subr.bf16.mxu0 %v2280
        %2536 = vmatpush1.bf16.msra.mxu0 %v2279
        %2537 = vmatprep.subr.bf16.mxu0 %v2282
        %2538 = vmatpush1.bf16.msra.mxu0 %v2281
        %2539 = vmatprep.subr.bf16.mxu0 %v2284
        %2540 = vmatpush1.bf16.msra.mxu0 %v2283
        %2541 = vmatprep.subr.bf16.mxu0 %v2286
        %2542 = vmatpush1.bf16.msra.mxu0 %v2285
        %2543 = vmatprep.subr.bf16.mxu0 %v2288
        %2544 = vmatpush1.bf16.msra.mxu0 %v2287
        %2545 = vmatprep.subr.bf16.mxu0 %v2290
        %2546 = vmatpush1.bf16.msra.mxu0 %v2289
        %2547 = vmatprep.subr.bf16.mxu0 %v2292
        %2548 = vmatpush1.bf16.msra.mxu0 %v2291
        %2549 = vmatprep.subr.bf16.mxu0 %v2294
        %2550 = vmatpush1.bf16.msra.mxu0 %v2293
        %2551 = vmatprep.subr.bf16.mxu0 %v2296
        %2552 = vmatpush1.bf16.msra.mxu0 %v2295
        %2553 = vmatprep.subr.bf16.mxu0 %v2298
        %2554 = vmatpush1.bf16.msra.mxu0 %v2297
        %2555 = vmatprep.subr.bf16.mxu0 %v2300
        %2556 = vmatpush1.bf16.msra.mxu0 %v2299
        %2557 = vmatprep.subr.bf16.mxu0 %v2302
        %2558 = vmatpush1.bf16.msra.mxu0 %v2301
        %2559 = vmatprep.subr.bf16.mxu0 %v2304
        %2560 = vmatpush1.bf16.msra.mxu0 %v2303
        %2561 = vmatprep.mubr.bf16.mxu0 %v1871
        %2562 = vmatmul.mubr.bf16.gmra.mrb[0].mxu0 %v1870
        %v2563 = vpop.f32.mrb[0].mxu0
        %v2564 = vadd.f32 %v1882, %v2563
        %v2565 = vpop.f32.mrb[0].mxu0
        %v2566 = vadd.f32 %v1886, %v2565
        %v2567 = vpop.f32.mrb[0].mxu0
        %v2568 = vpop.f32.mrb[0].mxu0
        %2569 = vdwg.mxu0
        %2570 = vmatprep.subr.bf16.mxu0 %v2306
        %2571 = vmatpush1.bf16.msra.mxu0 %v2305
        %2572 = vmatprep.subr.bf16.mxu0 %v2308
        %2573 = vmatpush1.bf16.msra.mxu0 %v2307
        %2574 = vmatprep.subr.bf16.mxu0 %v2310
        %2575 = vmatpush1.bf16.msra.mxu0 %v2309
        %2576 = vmatprep.subr.bf16.mxu0 %v2312
        %2577 = vmatpush1.bf16.msra.mxu0 %v2311
        %2578 = vmatprep.subr.bf16.mxu0 %v2314
        %2579 = vmatpush1.bf16.msra.mxu0 %v2313
        %2580 = vmatprep.subr.bf16.mxu0 %v2316
        %2581 = vmatpush1.bf16.msra.mxu0 %v2315
        %2582 = vmatprep.subr.bf16.mxu0 %v2318
        %2583 = vmatpush1.bf16.msra.mxu0 %v2317
        %2584 = vmatprep.subr.bf16.mxu0 %v2320
        %2585 = vmatpush1.bf16.msra.mxu0 %v2319
        %2586 = vmatprep.subr.bf16.mxu0 %v2322
        %2587 = vmatpush1.bf16.msra.mxu0 %v2321
        %2588 = vmatprep.subr.bf16.mxu0 %v2324
        %2589 = vmatpush1.bf16.msra.mxu0 %v2323
        %2590 = vmatprep.subr.bf16.mxu0 %v2326
        %2591 = vmatpush1.bf16.msra.mxu0 %v2325
        %2592 = vmatprep.subr.bf16.mxu0 %v2328
        %2593 = vmatpush1.bf16.msra.mxu0 %v2327
        %2594 = vmatprep.subr.bf16.mxu0 %v2330
        %2595 = vmatpush1.bf16.msra.mxu0 %v2329
        %2596 = vmatprep.subr.bf16.mxu0 %v2332
        %2597 = vmatpush1.bf16.msra.mxu0 %v2331
        %2598 = vmatprep.subr.bf16.mxu0 %v2334
        %2599 = vmatpush1.bf16.msra.mxu0 %v2333
        %2600 = vmatprep.subr.bf16.mxu0 %v2336
        %2601 = vmatpush1.bf16.msra.mxu0 %v2335
        %2602 = vmatprep.mubr.bf16.mxu0 %v1873
        %2603 = vmatmul.mubr.bf16.gmra.mrb[0].mxu0 %v1872
        %v2604 = vpop.f32.mrb[0].mxu0
        %v2605 = vadd.f32 %v2564, %v2604
        %v2606 = vpop.f32.mrb[0].mxu0
        %v2607 = vadd.f32 %v2566, %v2606
        %v2608 = vpop.f32.mrb[0].mxu0
        %v2609 = vpop.f32.mrb[0].mxu0
        %2610 = vdwg.mxu0
        %2611 = vmatprep.subr.bf16.mxu0 %v2338
        %2612 = vmatpush1.bf16.msra.mxu0 %v2337
        %2613 = vmatprep.subr.bf16.mxu0 %v2340
        %2614 = vmatpush1.bf16.msra.mxu0 %v2339
        %2615 = vmatprep.subr.bf16.mxu0 %v2342
        %2616 = vmatpush1.bf16.msra.mxu0 %v2341
        %2617 = vmatprep.subr.bf16.mxu0 %v2344
        %2618 = vmatpush1.bf16.msra.mxu0 %v2343
        %2619 = vmatprep.subr.bf16.mxu0 %v2346
        %2620 = vmatpush1.bf16.msra.mxu0 %v2345
        %2621 = vmatprep.subr.bf16.mxu0 %v2348
        %2622 = vmatpush1.bf16.msra.mxu0 %v2347
        %2623 = vmatprep.subr.bf16.mxu0 %v2350
        %2624 = vmatpush1.bf16.msra.mxu0 %v2349
        %2625 = vmatprep.subr.bf16.mxu0 %v2352
        %2626 = vmatpush1.bf16.msra.mxu0 %v2351
        %2627 = vmatprep.subr.bf16.mxu0 %v2354
        %2628 = vmatpush1.bf16.msra.mxu0 %v2353
        %2629 = vmatprep.subr.bf16.mxu0 %v2356
        %2630 = vmatpush1.bf16.msra.mxu0 %v2355
        %2631 = vmatprep.subr.bf16.mxu0 %v2358
        %2632 = vmatpush1.bf16.msra.mxu0 %v2357
        %2633 = vmatprep.subr.bf16.mxu0 %v2360
        %2634 = vmatpush1.bf16.msra.mxu0 %v2359
        %2635 = vmatprep.subr.bf16.mxu0 %v2362
        %2636 = vmatpush1.bf16.msra.mxu0 %v2361
        %2637 = vmatprep.subr.bf16.mxu0 %v2364
        %2638 = vmatpush1.bf16.msra.mxu0 %v2363
        %2639 = vmatprep.subr.bf16.mxu0 %v2366
        %2640 = vmatpush1.bf16.msra.mxu0 %v2365
        %2641 = vmatprep.subr.bf16.mxu0 %v2368
        %2642 = vmatpush1.bf16.msra.mxu0 %v2367
        %2643 = vmatprep.mubr.bf16.mxu0 %v1875
        %2644 = vmatmul.mubr.bf16.gmra.mrb[0].mxu0 %v1874
        %v2645 = vpop.f32.mrb[0].mxu0
        %v2646 = vadd.f32 %v2605, %v2645
        %v2647 = vpop.f32.mrb[0].mxu0
        %v2648 = vadd.f32 %v2607, %v2647
        %v2649 = vpop.f32.mrb[0].mxu0
        %v2650 = vpop.f32.mrb[0].mxu0
        %2651 = vdwg.mxu0
        %2652 = vmatprep.subr.bf16.mxu0 %v2370
        %2653 = vmatpush1.bf16.msra.mxu0 %v2369
        %2654 = vmatprep.subr.bf16.mxu0 %v2372
        %2655 = vmatpush1.bf16.msra.mxu0 %v2371
        %2656 = vmatprep.subr.bf16.mxu0 %v2374
        %2657 = vmatpush1.bf16.msra.mxu0 %v2373
        %2658 = vmatprep.subr.bf16.mxu0 %v2376
        %2659 = vmatpush1.bf16.msra.mxu0 %v2375
        %2660 = vmatprep.subr.bf16.mxu0 %v2378
        %2661 = vmatpush1.bf16.msra.mxu0 %v2377
        %2662 = vmatprep.subr.bf16.mxu0 %v2380
        %2663 = vmatpush1.bf16.msra.mxu0 %v2379
        %2664 = vmatprep.subr.bf16.mxu0 %v2382
        %2665 = vmatpush1.bf16.msra.mxu0 %v2381
        %2666 = vmatprep.subr.bf16.mxu0 %v2384
        %2667 = vmatpush1.bf16.msra.mxu0 %v2383
        %2668 = vmatprep.subr.bf16.mxu0 %v2386
        %2669 = vmatpush1.bf16.msra.mxu0 %v2385
        %2670 = vmatprep.subr.bf16.mxu0 %v2388
        %2671 = vmatpush1.bf16.msra.mxu0 %v2387
        %2672 = vmatprep.subr.bf16.mxu0 %v2390
        %2673 = vmatpush1.bf16.msra.mxu0 %v2389
        %2674 = vmatprep.subr.bf16.mxu0 %v2392
        %2675 = vmatpush1.bf16.msra.mxu0 %v2391
        %2676 = vmatprep.subr.bf16.mxu0 %v2394
        %2677 = vmatpush1.bf16.msra.mxu0 %v2393
        %2678 = vmatprep.subr.bf16.mxu0 %v2396
        %2679 = vmatpush1.bf16.msra.mxu0 %v2395
        %2680 = vmatprep.subr.bf16.mxu0 %v2398
        %2681 = vmatpush1.bf16.msra.mxu0 %v2397
        %2682 = vmatprep.subr.bf16.mxu0 %v2400
        %2683 = vmatpush1.bf16.msra.mxu0 %v2399
        %2684 = vmatprep.mubr.bf16.mxu0 %v1877
        %2685 = vmatmul.mubr.bf16.gmra.mrb[0].mxu0 %v1876
        %v2686 = vpop.f32.mrb[0].mxu0
        %v2687 = vadd.f32 %v2646, %v2686
        %v2688 = vpop.f32.mrb[0].mxu0
        %v2689 = vadd.f32 %v2648, %v2688
        %v2690 = vpop.f32.mrb[0].mxu0
        %v2691 = vpop.f32.mrb[0].mxu0
        %2692 = vdwg.mxu0
        %v2693 = vadd.f32 %v2687, %v2689
        %2694 = vadd.xlane.f32.xlu0 %v2693
        %v2695 = vpop.xlane.xlu0 %2694
        %v2696 = vmul.f32 %v2695, 0.00390625
        %v2697 = vmul.f32 %v2687, %v2687
        %v2698 = vmul.f32 %v2689, %v2689
        %v2699 = vadd.f32 %v2697, %v2698
        %2700 = vadd.xlane.f32.xlu0 %v2699
        %v2701 = vpop.xlane.xlu0 %2700
        %v2702 = vmul.f32 %v2701, 0.00390625
        %v2703 = vmul.f32 %v2696, %v2696
        %v2704 = vsub.f32 %v2702, %v2703
        %v2705 = vmax.f32 %v2704, 0.0
        %v2706 = vsub.f32 %v2687, %v2696
        %v2707 = vsub.f32 %v2689, %v2696
        %v2708 = vadd.f32 %v2705, 1e-05
        %v2709 = vrsqrt.pop %v2708
        %v2710 = vmul.f32 %v2706, %v2709
        %v2711 = vmul.f32 %v2707, %v2709
        %v2713 = vlaneseq
        %v2714 = vshrl.u32 %v2713, 7
        %v2715 = vsub.s32 0, %v2714
        %v2716 = vrot.slane %v1844, %v2715
        %v2717 = vlaneseq
        %v2718 = vshrl.u32 %v2717, 7
        %v2719 = vsub.s32 1, %v2718
        %v2720 = vrot.slane %v1844, %v2719
        %v2723 = vmul.f32 %v2710, %v2716
        %v2724 = vmul.f32 %v2711, %v2720
        %v2726 = vlaneseq
        %v2727 = vshrl.u32 %v2726, 7
        %v2728 = vsub.s32 0, %v2727
        %v2729 = vrot.slane %v1845, %v2728
        %v2730 = vlaneseq
        %v2731 = vshrl.u32 %v2730, 7
        %v2732 = vsub.s32 1, %v2731
        %v2733 = vrot.slane %v1845, %v2732
        %v2736 = vadd.f32 %v2723, %v2729
        %v2737 = vadd.f32 %v2724, %v2733
        %v2738 = vld [vmem:[%s15] sm:$0xf]
        %v2739 = vld [vmem:[%s15 + $0x4] sm:$0xf]
        %v2740 = vld [vmem:[%s15 + $0x8] sm:$0xf]
        %v2741 = vld [vmem:[%s15 + $0xc] sm:$0xf]
        %v2742 = vld [vmem:[%s15 + $0x10] sm:$0xf]
        %v2743 = vld [vmem:[%s15 + $0x14] sm:$0xf]
        %v2744 = vld [vmem:[%s15 + $0x18] sm:$0xf]
        %v2745 = vld [vmem:[%s15 + $0x1c] sm:$0xf]
        %v2746 = vld [vmem:[%s15 + $0x20] sm:$0xf]
        %v2747 = vld [vmem:[%s15 + $0x24] sm:$0xf]
        %v2748 = vld [vmem:[%s15 + $0x28] sm:$0xf]
        %v2749 = vld [vmem:[%s15 + $0x2c] sm:$0xf]
        %v2750 = vld [vmem:[%s15 + $0x30] sm:$0xf]
        %v2751 = vld [vmem:[%s15 + $0x34] sm:$0xf]
        %v2752 = vld [vmem:[%s15 + $0x38] sm:$0xf]
        %v2753 = vld [vmem:[%s15 + $0x3c] sm:$0xf]
        %v2754 = vld [vmem:[%s15 + $0x40] sm:$0xf]
        %v2755 = vld [vmem:[%s15 + $0x44] sm:$0xf]
        %v2756 = vld [vmem:[%s15 + $0x48] sm:$0xf]
        %v2757 = vld [vmem:[%s15 + $0x4c] sm:$0xf]
        %v2758 = vld [vmem:[%s15 + $0x50] sm:$0xf]
        %v2759 = vld [vmem:[%s15 + $0x54] sm:$0xf]
        %v2760 = vld [vmem:[%s15 + $0x58] sm:$0xf]
        %v2761 = vld [vmem:[%s15 + $0x5c] sm:$0xf]
        %v2762 = vld [vmem:[%s15 + $0x60] sm:$0xf]
        %v2763 = vld [vmem:[%s15 + $0x64] sm:$0xf]
        %v2764 = vld [vmem:[%s15 + $0x68] sm:$0xf]
        %v2765 = vld [vmem:[%s15 + $0x6c] sm:$0xf]
        %v2766 = vld [vmem:[%s15 + $0x70] sm:$0xf]
        %v2767 = vld [vmem:[%s15 + $0x74] sm:$0xf]
        %v2768 = vld [vmem:[%s15 + $0x78] sm:$0xf]
        %v2769 = vld [vmem:[%s15 + $0x7c] sm:$0xf]
        %v2770 = vld [vmem:[%s17] sm:$0x1]
        %v2771 = vld [vmem:[%s19] sm:$0x1]
        %v2772 = vld [vmem:[%s21] sm:$0x1]
        %vm2773 = vcmp.ge.f32.partialorder %v2736, 0.0
        %vm2774 = vcmp.ge.f32.partialorder %v2737, 0.0
        %v2775 = vmul.f32 %v2736, 0.2
        %v2776 = vmul.f32 %v2737, 0.2
        %v2777 = vsel %vm2773, %v2736, %v2775
        %v2778 = vsel %vm2774, %v2737, %v2776
        %v2779 = vpack.c.bf16 %v2777, %v2777
        %v2780 = vpack.c.bf16 %v2778, %v2778
        %v2782 = vlaneseq
        %v2783 = vshrl.u32 %v2782, 7
        %v2784 = vsub.s32 0, %v2783
        %v2785 = vrot.slane %v2770, %v2784
        %v2819 = vunpack.c.l.b16 %v2738
        %v2820 = vunpack.c.l.b16 %v2739
        %v2821 = vunpack.c.l.b16 %v2740
        %v2822 = vunpack.c.l.b16 %v2741
        %v2823 = vunpack.c.l.b16 %v2742
        %v2824 = vunpack.c.l.b16 %v2743
        %v2825 = vunpack.c.l.b16 %v2744
        %v2826 = vunpack.c.l.b16 %v2745
        %v2827 = vunpack.c.l.b16 %v2746
        %v2828 = vunpack.c.l.b16 %v2747
        %v2829 = vunpack.c.l.b16 %v2748
        %v2830 = vunpack.c.l.b16 %v2749
        %v2831 = vunpack.c.l.b16 %v2750
        %v2832 = vunpack.c.l.b16 %v2751
        %v2833 = vunpack.c.l.b16 %v2752
        %v2834 = vunpack.c.l.b16 %v2753
        %v2835 = vunpack.c.l.b16 %v2754
        %v2836 = vunpack.c.l.b16 %v2755
        %v2837 = vunpack.c.l.b16 %v2756
        %v2838 = vunpack.c.l.b16 %v2757
        %v2839 = vunpack.c.l.b16 %v2758
        %v2840 = vunpack.c.l.b16 %v2759
        %v2841 = vunpack.c.l.b16 %v2760
        %v2842 = vunpack.c.l.b16 %v2761
        %v2843 = vunpack.c.l.b16 %v2762
        %v2844 = vunpack.c.l.b16 %v2763
        %v2845 = vunpack.c.l.b16 %v2764
        %v2846 = vunpack.c.l.b16 %v2765
        %v2847 = vunpack.c.l.b16 %v2766
        %v2848 = vunpack.c.l.b16 %v2767
        %v2849 = vunpack.c.l.b16 %v2768
        %v2850 = vunpack.c.l.b16 %v2769
        %v2851 = vpack.c.b16 %v2820, %v2819
        %v2852 = vpack.c.b16 %v2822, %v2821
        %v2853 = vpack.c.b16 %v2824, %v2823
        %v2854 = vpack.c.b16 %v2826, %v2825
        %v2855 = vpack.c.b16 %v2828, %v2827
        %v2856 = vpack.c.b16 %v2830, %v2829
        %v2857 = vpack.c.b16 %v2832, %v2831
        %v2858 = vpack.c.b16 %v2834, %v2833
        %v2859 = vpack.c.b16 %v2836, %v2835
        %v2860 = vpack.c.b16 %v2838, %v2837
        %v2861 = vpack.c.b16 %v2840, %v2839
        %v2862 = vpack.c.b16 %v2842, %v2841
        %v2863 = vpack.c.b16 %v2844, %v2843
        %v2864 = vpack.c.b16 %v2846, %v2845
        %v2865 = vpack.c.b16 %v2848, %v2847
        %v2866 = vpack.c.b16 %v2850, %v2849
        %2883 = vmatprep.subr.bf16.mxu0 0
        %2884 = vmatpush1.bf16.msra.mxu0 %v2851
        %2885 = vmatprep.subr.bf16.mxu0 0
        %2886 = vmatpush1.bf16.msra.mxu0 %v2852
        %2887 = vmatprep.subr.bf16.mxu0 0
        %2888 = vmatpush1.bf16.msra.mxu0 %v2853
        %2889 = vmatprep.subr.bf16.mxu0 0
        %2890 = vmatpush1.bf16.msra.mxu0 %v2854
        %2891 = vmatprep.subr.bf16.mxu0 0
        %2892 = vmatpush1.bf16.msra.mxu0 %v2855
        %2893 = vmatprep.subr.bf16.mxu0 0
        %2894 = vmatpush1.bf16.msra.mxu0 %v2856
        %2895 = vmatprep.subr.bf16.mxu0 0
        %2896 = vmatpush1.bf16.msra.mxu0 %v2857
        %2897 = vmatprep.subr.bf16.mxu0 0
        %2898 = vmatpush1.bf16.msra.mxu0 %v2858
        %2899 = vmatprep.subr.bf16.mxu0 0
        %2900 = vmatpush1.bf16.msra.mxu0 %v2859
        %2901 = vmatprep.subr.bf16.mxu0 0
        %2902 = vmatpush1.bf16.msra.mxu0 %v2860
        %2903 = vmatprep.subr.bf16.mxu0 0
        %2904 = vmatpush1.bf16.msra.mxu0 %v2861
        %2905 = vmatprep.subr.bf16.mxu0 0
        %2906 = vmatpush1.bf16.msra.mxu0 %v2862
        %2907 = vmatprep.subr.bf16.mxu0 0
        %2908 = vmatpush1.bf16.msra.mxu0 %v2863
        %2909 = vmatprep.subr.bf16.mxu0 0
        %2910 = vmatpush1.bf16.msra.mxu0 %v2864
        %2911 = vmatprep.subr.bf16.mxu0 0
        %2912 = vmatpush1.bf16.msra.mxu0 %v2865
        %2913 = vmatprep.subr.bf16.mxu0 0
        %2914 = vmatpush1.bf16.msra.mxu0 %v2866
        %2915 = vmatprep.mubr.bf16.mxu0 %v2780
        %2916 = vmatmul.mubr.bf16.gmra.mrb[0].mxu0 %v2779
        %v2917 = vpop.f32.mrb[0].mxu0
        %v2918 = vadd.f32 %v2785, %v2917
        %v2919 = vpop.f32.mrb[0].mxu0
        %v2920 = vpop.f32.mrb[0].mxu0
        %v2921 = vpop.f32.mrb[0].mxu0
        %2922 = vdwg.mxu0
        %2923 = vadd.xlane.f32.xlu0 %v2918
        %v2924 = vpop.xlane.xlu0 %2923
        %v2925 = vmul.f32 %v2924, 0.0078125
        %v2926 = vmul.f32 %v2918, %v2918
        %2927 = vadd.xlane.f32.xlu0 %v2926
        %v2928 = vpop.xlane.xlu0 %2927
        %v2929 = vmul.f32 %v2928, 0.0078125
        %v2930 = vmul.f32 %v2925, %v2925
        %v2931 = vsub.f32 %v2929, %v2930
        %v2932 = vmax.f32 %v2931, 0.0
        %v2933 = vsub.f32 %v2918, %v2925
        %v2934 = vadd.f32 %v2932, 1e-05
        %v2935 = vrsqrt.pop %v2934
        %v2936 = vmul.f32 %v2933, %v2935
        %v2938 = vlaneseq
        %v2939 = vshrl.u32 %v2938, 7
        %v2940 = vsub.s32 0, %v2939
        %v2941 = vrot.slane %v2771, %v2940
        %v2943 = vmul.f32 %v2936, %v2941
        %v2945 = vlaneseq
        %v2946 = vshrl.u32 %v2945, 7
        %v2947 = vsub.s32 0, %v2946
        %v2948 = vrot.slane %v2772, %v2947
        %v2950 = vadd.f32 %v2943, %v2948
        %vm2951 = vcmp.ge.f32.partialorder %v2950, 0.0
        %v2952 = vmul.f32 %v2950, 0.2
        %v2953 = vsel %vm2951, %v2950, %v2952
        %v2954 = vld [vmem:[%s23] sm:$0xf]
        %v2955 = vld [vmem:[%s23 + $0x4] sm:$0xf]
        %v2956 = vld [vmem:[%s23 + $0x8] sm:$0xf]
        %v2957 = vld [vmem:[%s23 + $0xc] sm:$0xf]
        %v2958 = vld [vmem:[%s23 + $0x10] sm:$0xf]
        %v2959 = vld [vmem:[%s23 + $0x14] sm:$0xf]
        %v2960 = vld [vmem:[%s23 + $0x18] sm:$0xf]
        %v2961 = vld [vmem:[%s23 + $0x1c] sm:$0xf]
        %v2962 = vld [vmem:[%s23 + $0x20] sm:$0xf]
        %v2963 = vld [vmem:[%s23 + $0x24] sm:$0xf]
        %v2964 = vld [vmem:[%s23 + $0x28] sm:$0xf]
        %v2965 = vld [vmem:[%s23 + $0x2c] sm:$0xf]
        %v2966 = vld [vmem:[%s23 + $0x30] sm:$0xf]
        %v2967 = vld [vmem:[%s23 + $0x34] sm:$0xf]
        %v2968 = vld [vmem:[%s23 + $0x38] sm:$0xf]
        %v2969 = vld [vmem:[%s23 + $0x3c] sm:$0xf]
        %v2970 = vld [vmem:[%s25] sm:$0x1]
        %v2971 = vld [vmem:[%s27] sm:$0x1]
        %v2972 = vld [vmem:[%s29] sm:$0x1]
        %v2973 = vpack.c.bf16 %v2953, %v2953
        %v2975 = vlaneseq
        %v2976 = vshrl.u32 %v2975, 7
        %v2977 = vsub.s32 0, %v2976
        %v2978 = vrot.slane %v2970, %v2977
        %v2996 = vunpack.c.l.b16 %v2954
        %v2997 = vunpack.c.l.b16 %v2955
        %v2998 = vunpack.c.l.b16 %v2956
        %v2999 = vunpack.c.l.b16 %v2957
        %v3000 = vunpack.c.l.b16 %v2958
        %v3001 = vunpack.c.l.b16 %v2959
        %v3002 = vunpack.c.l.b16 %v2960
        %v3003 = vunpack.c.l.b16 %v2961
        %v3004 = vunpack.c.l.b16 %v2962
        %v3005 = vunpack.c.l.b16 %v2963
        %v3006 = vunpack.c.l.b16 %v2964
        %v3007 = vunpack.c.l.b16 %v2965
        %v3008 = vunpack.c.l.b16 %v2966
        %v3009 = vunpack.c.l.b16 %v2967
        %v3010 = vunpack.c.l.b16 %v2968
        %v3011 = vunpack.c.l.b16 %v2969
        %v3012 = vpack.c.b16 %v2997, %v2996
        %v3013 = vpack.c.b16 %v2999, %v2998
        %v3014 = vpack.c.b16 %v3001, %v3000
        %v3015 = vpack.c.b16 %v3003, %v3002
        %v3016 = vpack.c.b16 %v3005, %v3004
        %v3017 = vpack.c.b16 %v3007, %v3006
        %v3018 = vpack.c.b16 %v3009, %v3008
        %v3019 = vpack.c.b16 %v3011, %v3010
        %3028 = vmatprep.subr.bf16.mxu0 0
        %3029 = vmatpush1.bf16.msra.mxu0 %v3012
        %3030 = vmatprep.subr.bf16.mxu0 0
        %3031 = vmatpush1.bf16.msra.mxu0 %v3013
        %3032 = vmatprep.subr.bf16.mxu0 0
        %3033 = vmatpush1.bf16.msra.mxu0 %v3014
        %3034 = vmatprep.subr.bf16.mxu0 0
        %3035 = vmatpush1.bf16.msra.mxu0 %v3015
        %3036 = vmatprep.subr.bf16.mxu0 0
        %3037 = vmatpush1.bf16.msra.mxu0 %v3016
        %3038 = vmatprep.subr.bf16.mxu0 0
        %3039 = vmatpush1.bf16.msra.mxu0 %v3017
        %3040 = vmatprep.subr.bf16.mxu0 0
        %3041 = vmatpush1.bf16.msra.mxu0 %v3018
        %3042 = vmatprep.subr.bf16.mxu0 0
        %3043 = vmatpush1.bf16.msra.mxu0 %v3019
        %3044 = vmatprep.subr.bf16.mxu0 0
        %3045 = vmatpush1.bf16.msra.mxu0 0
        %3046 = vmatprep.subr.bf16.mxu0 0
        %3047 = vmatpush1.bf16.msra.mxu0 0
        %3048 = vmatprep.subr.bf16.mxu0 0
        %3049 = vmatpush1.bf16.msra.mxu0 0
        %3050 = vmatprep.subr.bf16.mxu0 0
        %3051 = vmatpush1.bf16.msra.mxu0 0
        %3052 = vmatprep.subr.bf16.mxu0 0
        %3053 = vmatpush1.bf16.msra.mxu0 0
        %3054 = vmatprep.subr.bf16.mxu0 0
        %3055 = vmatpush1.bf16.msra.mxu0 0
        %3056 = vmatprep.subr.bf16.mxu0 0
        %3057 = vmatpush1.bf16.msra.mxu0 0
        %3058 = vmatprep.subr.bf16.mxu0 0
        %3059 = vmatpush1.bf16.msra.mxu0 0
        %3060 = vmatprep.mubr.bf16.mxu0 0
        %3061 = vmatmul.mubr.bf16.gmra.mrb[0].mxu0 %v2973
        %v3062 = vpop.f32.mrb[0].mxu0
        %v3063 = vadd.f32 %v2978, %v3062
        %v3064 = vpop.f32.mrb[0].mxu0
        %v3065 = vpop.f32.mrb[0].mxu0
        %v3066 = vpop.f32.mrb[0].mxu0
        %3067 = vdwg.mxu0
        %3068 = vadd.xlane.f32.xlu0 %v3063
        %v3069 = vpop.xlane.xlu0 %3068
        %v3070 = vmul.f32 %v3069, 0.0078125
        %v3071 = vmul.f32 %v3063, %v3063
        %3072 = vadd.xlane.f32.xlu0 %v3071
        %v3073 = vpop.xlane.xlu0 %3072
        %v3074 = vmul.f32 %v3073, 0.0078125
        %v3075 = vmul.f32 %v3070, %v3070
        %v3076 = vsub.f32 %v3074, %v3075
        %v3077 = vmax.f32 %v3076, 0.0
        %v3078 = vsub.f32 %v3063, %v3070
        %v3079 = vadd.f32 %v3077, 1e-05
        %v3080 = vrsqrt.pop %v3079
        %v3081 = vmul.f32 %v3078, %v3080
        %v3083 = vlaneseq
        %v3084 = vshrl.u32 %v3083, 7
        %v3085 = vsub.s32 0, %v3084
        %v3086 = vrot.slane %v2971, %v3085
        %v3088 = vmul.f32 %v3081, %v3086
        %v3090 = vlaneseq
        %v3091 = vshrl.u32 %v3090, 7
        %v3092 = vsub.s32 0, %v3091
        %v3093 = vrot.slane %v2972, %v3092
        %v3095 = vadd.f32 %v3088, %v3093
        %v3096 = vmax.f32 %v3095, 0.0
        %v3097 = vld [vmem:[%s31] sm:$0xf]
        %v3098 = vld [vmem:[%s31 + $0x4] sm:$0xf]
        %v3099 = vld [vmem:[%s31 + $0x8] sm:$0xf]
        %v3100 = vld [vmem:[%s31 + $0xc] sm:$0xf]
        %v3101 = vld [vmem:[%s31 + $0x10] sm:$0xf]
        %v3102 = vld [vmem:[%s31 + $0x14] sm:$0xf]
        %v3103 = vld [vmem:[%s31 + $0x18] sm:$0xf]
        %v3104 = vld [vmem:[%s31 + $0x1c] sm:$0xf]
        %v3105 = vld [vmem:[%s31 + $0x20] sm:$0xf]
        %v3106 = vld [vmem:[%s31 + $0x24] sm:$0xf]
        %v3107 = vld [vmem:[%s31 + $0x28] sm:$0xf]
        %v3108 = vld [vmem:[%s31 + $0x2c] sm:$0xf]
        %v3109 = vld [vmem:[%s31 + $0x30] sm:$0xf]
        %v3110 = vld [vmem:[%s31 + $0x34] sm:$0xf]
        %v3111 = vld [vmem:[%s31 + $0x38] sm:$0xf]
        %v3112 = vld [vmem:[%s31 + $0x3c] sm:$0xf]
        %v3113 = vld [vmem:[%s33] sm:$0x1]
        %v3114 = vld [vmem:[%s35] sm:$0x1]
        %v3115 = vld [vmem:[%s37] sm:$0x1]
        %v3116 = vpack.c.bf16 %v3096, %v3096
        %v3118 = vlaneseq
        %v3119 = vshrl.u32 %v3118, 7
        %v3120 = vsub.s32 0, %v3119
        %v3121 = vrot.slane %v3113, %v3120
        %v3139 = vunpack.c.l.b16 %v3097
        %v3140 = vunpack.c.l.b16 %v3098
        %v3141 = vunpack.c.l.b16 %v3099
        %v3142 = vunpack.c.l.b16 %v3100
        %v3143 = vunpack.c.l.b16 %v3101
        %v3144 = vunpack.c.l.b16 %v3102
        %v3145 = vunpack.c.l.b16 %v3103
        %v3146 = vunpack.c.l.b16 %v3104
        %v3147 = vunpack.c.l.b16 %v3105
        %v3148 = vunpack.c.l.b16 %v3106
        %v3149 = vunpack.c.l.b16 %v3107
        %v3150 = vunpack.c.l.b16 %v3108
        %v3151 = vunpack.c.l.b16 %v3109
        %v3152 = vunpack.c.l.b16 %v3110
        %v3153 = vunpack.c.l.b16 %v3111
        %v3154 = vunpack.c.l.b16 %v3112
        %v3155 = vpack.c.b16 %v3140, %v3139
        %v3156 = vpack.c.b16 %v3142, %v3141
        %v3157 = vpack.c.b16 %v3144, %v3143
        %v3158 = vpack.c.b16 %v3146, %v3145
        %v3159 = vpack.c.b16 %v3148, %v3147
        %v3160 = vpack.c.b16 %v3150, %v3149
        %v3161 = vpack.c.b16 %v3152, %v3151
        %v3162 = vpack.c.b16 %v3154, %v3153
        %3171 = vmatprep.subr.bf16.mxu0 0
        %3172 = vmatpush1.bf16.msra.mxu0 %v3155
        %3173 = vmatprep.subr.bf16.mxu0 0
        %3174 = vmatpush1.bf16.msra.mxu0 %v3156
        %3175 = vmatprep.subr.bf16.mxu0 0
        %3176 = vmatpush1.bf16.msra.mxu0 %v3157
        %3177 = vmatprep.subr.bf16.mxu0 0
        %3178 = vmatpush1.bf16.msra.mxu0 %v3158
        %3179 = vmatprep.subr.bf16.mxu0 0
        %3180 = vmatpush1.bf16.msra.mxu0 %v3159
        %3181 = vmatprep.subr.bf16.mxu0 0
        %3182 = vmatpush1.bf16.msra.mxu0 %v3160
        %3183 = vmatprep.subr.bf16.mxu0 0
        %3184 = vmatpush1.bf16.msra.mxu0 %v3161
        %3185 = vmatprep.subr.bf16.mxu0 0
        %3186 = vmatpush1.bf16.msra.mxu0 %v3162
        %3187 = vmatprep.subr.bf16.mxu0 0
        %3188 = vmatpush1.bf16.msra.mxu0 0
        %3189 = vmatprep.subr.bf16.mxu0 0
        %3190 = vmatpush1.bf16.msra.mxu0 0
        %3191 = vmatprep.subr.bf16.mxu0 0
        %3192 = vmatpush1.bf16.msra.mxu0 0
        %3193 = vmatprep.subr.bf16.mxu0 0
        %3194 = vmatpush1.bf16.msra.mxu0 0
        %3195 = vmatprep.subr.bf16.mxu0 0
        %3196 = vmatpush1.bf16.msra.mxu0 0
        %3197 = vmatprep.subr.bf16.mxu0 0
        %3198 = vmatpush1.bf16.msra.mxu0 0
        %3199 = vmatprep.subr.bf16.mxu0 0
        %3200 = vmatpush1.bf16.msra.mxu0 0
        %3201 = vmatprep.subr.bf16.mxu0 0
        %3202 = vmatpush1.bf16.msra.mxu0 0
        %3203 = vmatprep.mubr.bf16.mxu0 0
        %3204 = vmatmul.mubr.bf16.gmra.mrb[0].mxu0 %v3116
        %v3205 = vpop.f32.mrb[0].mxu0
        %v3206 = vadd.f32 %v3121, %v3205
        %v3207 = vpop.f32.mrb[0].mxu0
        %v3208 = vpop.f32.mrb[0].mxu0
        %v3209 = vpop.f32.mrb[0].mxu0
        %3210 = vdwg.mxu0
        %3211 = vadd.xlane.f32.xlu0 %v3206
        %v3212 = vpop.xlane.xlu0 %3211
        %v3213 = vmul.f32 %v3212, 0.0078125
        %v3214 = vmul.f32 %v3206, %v3206
        %3215 = vadd.xlane.f32.xlu0 %v3214
        %v3216 = vpop.xlane.xlu0 %3215
        %v3217 = vmul.f32 %v3216, 0.0078125
        %v3218 = vmul.f32 %v3213, %v3213
        %v3219 = vsub.f32 %v3217, %v3218
        %v3220 = vmax.f32 %v3219, 0.0
        %v3221 = vsub.f32 %v3206, %v3213
        %v3222 = vadd.f32 %v3220, 1e-05
        %v3223 = vrsqrt.pop %v3222
        %v3224 = vmul.f32 %v3221, %v3223
        %v3226 = vlaneseq
        %v3227 = vshrl.u32 %v3226, 7
        %v3228 = vsub.s32 0, %v3227
        %v3229 = vrot.slane %v3114, %v3228
        %v3231 = vmul.f32 %v3224, %v3229
        %v3233 = vlaneseq
        %v3234 = vshrl.u32 %v3233, 7
        %v3235 = vsub.s32 0, %v3234
        %v3236 = vrot.slane %v3115, %v3235
        %v3238 = vadd.f32 %v3231, %v3236
        %v3239 = vadd.f32 %v2953, %v3238
        %v3240 = vld [vmem:[%s39] sm:$0xf]
        %v3241 = vld [vmem:[%s39 + $0x4] sm:$0xf]
        %v3242 = vld [vmem:[%s39 + $0x8] sm:$0xf]
        %v3243 = vld [vmem:[%s39 + $0xc] sm:$0xf]
        %v3244 = vld [vmem:[%s39 + $0x10] sm:$0xf]
        %v3245 = vld [vmem:[%s39 + $0x14] sm:$0xf]
        %v3246 = vld [vmem:[%s39 + $0x18] sm:$0xf]
        %v3247 = vld [vmem:[%s39 + $0x1c] sm:$0xf]
        %v3248 = vld [vmem:[%s39 + $0x20] sm:$0xf]
        %v3249 = vld [vmem:[%s39 + $0x24] sm:$0xf]
        %v3250 = vld [vmem:[%s39 + $0x28] sm:$0xf]
        %v3251 = vld [vmem:[%s39 + $0x2c] sm:$0xf]
        %v3252 = vld [vmem:[%s39 + $0x30] sm:$0xf]
        %v3253 = vld [vmem:[%s39 + $0x34] sm:$0xf]
        %v3254 = vld [vmem:[%s39 + $0x38] sm:$0xf]
        %v3255 = vld [vmem:[%s39 + $0x3c] sm:$0xf]
        %v3256 = vld [vmem:[%s41] sm:$0x1]
        %v3257 = vld [vmem:[%s43] sm:$0x1]
        %v3258 = vld [vmem:[%s45] sm:$0x1]
        %v3259 = vpack.c.bf16 %v3239, %v3239
        %v3261 = vlaneseq
        %v3262 = vshrl.u32 %v3261, 7
        %v3263 = vsub.s32 0, %v3262
        %v3264 = vrot.slane %v3256, %v3263
        %v3282 = vunpack.c.l.b16 %v3240
        %v3283 = vunpack.c.l.b16 %v3241
        %v3284 = vunpack.c.l.b16 %v3242
        %v3285 = vunpack.c.l.b16 %v3243
        %v3286 = vunpack.c.l.b16 %v3244
        %v3287 = vunpack.c.l.b16 %v3245
        %v3288 = vunpack.c.l.b16 %v3246
        %v3289 = vunpack.c.l.b16 %v3247
        %v3290 = vunpack.c.l.b16 %v3248
        %v3291 = vunpack.c.l.b16 %v3249
        %v3292 = vunpack.c.l.b16 %v3250
        %v3293 = vunpack.c.l.b16 %v3251
        %v3294 = vunpack.c.l.b16 %v3252
        %v3295 = vunpack.c.l.b16 %v3253
        %v3296 = vunpack.c.l.b16 %v3254
        %v3297 = vunpack.c.l.b16 %v3255
        %v3298 = vpack.c.b16 %v3283, %v3282
        %v3299 = vpack.c.b16 %v3285, %v3284
        %v3300 = vpack.c.b16 %v3287, %v3286
        %v3301 = vpack.c.b16 %v3289, %v3288
        %v3302 = vpack.c.b16 %v3291, %v3290
        %v3303 = vpack.c.b16 %v3293, %v3292
        %v3304 = vpack.c.b16 %v3295, %v3294
        %v3305 = vpack.c.b16 %v3297, %v3296
        %3314 = vmatprep.subr.bf16.mxu0 0
        %3315 = vmatpush1.bf16.msra.mxu0 %v3298
        %3316 = vmatprep.subr.bf16.mxu0 0
        %3317 = vmatpush1.bf16.msra.mxu0 %v3299
        %3318 = vmatprep.subr.bf16.mxu0 0
        %3319 = vmatpush1.bf16.msra.mxu0 %v3300
        %3320 = vmatprep.subr.bf16.mxu0 0
        %3321 = vmatpush1.bf16.msra.mxu0 %v3301
        %3322 = vmatprep.subr.bf16.mxu0 0
        %3323 = vmatpush1.bf16.msra.mxu0 %v3302
        %3324 = vmatprep.subr.bf16.mxu0 0
        %3325 = vmatpush1.bf16.msra.mxu0 %v3303
        %3326 = vmatprep.subr.bf16.mxu0 0
        %3327 = vmatpush1.bf16.msra.mxu0 %v3304
        %3328 = vmatprep.subr.bf16.mxu0 0
        %3329 = vmatpush1.bf16.msra.mxu0 %v3305
        %3330 = vmatprep.subr.bf16.mxu0 0
        %3331 = vmatpush1.bf16.msra.mxu0 0
        %3332 = vmatprep.subr.bf16.mxu0 0
        %3333 = vmatpush1.bf16.msra.mxu0 0
        %3334 = vmatprep.subr.bf16.mxu0 0
        %3335 = vmatpush1.bf16.msra.mxu0 0
        %3336 = vmatprep.subr.bf16.mxu0 0
        %3337 = vmatpush1.bf16.msra.mxu0 0
        %3338 = vmatprep.subr.bf16.mxu0 0
        %3339 = vmatpush1.bf16.msra.mxu0 0
        %3340 = vmatprep.subr.bf16.mxu0 0
        %3341 = vmatpush1.bf16.msra.mxu0 0
        %3342 = vmatprep.subr.bf16.mxu0 0
        %3343 = vmatpush1.bf16.msra.mxu0 0
        %3344 = vmatprep.subr.bf16.mxu0 0
        %3345 = vmatpush1.bf16.msra.mxu0 0
        %3346 = vmatprep.mubr.bf16.mxu0 0
        %3347 = vmatmul.mubr.bf16.gmra.mrb[0].mxu0 %v3259
        %v3348 = vpop.f32.mrb[0].mxu0
        %v3349 = vadd.f32 %v3264, %v3348
        %v3350 = vpop.f32.mrb[0].mxu0
        %v3351 = vpop.f32.mrb[0].mxu0
        %v3352 = vpop.f32.mrb[0].mxu0
        %3353 = vdwg.mxu0
        %3354 = vadd.xlane.f32.xlu0 %v3349
        %v3355 = vpop.xlane.xlu0 %3354
        %v3356 = vmul.f32 %v3355, 0.0078125
        %v3357 = vmul.f32 %v3349, %v3349
        %3358 = vadd.xlane.f32.xlu0 %v3357
        %v3359 = vpop.xlane.xlu0 %3358
        %v3360 = vmul.f32 %v3359, 0.0078125
        %v3361 = vmul.f32 %v3356, %v3356
        %v3362 = vsub.f32 %v3360, %v3361
        %v3363 = vmax.f32 %v3362, 0.0
        %v3364 = vsub.f32 %v3349, %v3356
        %v3365 = vadd.f32 %v3363, 1e-05
        %v3366 = vrsqrt.pop %v3365
        %v3367 = vmul.f32 %v3364, %v3366
        %v3369 = vlaneseq
        %v3370 = vshrl.u32 %v3369, 7
        %v3371 = vsub.s32 0, %v3370
        %v3372 = vrot.slane %v3257, %v3371
        %v3374 = vmul.f32 %v3367, %v3372
        %v3376 = vlaneseq
        %v3377 = vshrl.u32 %v3376, 7
        %v3378 = vsub.s32 0, %v3377
        %v3379 = vrot.slane %v3258, %v3378
        %v3381 = vadd.f32 %v3374, %v3379
        %v3382 = vmax.f32 %v3381, 0.0
        %v3383 = vld [vmem:[%s47] sm:$0xf]
        %v3384 = vld [vmem:[%s47 + $0x4] sm:$0xf]
        %v3385 = vld [vmem:[%s47 + $0x8] sm:$0xf]
        %v3386 = vld [vmem:[%s47 + $0xc] sm:$0xf]
        %v3387 = vld [vmem:[%s47 + $0x10] sm:$0xf]
        %v3388 = vld [vmem:[%s47 + $0x14] sm:$0xf]
        %v3389 = vld [vmem:[%s47 + $0x18] sm:$0xf]
        %v3390 = vld [vmem:[%s47 + $0x1c] sm:$0xf]
        %v3391 = vld [vmem:[%s47 + $0x20] sm:$0xf]
        %v3392 = vld [vmem:[%s47 + $0x24] sm:$0xf]
        %v3393 = vld [vmem:[%s47 + $0x28] sm:$0xf]
        %v3394 = vld [vmem:[%s47 + $0x2c] sm:$0xf]
        %v3395 = vld [vmem:[%s47 + $0x30] sm:$0xf]
        %v3396 = vld [vmem:[%s47 + $0x34] sm:$0xf]
        %v3397 = vld [vmem:[%s47 + $0x38] sm:$0xf]
        %v3398 = vld [vmem:[%s47 + $0x3c] sm:$0xf]
        %v3399 = vld [vmem:[%s49] sm:$0x1]
        %v3400 = vld [vmem:[%s51] sm:$0x1]
        %v3401 = vld [vmem:[%s53] sm:$0x1]
        %v3402 = vpack.c.bf16 %v3382, %v3382
        %v3404 = vlaneseq
        %v3405 = vshrl.u32 %v3404, 7
        %v3406 = vsub.s32 0, %v3405
        %v3407 = vrot.slane %v3399, %v3406
        %v3425 = vunpack.c.l.b16 %v3383
        %v3426 = vunpack.c.l.b16 %v3384
        %v3427 = vunpack.c.l.b16 %v3385
        %v3428 = vunpack.c.l.b16 %v3386
        %v3429 = vunpack.c.l.b16 %v3387
        %v3430 = vunpack.c.l.b16 %v3388
        %v3431 = vunpack.c.l.b16 %v3389
        %v3432 = vunpack.c.l.b16 %v3390
        %v3433 = vunpack.c.l.b16 %v3391
        %v3434 = vunpack.c.l.b16 %v3392
        %v3435 = vunpack.c.l.b16 %v3393
        %v3436 = vunpack.c.l.b16 %v3394
        %v3437 = vunpack.c.l.b16 %v3395
        %v3438 = vunpack.c.l.b16 %v3396
        %v3439 = vunpack.c.l.b16 %v3397
        %v3440 = vunpack.c.l.b16 %v3398
        %v3441 = vpack.c.b16 %v3426, %v3425
        %v3442 = vpack.c.b16 %v3428, %v3427
        %v3443 = vpack.c.b16 %v3430, %v3429
        %v3444 = vpack.c.b16 %v3432, %v3431
        %v3445 = vpack.c.b16 %v3434, %v3433
        %v3446 = vpack.c.b16 %v3436, %v3435
        %v3447 = vpack.c.b16 %v3438, %v3437
        %v3448 = vpack.c.b16 %v3440, %v3439
        %3457 = vmatprep.subr.bf16.mxu0 0
        %3458 = vmatpush1.bf16.msra.mxu0 %v3441
        %3459 = vmatprep.subr.bf16.mxu0 0
        %3460 = vmatpush1.bf16.msra.mxu0 %v3442
        %3461 = vmatprep.subr.bf16.mxu0 0
        %3462 = vmatpush1.bf16.msra.mxu0 %v3443
        %3463 = vmatprep.subr.bf16.mxu0 0
        %3464 = vmatpush1.bf16.msra.mxu0 %v3444
        %3465 = vmatprep.subr.bf16.mxu0 0
        %3466 = vmatpush1.bf16.msra.mxu0 %v3445
        %3467 = vmatprep.subr.bf16.mxu0 0
        %3468 = vmatpush1.bf16.msra.mxu0 %v3446
        %3469 = vmatprep.subr.bf16.mxu0 0
        %3470 = vmatpush1.bf16.msra.mxu0 %v3447
        %3471 = vmatprep.subr.bf16.mxu0 0
        %3472 = vmatpush1.bf16.msra.mxu0 %v3448
        %3473 = vmatprep.subr.bf16.mxu0 0
        %3474 = vmatpush1.bf16.msra.mxu0 0
        %3475 = vmatprep.subr.bf16.mxu0 0
        %3476 = vmatpush1.bf16.msra.mxu0 0
        %3477 = vmatprep.subr.bf16.mxu0 0
        %3478 = vmatpush1.bf16.msra.mxu0 0
        %3479 = vmatprep.subr.bf16.mxu0 0
        %3480 = vmatpush1.bf16.msra.mxu0 0
        %3481 = vmatprep.subr.bf16.mxu0 0
        %3482 = vmatpush1.bf16.msra.mxu0 0
        %3483 = vmatprep.subr.bf16.mxu0 0
        %3484 = vmatpush1.bf16.msra.mxu0 0
        %3485 = vmatprep.subr.bf16.mxu0 0
        %3486 = vmatpush1.bf16.msra.mxu0 0
        %3487 = vmatprep.subr.bf16.mxu0 0
        %3488 = vmatpush1.bf16.msra.mxu0 0
        %3489 = vmatprep.mubr.bf16.mxu0 0
        %3490 = vmatmul.mubr.bf16.gmra.mrb[0].mxu0 %v3402
        %v3491 = vpop.f32.mrb[0].mxu0
        %v3492 = vadd.f32 %v3407, %v3491
        %v3493 = vpop.f32.mrb[0].mxu0
        %v3494 = vpop.f32.mrb[0].mxu0
        %v3495 = vpop.f32.mrb[0].mxu0
        %3496 = vdwg.mxu0
        %3497 = vadd.xlane.f32.xlu0 %v3492
        %v3498 = vpop.xlane.xlu0 %3497
        %v3499 = vmul.f32 %v3498, 0.0078125
        %v3500 = vmul.f32 %v3492, %v3492
        %3501 = vadd.xlane.f32.xlu0 %v3500
        %v3502 = vpop.xlane.xlu0 %3501
        %v3503 = vmul.f32 %v3502, 0.0078125
        %v3504 = vmul.f32 %v3499, %v3499
        %v3505 = vsub.f32 %v3503, %v3504
        %v3506 = vmax.f32 %v3505, 0.0
        %v3507 = vsub.f32 %v3492, %v3499
        %v3508 = vadd.f32 %v3506, 1e-05
        %v3509 = vrsqrt.pop %v3508
        %v3510 = vmul.f32 %v3507, %v3509
        %v3512 = vlaneseq
        %v3513 = vshrl.u32 %v3512, 7
        %v3514 = vsub.s32 0, %v3513
        %v3515 = vrot.slane %v3400, %v3514
        %v3517 = vmul.f32 %v3510, %v3515
        %v3519 = vlaneseq
        %v3520 = vshrl.u32 %v3519, 7
        %v3521 = vsub.s32 0, %v3520
        %v3522 = vrot.slane %v3401, %v3521
        %v3524 = vadd.f32 %v3517, %v3522
        %v3525 = vadd.f32 %v3239, %v3524
        %v3526 = vld [vmem:[%s55] sm:$0xff]
        %v3527 = vld [vmem:[%s55 + $0x8] sm:$0xff]
        %v3528 = vld [vmem:[%s55 + $0x10] sm:$0xff]
        %v3529 = vld [vmem:[%s55 + $0x18] sm:$0xff]
        %v3530 = vld [vmem:[%s55 + $0x20] sm:$0xff]
        %v3531 = vld [vmem:[%s55 + $0x28] sm:$0xff]
        %v3532 = vld [vmem:[%s55 + $0x30] sm:$0xff]
        %v3533 = vld [vmem:[%s55 + $0x38] sm:$0xff]
        %v3534 = vld [vmem:[%s55 + $0x40] sm:$0xff]
        %v3535 = vld [vmem:[%s55 + $0x48] sm:$0xff]
        %v3536 = vld [vmem:[%s55 + $0x50] sm:$0xff]
        %v3537 = vld [vmem:[%s55 + $0x58] sm:$0xff]
        %v3538 = vld [vmem:[%s55 + $0x60] sm:$0xff]
        %v3539 = vld [vmem:[%s55 + $0x68] sm:$0xff]
        %v3540 = vld [vmem:[%s55 + $0x70] sm:$0xff]
        %v3541 = vld [vmem:[%s55 + $0x78] sm:$0xff]
        %v3542 = vld [vmem:[%s57] sm:$0x3]
        %v3543 = vld [vmem:[%s59] sm:$0x3]
        %v3544 = vld [vmem:[%s61] sm:$0x3]
        %v3545 = vmax.f32 %v3525, 0.0
        %v3546 = vpack.c.bf16 %v3545, %v3545
        %v3548 = vlaneseq
        %v3549 = vshrl.u32 %v3548, 7
        %v3550 = vsub.s32 0, %v3549
        %v3551 = vrot.slane %v3542, %v3550
        %v3552 = vlaneseq
        %v3553 = vshrl.u32 %v3552, 7
        %v3554 = vsub.s32 1, %v3553
        %v3555 = vrot.slane %v3542, %v3554
        %v3574 = vunpack.c.l.b16 %v3526
        %v3575 = vunpack.c.h.b16 %v3526
        %v3576 = vunpack.c.l.b16 %v3527
        %v3577 = vunpack.c.h.b16 %v3527
        %v3578 = vunpack.c.l.b16 %v3528
        %v3579 = vunpack.c.h.b16 %v3528
        %v3580 = vunpack.c.l.b16 %v3529
        %v3581 = vunpack.c.h.b16 %v3529
        %v3582 = vunpack.c.l.b16 %v3530
        %v3583 = vunpack.c.h.b16 %v3530
        %v3584 = vunpack.c.l.b16 %v3531
        %v3585 = vunpack.c.h.b16 %v3531
        %v3586 = vunpack.c.l.b16 %v3532
        %v3587 = vunpack.c.h.b16 %v3532
        %v3588 = vunpack.c.l.b16 %v3533
        %v3589 = vunpack.c.h.b16 %v3533
        %v3590 = vunpack.c.l.b16 %v3534
        %v3591 = vunpack.c.h.b16 %v3534
        %v3592 = vunpack.c.l.b16 %v3535
        %v3593 = vunpack.c.h.b16 %v3535
        %v3594 = vunpack.c.l.b16 %v3536
        %v3595 = vunpack.c.h.b16 %v3536
        %v3596 = vunpack.c.l.b16 %v3537
        %v3597 = vunpack.c.h.b16 %v3537
        %v3598 = vunpack.c.l.b16 %v3538
        %v3599 = vunpack.c.h.b16 %v3538
        %v3600 = vunpack.c.l.b16 %v3539
        %v3601 = vunpack.c.h.b16 %v3539
        %v3602 = vunpack.c.l.b16 %v3540
        %v3603 = vunpack.c.h.b16 %v3540
        %v3604 = vunpack.c.l.b16 %v3541
        %v3605 = vunpack.c.h.b16 %v3541
        %v3606 = vpack.c.b16 %v3576, %v3574
        %v3607 = vpack.c.b16 %v3577, %v3575
        %v3608 = vpack.c.b16 %v3580, %v3578
        %v3609 = vpack.c.b16 %v3581, %v3579
        %v3610 = vpack.c.b16 %v3584, %v3582
        %v3611 = vpack.c.b16 %v3585, %v3583
        %v3612 = vpack.c.b16 %v3588, %v3586
        %v3613 = vpack.c.b16 %v3589, %v3587
        %v3614 = vpack.c.b16 %v3592, %v3590
        %v3615 = vpack.c.b16 %v3593, %v3591
        %v3616 = vpack.c.b16 %v3596, %v3594
        %v3617 = vpack.c.b16 %v3597, %v3595
        %v3618 = vpack.c.b16 %v3600, %v3598
        %v3619 = vpack.c.b16 %v3601, %v3599
        %v3620 = vpack.c.b16 %v3604, %v3602
        %v3621 = vpack.c.b16 %v3605, %v3603
        %3638 = vmatprep.subr.bf16.mxu0 %v3607
        %3639 = vmatpush1.bf16.msra.mxu0 %v3606
        %3640 = vmatprep.subr.bf16.mxu0 %v3609
        %3641 = vmatpush1.bf16.msra.mxu0 %v3608
        %3642 = vmatprep.subr.bf16.mxu0 %v3611
        %3643 = vmatpush1.bf16.msra.mxu0 %v3610
        %3644 = vmatprep.subr.bf16.mxu0 %v3613
        %3645 = vmatpush1.bf16.msra.mxu0 %v3612
        %3646 = vmatprep.subr.bf16.mxu0 %v3615
        %3647 = vmatpush1.bf16.msra.mxu0 %v3614
        %3648 = vmatprep.subr.bf16.mxu0 %v3617
        %3649 = vmatpush1.bf16.msra.mxu0 %v3616
        %3650 = vmatprep.subr.bf16.mxu0 %v3619
        %3651 = vmatpush1.bf16.msra.mxu0 %v3618
        %3652 = vmatprep.subr.bf16.mxu0 %v3621
        %3653 = vmatpush1.bf16.msra.mxu0 %v3620
        %3654 = vmatprep.subr.bf16.mxu0 0
        %3655 = vmatpush1.bf16.msra.mxu0 0
        %3656 = vmatprep.subr.bf16.mxu0 0
        %3657 = vmatpush1.bf16.msra.mxu0 0
        %3658 = vmatprep.subr.bf16.mxu0 0
        %3659 = vmatpush1.bf16.msra.mxu0 0
        %3660 = vmatprep.subr.bf16.mxu0 0
        %3661 = vmatpush1.bf16.msra.mxu0 0
        %3662 = vmatprep.subr.bf16.mxu0 0
        %3663 = vmatpush1.bf16.msra.mxu0 0
        %3664 = vmatprep.subr.bf16.mxu0 0
        %3665 = vmatpush1.bf16.msra.mxu0 0
        %3666 = vmatprep.subr.bf16.mxu0 0
        %3667 = vmatpush1.bf16.msra.mxu0 0
        %3668 = vmatprep.subr.bf16.mxu0 0
        %3669 = vmatpush1.bf16.msra.mxu0 0
        %3670 = vmatprep.mubr.bf16.mxu0 0
        %3671 = vmatmul.mubr.bf16.gmra.mrb[0].mxu0 %v3546
        %v3672 = vpop.f32.mrb[0].mxu0
        %v3673 = vadd.f32 %v3551, %v3672
        %v3674 = vpop.f32.mrb[0].mxu0
        %v3675 = vadd.f32 %v3555, %v3674
        %v3676 = vpop.f32.mrb[0].mxu0
        %v3677 = vpop.f32.mrb[0].mxu0
        %3678 = vdwg.mxu0
        %v3679 = vadd.f32 %v3673, %v3675
        %3680 = vadd.xlane.f32.xlu0 %v3679
        %v3681 = vpop.xlane.xlu0 %3680
        %v3682 = vmul.f32 %v3681, 0.00390625
        %v3683 = vmul.f32 %v3673, %v3673
        %v3684 = vmul.f32 %v3675, %v3675
        %v3685 = vadd.f32 %v3683, %v3684
        %3686 = vadd.xlane.f32.xlu0 %v3685
        %v3687 = vpop.xlane.xlu0 %3686
        %v3688 = vmul.f32 %v3687, 0.00390625
        %v3689 = vmul.f32 %v3682, %v3682
        %v3690 = vsub.f32 %v3688, %v3689
        %v3691 = vmax.f32 %v3690, 0.0
        %v3692 = vsub.f32 %v3673, %v3682
        %v3693 = vsub.f32 %v3675, %v3682
        %v3694 = vadd.f32 %v3691, 1e-05
        %v3695 = vrsqrt.pop %v3694
        %v3696 = vmul.f32 %v3692, %v3695
        %v3697 = vmul.f32 %v3693, %v3695
        %v3699 = vlaneseq
        %v3700 = vshrl.u32 %v3699, 7
        %v3701 = vsub.s32 0, %v3700
        %v3702 = vrot.slane %v3543, %v3701
        %v3703 = vlaneseq
        %v3704 = vshrl.u32 %v3703, 7
        %v3705 = vsub.s32 1, %v3704
        %v3706 = vrot.slane %v3543, %v3705
        %v3709 = vmul.f32 %v3696, %v3702
        %v3710 = vmul.f32 %v3697, %v3706
        %v3712 = vlaneseq
        %v3713 = vshrl.u32 %v3712, 7
        %v3714 = vsub.s32 0, %v3713
        %v3715 = vrot.slane %v3544, %v3714
        %v3716 = vlaneseq
        %v3717 = vshrl.u32 %v3716, 7
        %v3718 = vsub.s32 1, %v3717
        %v3719 = vrot.slane %v3544, %v3718
        %v3722 = vadd.f32 %v3709, %v3715
        %v3723 = vadd.f32 %v3710, %v3719
        %v3724 = vld [vmem:[%s63] sm:$0xff]
        %v3725 = vld [vmem:[%s63 + $0x8] sm:$0xff]
        %v3726 = vld [vmem:[%s63 + $0x10] sm:$0xff]
        %v3727 = vld [vmem:[%s63 + $0x18] sm:$0xff]
        %v3728 = vld [vmem:[%s63 + $0x20] sm:$0xff]
        %v3729 = vld [vmem:[%s63 + $0x28] sm:$0xff]
        %v3730 = vld [vmem:[%s63 + $0x30] sm:$0xff]
        %v3731 = vld [vmem:[%s63 + $0x38] sm:$0xff]
        %v3732 = vld [vmem:[%s63 + $0x40] sm:$0xff]
        %v3733 = vld [vmem:[%s63 + $0x48] sm:$0xff]
        %v3734 = vld [vmem:[%s63 + $0x50] sm:$0xff]
        %v3735 = vld [vmem:[%s63 + $0x58] sm:$0xff]
        %v3736 = vld [vmem:[%s63 + $0x60] sm:$0xff]
        %v3737 = vld [vmem:[%s63 + $0x68] sm:$0xff]
        %v3738 = vld [vmem:[%s63 + $0x70] sm:$0xff]
        %v3739 = vld [vmem:[%s63 + $0x78] sm:$0xff]
        %v3740 = vld [vmem:[%s63 + $0x80] sm:$0xff]
        %v3741 = vld [vmem:[%s63 + $0x88] sm:$0xff]
        %v3742 = vld [vmem:[%s63 + $0x90] sm:$0xff]
        %v3743 = vld [vmem:[%s63 + $0x98] sm:$0xff]
        %v3744 = vld [vmem:[%s63 + $0xa0] sm:$0xff]
        %v3745 = vld [vmem:[%s63 + $0xa8] sm:$0xff]
        %v3746 = vld [vmem:[%s63 + $0xb0] sm:$0xff]
        %v3747 = vld [vmem:[%s63 + $0xb8] sm:$0xff]
        %v3748 = vld [vmem:[%s63 + $0xc0] sm:$0xff]
        %v3749 = vld [vmem:[%s63 + $0xc8] sm:$0xff]
        %v3750 = vld [vmem:[%s63 + $0xd0] sm:$0xff]
        %v3751 = vld [vmem:[%s63 + $0xd8] sm:$0xff]
        %v3752 = vld [vmem:[%s63 + $0xe0] sm:$0xff]
        %v3753 = vld [vmem:[%s63 + $0xe8] sm:$0xff]
        %v3754 = vld [vmem:[%s63 + $0xf0] sm:$0xff]
        %v3755 = vld [vmem:[%s63 + $0xf8] sm:$0xff]
        %v3756 = vld [vmem:[%s63 + $0x100] sm:$0xff]
        %v3757 = vld [vmem:[%s63 + $0x108] sm:$0xff]
        %v3758 = vld [vmem:[%s63 + $0x110] sm:$0xff]
        %v3759 = vld [vmem:[%s63 + $0x118] sm:$0xff]
        %v3760 = vld [vmem:[%s63 + $0x120] sm:$0xff]
        %v3761 = vld [vmem:[%s63 + $0x128] sm:$0xff]
        %v3762 = vld [vmem:[%s63 + $0x130] sm:$0xff]
        %v3763 = vld [vmem:[%s63 + $0x138] sm:$0xff]
        %v3764 = vld [vmem:[%s63 + $0x140] sm:$0xff]
        %v3765 = vld [vmem:[%s63 + $0x148] sm:$0xff]
        %v3766 = vld [vmem:[%s63 + $0x150] sm:$0xff]
        %v3767 = vld [vmem:[%s63 + $0x158] sm:$0xff]
        %v3768 = vld [vmem:[%s63 + $0x160] sm:$0xff]
        %v3769 = vld [vmem:[%s63 + $0x168] sm:$0xff]
        %v3770 = vld [vmem:[%s63 + $0x170] sm:$0xff]
        %v3771 = vld [vmem:[%s63 + $0x178] sm:$0xff]
        %v3772 = vld [vmem:[%s63 + $0x180] sm:$0xff]
        %v3773 = vld [vmem:[%s63 + $0x188] sm:$0xff]
        %v3774 = vld [vmem:[%s63 + $0x190] sm:$0xff]
        %v3775 = vld [vmem:[%s63 + $0x198] sm:$0xff]
        %v3776 = vld [vmem:[%s63 + $0x1a0] sm:$0xff]
        %v3777 = vld [vmem:[%s63 + $0x1a8] sm:$0xff]
        %v3778 = vld [vmem:[%s63 + $0x1b0] sm:$0xff]
        %v3779 = vld [vmem:[%s63 + $0x1b8] sm:$0xff]
        %v3780 = vld [vmem:[%s63 + $0x1c0] sm:$0xff]
        %v3781 = vld [vmem:[%s63 + $0x1c8] sm:$0xff]
        %v3782 = vld [vmem:[%s63 + $0x1d0] sm:$0xff]
        %v3783 = vld [vmem:[%s63 + $0x1d8] sm:$0xff]
        %v3784 = vld [vmem:[%s63 + $0x1e0] sm:$0xff]
        %v3785 = vld [vmem:[%s63 + $0x1e8] sm:$0xff]
        %v3786 = vld [vmem:[%s63 + $0x1f0] sm:$0xff]
        %v3787 = vld [vmem:[%s63 + $0x1f8] sm:$0xff]
        %v3788 = vld [vmem:[%s63 + $0x200] sm:$0xff]
        %v3789 = vld [vmem:[%s63 + $0x208] sm:$0xff]
        %v3790 = vld [vmem:[%s63 + $0x210] sm:$0xff]
        %v3791 = vld [vmem:[%s63 + $0x218] sm:$0xff]
        %v3792 = vld [vmem:[%s63 + $0x220] sm:$0xff]
        %v3793 = vld [vmem:[%s63 + $0x228] sm:$0xff]
        %v3794 = vld [vmem:[%s63 + $0x230] sm:$0xff]
        %v3795 = vld [vmem:[%s63 + $0x238] sm:$0xff]
        %v3796 = vld [vmem:[%s63 + $0x240] sm:$0xff]
        %v3797 = vld [vmem:[%s63 + $0x248] sm:$0xff]
        %v3798 = vld [vmem:[%s63 + $0x250] sm:$0xff]
        %v3799 = vld [vmem:[%s63 + $0x258] sm:$0xff]
        %v3800 = vld [vmem:[%s63 + $0x260] sm:$0xff]
        %v3801 = vld [vmem:[%s63 + $0x268] sm:$0xff]
        %v3802 = vld [vmem:[%s63 + $0x270] sm:$0xff]
        %v3803 = vld [vmem:[%s63 + $0x278] sm:$0xff]
        %v3804 = vld [vmem:[%s63 + $0x280] sm:$0xff]
        %v3805 = vld [vmem:[%s63 + $0x288] sm:$0xff]
        %v3806 = vld [vmem:[%s63 + $0x290] sm:$0xff]
        %v3807 = vld [vmem:[%s63 + $0x298] sm:$0xff]
        %v3808 = vld [vmem:[%s63 + $0x2a0] sm:$0xff]
        %v3809 = vld [vmem:[%s63 + $0x2a8] sm:$0xff]
        %v3810 = vld [vmem:[%s63 + $0x2b0] sm:$0xff]
        %v3811 = vld [vmem:[%s63 + $0x2b8] sm:$0xff]
        %v3812 = vld [vmem:[%s63 + $0x2c0] sm:$0xff]
        %v3813 = vld [vmem:[%s63 + $0x2c8] sm:$0xff]
        %v3814 = vld [vmem:[%s63 + $0x2d0] sm:$0xff]
        %v3815 = vld [vmem:[%s63 + $0x2d8] sm:$0xff]
        %v3816 = vld [vmem:[%s63 + $0x2e0] sm:$0xff]
        %v3817 = vld [vmem:[%s63 + $0x2e8] sm:$0xff]
        %v3818 = vld [vmem:[%s63 + $0x2f0] sm:$0xff]
        %v3819 = vld [vmem:[%s63 + $0x2f8] sm:$0xff]
        %v3820 = vld [vmem:[%s63 + $0x300] sm:$0xff]
        %v3821 = vld [vmem:[%s63 + $0x308] sm:$0xff]
        %v3822 = vld [vmem:[%s63 + $0x310] sm:$0xff]
        %v3823 = vld [vmem:[%s63 + $0x318] sm:$0xff]
        %v3824 = vld [vmem:[%s63 + $0x320] sm:$0xff]
        %v3825 = vld [vmem:[%s63 + $0x328] sm:$0xff]
        %v3826 = vld [vmem:[%s63 + $0x330] sm:$0xff]
        %v3827 = vld [vmem:[%s63 + $0x338] sm:$0xff]
        %v3828 = vld [vmem:[%s63 + $0x340] sm:$0xff]
        %v3829 = vld [vmem:[%s63 + $0x348] sm:$0xff]
        %v3830 = vld [vmem:[%s63 + $0x350] sm:$0xff]
        %v3831 = vld [vmem:[%s63 + $0x358] sm:$0xff]
        %v3832 = vld [vmem:[%s63 + $0x360] sm:$0xff]
        %v3833 = vld [vmem:[%s63 + $0x368] sm:$0xff]
        %v3834 = vld [vmem:[%s63 + $0x370] sm:$0xff]
        %v3835 = vld [vmem:[%s63 + $0x378] sm:$0xff]
        %v3836 = vld [vmem:[%s63 + $0x380] sm:$0xff]
        %v3837 = vld [vmem:[%s63 + $0x388] sm:$0xff]
        %v3838 = vld [vmem:[%s63 + $0x390] sm:$0xff]
        %v3839 = vld [vmem:[%s63 + $0x398] sm:$0xff]
        %v3840 = vld [vmem:[%s63 + $0x3a0] sm:$0xff]
        %v3841 = vld [vmem:[%s63 + $0x3a8] sm:$0xff]
        %v3842 = vld [vmem:[%s63 + $0x3b0] sm:$0xff]
        %v3843 = vld [vmem:[%s63 + $0x3b8] sm:$0xff]
        %v3844 = vld [vmem:[%s63 + $0x3c0] sm:$0xff]
        %v3845 = vld [vmem:[%s63 + $0x3c8] sm:$0xff]
        %v3846 = vld [vmem:[%s63 + $0x3d0] sm:$0xff]
        %v3847 = vld [vmem:[%s63 + $0x3d8] sm:$0xff]
        %v3848 = vld [vmem:[%s63 + $0x3e0] sm:$0xff]
        %v3849 = vld [vmem:[%s63 + $0x3e8] sm:$0xff]
        %v3850 = vld [vmem:[%s63 + $0x3f0] sm:$0xff]
        %v3851 = vld [vmem:[%s63 + $0x3f8] sm:$0xff]
        %v3852 = vld [vmem:[%s65] sm:$0xff]
        %v3853 = vld [vmem:[%s67] sm:$0xff]
        %v3854 = vld [vmem:[%s69] sm:$0xff]
        %v3855 = vmax.f32 %v3722, 0.0
        %v3856 = vmax.f32 %v3723, 0.0
        %v3857 = vpack.c.bf16 %v3855, %v3855
        %v3858 = vpack.c.bf16 %v3856, %v3856
        %v3860 = vlaneseq
        %v3861 = vshrl.u32 %v3860, 7
        %v3862 = vsub.s32 0, %v3861
        %v3863 = vrot.slane %v3852, %v3862
        %v3864 = vlaneseq
        %v3865 = vshrl.u32 %v3864, 7
        %v3866 = vsub.s32 1, %v3865
        %v3867 = vrot.slane %v3852, %v3866
        %v3868 = vlaneseq
        %v3869 = vshrl.u32 %v3868, 7
        %v3870 = vsub.s32 2, %v3869
        %v3871 = vrot.slane %v3852, %v3870
        %v3872 = vlaneseq
        %v3873 = vshrl.u32 %v3872, 7
        %v3874 = vsub.s32 3, %v3873
        %v3875 = vrot.slane %v3852, %v3874
        %v3876 = vlaneseq
        %v3877 = vshrl.u32 %v3876, 7
        %v3878 = vsub.s32 4, %v3877
        %v3879 = vrot.slane %v3852, %v3878
        %v3880 = vlaneseq
        %v3881 = vshrl.u32 %v3880, 7
        %v3882 = vsub.s32 5, %v3881
        %v3883 = vrot.slane %v3852, %v3882
        %v3884 = vlaneseq
        %v3885 = vshrl.u32 %v3884, 7
        %v3886 = vsub.s32 6, %v3885
        %v3887 = vrot.slane %v3852, %v3886
        %v3888 = vlaneseq
        %v3889 = vshrl.u32 %v3888, 7
        %v3890 = vsub.s32 7, %v3889
        %v3891 = vrot.slane %v3852, %v3890
        %v4028 = vunpack.c.l.b16 %v3724
        %v4029 = vunpack.c.h.b16 %v3724
        %v4030 = vunpack.c.l.b16 %v3725
        %v4031 = vunpack.c.h.b16 %v3725
        %v4032 = vunpack.c.l.b16 %v3726
        %v4033 = vunpack.c.h.b16 %v3726
        %v4034 = vunpack.c.l.b16 %v3727
        %v4035 = vunpack.c.h.b16 %v3727
        %v4036 = vunpack.c.l.b16 %v3728
        %v4037 = vunpack.c.h.b16 %v3728
        %v4038 = vunpack.c.l.b16 %v3729
        %v4039 = vunpack.c.h.b16 %v3729
        %v4040 = vunpack.c.l.b16 %v3730
        %v4041 = vunpack.c.h.b16 %v3730
        %v4042 = vunpack.c.l.b16 %v3731
        %v4043 = vunpack.c.h.b16 %v3731
        %v4044 = vunpack.c.l.b16 %v3732
        %v4045 = vunpack.c.h.b16 %v3732
        %v4046 = vunpack.c.l.b16 %v3733
        %v4047 = vunpack.c.h.b16 %v3733
        %v4048 = vunpack.c.l.b16 %v3734
        %v4049 = vunpack.c.h.b16 %v3734
        %v4050 = vunpack.c.l.b16 %v3735
        %v4051 = vunpack.c.h.b16 %v3735
        %v4052 = vunpack.c.l.b16 %v3736
        %v4053 = vunpack.c.h.b16 %v3736
        %v4054 = vunpack.c.l.b16 %v3737
        %v4055 = vunpack.c.h.b16 %v3737
        %v4056 = vunpack.c.l.b16 %v3738
        %v4057 = vunpack.c.h.b16 %v3738
        %v4058 = vunpack.c.l.b16 %v3739
        %v4059 = vunpack.c.h.b16 %v3739
        %v4060 = vunpack.c.l.b16 %v3740
        %v4061 = vunpack.c.h.b16 %v3740
        %v4062 = vunpack.c.l.b16 %v3741
        %v4063 = vunpack.c.h.b16 %v3741
        %v4064 = vunpack.c.l.b16 %v3742
        %v4065 = vunpack.c.h.b16 %v3742
        %v4066 = vunpack.c.l.b16 %v3743
        %v4067 = vunpack.c.h.b16 %v3743
        %v4068 = vunpack.c.l.b16 %v3744
        %v4069 = vunpack.c.h.b16 %v3744
        %v4070 = vunpack.c.l.b16 %v3745
        %v4071 = vunpack.c.h.b16 %v3745
        %v4072 = vunpack.c.l.b16 %v3746
        %v4073 = vunpack.c.h.b16 %v3746
        %v4074 = vunpack.c.l.b16 %v3747
        %v4075 = vunpack.c.h.b16 %v3747
        %v4076 = vunpack.c.l.b16 %v3748
        %v4077 = vunpack.c.h.b16 %v3748
        %v4078 = vunpack.c.l.b16 %v3749
        %v4079 = vunpack.c.h.b16 %v3749
        %v4080 = vunpack.c.l.b16 %v3750
        %v4081 = vunpack.c.h.b16 %v3750
        %v4082 = vunpack.c.l.b16 %v3751
        %v4083 = vunpack.c.h.b16 %v3751
        %v4084 = vunpack.c.l.b16 %v3752
        %v4085 = vunpack.c.h.b16 %v3752
        %v4086 = vunpack.c.l.b16 %v3753
        %v4087 = vunpack.c.h.b16 %v3753
        %v4088 = vunpack.c.l.b16 %v3754
        %v4089 = vunpack.c.h.b16 %v3754
        %v4090 = vunpack.c.l.b16 %v3755
        %v4091 = vunpack.c.h.b16 %v3755
        %v4092 = vunpack.c.l.b16 %v3756
        %v4093 = vunpack.c.h.b16 %v3756
        %v4094 = vunpack.c.l.b16 %v3757
        %v4095 = vunpack.c.h.b16 %v3757
        %v4096 = vunpack.c.l.b16 %v3758
        %v4097 = vunpack.c.h.b16 %v3758
        %v4098 = vunpack.c.l.b16 %v3759
        %v4099 = vunpack.c.h.b16 %v3759
        %v4100 = vunpack.c.l.b16 %v3760
        %v4101 = vunpack.c.h.b16 %v3760
        %v4102 = vunpack.c.l.b16 %v3761
        %v4103 = vunpack.c.h.b16 %v3761
        %v4104 = vunpack.c.l.b16 %v3762
        %v4105 = vunpack.c.h.b16 %v3762
        %v4106 = vunpack.c.l.b16 %v3763
        %v4107 = vunpack.c.h.b16 %v3763
        %v4108 = vunpack.c.l.b16 %v3764
        %v4109 = vunpack.c.h.b16 %v3764
        %v4110 = vunpack.c.l.b16 %v3765
        %v4111 = vunpack.c.h.b16 %v3765
        %v4112 = vunpack.c.l.b16 %v3766
        %v4113 = vunpack.c.h.b16 %v3766
        %v4114 = vunpack.c.l.b16 %v3767
        %v4115 = vunpack.c.h.b16 %v3767
        %v4116 = vunpack.c.l.b16 %v3768
        %v4117 = vunpack.c.h.b16 %v3768
        %v4118 = vunpack.c.l.b16 %v3769
        %v4119 = vunpack.c.h.b16 %v3769
        %v4120 = vunpack.c.l.b16 %v3770
        %v4121 = vunpack.c.h.b16 %v3770
        %v4122 = vunpack.c.l.b16 %v3771
        %v4123 = vunpack.c.h.b16 %v3771
        %v4124 = vunpack.c.l.b16 %v3772
        %v4125 = vunpack.c.h.b16 %v3772
        %v4126 = vunpack.c.l.b16 %v3773
        %v4127 = vunpack.c.h.b16 %v3773
        %v4128 = vunpack.c.l.b16 %v3774
        %v4129 = vunpack.c.h.b16 %v3774
        %v4130 = vunpack.c.l.b16 %v3775
        %v4131 = vunpack.c.h.b16 %v3775
        %v4132 = vunpack.c.l.b16 %v3776
        %v4133 = vunpack.c.h.b16 %v3776
        %v4134 = vunpack.c.l.b16 %v3777
        %v4135 = vunpack.c.h.b16 %v3777
        %v4136 = vunpack.c.l.b16 %v3778
        %v4137 = vunpack.c.h.b16 %v3778
        %v4138 = vunpack.c.l.b16 %v3779
        %v4139 = vunpack.c.h.b16 %v3779
        %v4140 = vunpack.c.l.b16 %v3780
        %v4141 = vunpack.c.h.b16 %v3780
        %v4142 = vunpack.c.l.b16 %v3781
        %v4143 = vunpack.c.h.b16 %v3781
        %v4144 = vunpack.c.l.b16 %v3782
        %v4145 = vunpack.c.h.b16 %v3782
        %v4146 = vunpack.c.l.b16 %v3783
        %v4147 = vunpack.c.h.b16 %v3783
        %v4148 = vunpack.c.l.b16 %v3784
        %v4149 = vunpack.c.h.b16 %v3784
        %v4150 = vunpack.c.l.b16 %v3785
        %v4151 = vunpack.c.h.b16 %v3785
        %v4152 = vunpack.c.l.b16 %v3786
        %v4153 = vunpack.c.h.b16 %v3786
        %v4154 = vunpack.c.l.b16 %v3787
        %v4155 = vunpack.c.h.b16 %v3787
        %v4156 = vunpack.c.l.b16 %v3788
        %v4157 = vunpack.c.h.b16 %v3788
        %v4158 = vunpack.c.l.b16 %v3789
        %v4159 = vunpack.c.h.b16 %v3789
        %v4160 = vunpack.c.l.b16 %v3790
        %v4161 = vunpack.c.h.b16 %v3790
        %v4162 = vunpack.c.l.b16 %v3791
        %v4163 = vunpack.c.h.b16 %v3791
        %v4164 = vunpack.c.l.b16 %v3792
        %v4165 = vunpack.c.h.b16 %v3792
        %v4166 = vunpack.c.l.b16 %v3793
        %v4167 = vunpack.c.h.b16 %v3793
        %v4168 = vunpack.c.l.b16 %v3794
        %v4169 = vunpack.c.h.b16 %v3794
        %v4170 = vunpack.c.l.b16 %v3795
        %v4171 = vunpack.c.h.b16 %v3795
        %v4172 = vunpack.c.l.b16 %v3796
        %v4173 = vunpack.c.h.b16 %v3796
        %v4174 = vunpack.c.l.b16 %v3797
        %v4175 = vunpack.c.h.b16 %v3797
        %v4176 = vunpack.c.l.b16 %v3798
        %v4177 = vunpack.c.h.b16 %v3798
        %v4178 = vunpack.c.l.b16 %v3799
        %v4179 = vunpack.c.h.b16 %v3799
        %v4180 = vunpack.c.l.b16 %v3800
        %v4181 = vunpack.c.h.b16 %v3800
        %v4182 = vunpack.c.l.b16 %v3801
        %v4183 = vunpack.c.h.b16 %v3801
        %v4184 = vunpack.c.l.b16 %v3802
        %v4185 = vunpack.c.h.b16 %v3802
        %v4186 = vunpack.c.l.b16 %v3803
        %v4187 = vunpack.c.h.b16 %v3803
        %v4188 = vunpack.c.l.b16 %v3804
        %v4189 = vunpack.c.h.b16 %v3804
        %v4190 = vunpack.c.l.b16 %v3805
        %v4191 = vunpack.c.h.b16 %v3805
        %v4192 = vunpack.c.l.b16 %v3806
        %v4193 = vunpack.c.h.b16 %v3806
        %v4194 = vunpack.c.l.b16 %v3807
        %v4195 = vunpack.c.h.b16 %v3807
        %v4196 = vunpack.c.l.b16 %v3808
        %v4197 = vunpack.c.h.b16 %v3808
        %v4198 = vunpack.c.l.b16 %v3809
        %v4199 = vunpack.c.h.b16 %v3809
        %v4200 = vunpack.c.l.b16 %v3810
        %v4201 = vunpack.c.h.b16 %v3810
        %v4202 = vunpack.c.l.b16 %v3811
        %v4203 = vunpack.c.h.b16 %v3811
        %v4204 = vunpack.c.l.b16 %v3812
        %v4205 = vunpack.c.h.b16 %v3812
        %v4206 = vunpack.c.l.b16 %v3813
        %v4207 = vunpack.c.h.b16 %v3813
        %v4208 = vunpack.c.l.b16 %v3814
        %v4209 = vunpack.c.h.b16 %v3814
        %v4210 = vunpack.c.l.b16 %v3815
        %v4211 = vunpack.c.h.b16 %v3815
        %v4212 = vunpack.c.l.b16 %v3816
        %v4213 = vunpack.c.h.b16 %v3816
        %v4214 = vunpack.c.l.b16 %v3817
        %v4215 = vunpack.c.h.b16 %v3817
        %v4216 = vunpack.c.l.b16 %v3818
        %v4217 = vunpack.c.h.b16 %v3818
        %v4218 = vunpack.c.l.b16 %v3819
        %v4219 = vunpack.c.h.b16 %v3819
        %v4220 = vunpack.c.l.b16 %v3820
        %v4221 = vunpack.c.h.b16 %v3820
        %v4222 = vunpack.c.l.b16 %v3821
        %v4223 = vunpack.c.h.b16 %v3821
        %v4224 = vunpack.c.l.b16 %v3822
        %v4225 = vunpack.c.h.b16 %v3822
        %v4226 = vunpack.c.l.b16 %v3823
        %v4227 = vunpack.c.h.b16 %v3823
        %v4228 = vunpack.c.l.b16 %v3824
        %v4229 = vunpack.c.h.b16 %v3824
        %v4230 = vunpack.c.l.b16 %v3825
        %v4231 = vunpack.c.h.b16 %v3825
        %v4232 = vunpack.c.l.b16 %v3826
        %v4233 = vunpack.c.h.b16 %v3826
        %v4234 = vunpack.c.l.b16 %v3827
        %v4235 = vunpack.c.h.b16 %v3827
        %v4236 = vunpack.c.l.b16 %v3828
        %v4237 = vunpack.c.h.b16 %v3828
        %v4238 = vunpack.c.l.b16 %v3829
        %v4239 = vunpack.c.h.b16 %v3829
        %v4240 = vunpack.c.l.b16 %v3830
        %v4241 = vunpack.c.h.b16 %v3830
        %v4242 = vunpack.c.l.b16 %v3831
        %v4243 = vunpack.c.h.b16 %v3831
        %v4244 = vunpack.c.l.b16 %v3832
        %v4245 = vunpack.c.h.b16 %v3832
        %v4246 = vunpack.c.l.b16 %v3833
        %v4247 = vunpack.c.h.b16 %v3833
        %v4248 = vunpack.c.l.b16 %v3834
        %v4249 = vunpack.c.h.b16 %v3834
        %v4250 = vunpack.c.l.b16 %v3835
        %v4251 = vunpack.c.h.b16 %v3835
        %v4252 = vunpack.c.l.b16 %v3836
        %v4253 = vunpack.c.h.b16 %v3836
        %v4254 = vunpack.c.l.b16 %v3837
        %v4255 = vunpack.c.h.b16 %v3837
        %v4256 = vunpack.c.l.b16 %v3838
        %v4257 = vunpack.c.h.b16 %v3838
        %v4258 = vunpack.c.l.b16 %v3839
        %v4259 = vunpack.c.h.b16 %v3839
        %v4260 = vunpack.c.l.b16 %v3840
        %v4261 = vunpack.c.h.b16 %v3840
        %v4262 = vunpack.c.l.b16 %v3841
        %v4263 = vunpack.c.h.b16 %v3841
        %v4264 = vunpack.c.l.b16 %v3842
        %v4265 = vunpack.c.h.b16 %v3842
        %v4266 = vunpack.c.l.b16 %v3843
        %v4267 = vunpack.c.h.b16 %v3843
        %v4268 = vunpack.c.l.b16 %v3844
        %v4269 = vunpack.c.h.b16 %v3844
        %v4270 = vunpack.c.l.b16 %v3845
        %v4271 = vunpack.c.h.b16 %v3845
        %v4272 = vunpack.c.l.b16 %v3846
        %v4273 = vunpack.c.h.b16 %v3846
        %v4274 = vunpack.c.l.b16 %v3847
        %v4275 = vunpack.c.h.b16 %v3847
        %v4276 = vunpack.c.l.b16 %v3848
        %v4277 = vunpack.c.h.b16 %v3848
        %v4278 = vunpack.c.l.b16 %v3849
        %v4279 = vunpack.c.h.b16 %v3849
        %v4280 = vunpack.c.l.b16 %v3850
        %v4281 = vunpack.c.h.b16 %v3850
        %v4282 = vunpack.c.l.b16 %v3851
        %v4283 = vunpack.c.h.b16 %v3851
        %v4284 = vpack.c.b16 %v4036, %v4028
        %v4285 = vpack.c.b16 %v4037, %v4029
        %v4286 = vpack.c.b16 %v4038, %v4030
        %v4287 = vpack.c.b16 %v4039, %v4031
        %v4288 = vpack.c.b16 %v4040, %v4032
        %v4289 = vpack.c.b16 %v4041, %v4033
        %v4290 = vpack.c.b16 %v4042, %v4034
        %v4291 = vpack.c.b16 %v4043, %v4035
        %v4292 = vpack.c.b16 %v4052, %v4044
        %v4293 = vpack.c.b16 %v4053, %v4045
        %v4294 = vpack.c.b16 %v4054, %v4046
        %v4295 = vpack.c.b16 %v4055, %v4047
        %v4296 = vpack.c.b16 %v4056, %v4048
        %v4297 = vpack.c.b16 %v4057, %v4049
        %v4298 = vpack.c.b16 %v4058, %v4050
        %v4299 = vpack.c.b16 %v4059, %v4051
        %v4300 = vpack.c.b16 %v4068, %v4060
        %v4301 = vpack.c.b16 %v4069, %v4061
        %v4302 = vpack.c.b16 %v4070, %v4062
        %v4303 = vpack.c.b16 %v4071, %v4063
        %v4304 = vpack.c.b16 %v4072, %v4064
        %v4305 = vpack.c.b16 %v4073, %v4065
        %v4306 = vpack.c.b16 %v4074, %v4066
        %v4307 = vpack.c.b16 %v4075, %v4067
        %v4308 = vpack.c.b16 %v4084, %v4076
        %v4309 = vpack.c.b16 %v4085, %v4077
        %v4310 = vpack.c.b16 %v4086, %v4078
        %v4311 = vpack.c.b16 %v4087, %v4079
        %v4312 = vpack.c.b16 %v4088, %v4080
        %v4313 = vpack.c.b16 %v4089, %v4081
        %v4314 = vpack.c.b16 %v4090, %v4082
        %v4315 = vpack.c.b16 %v4091, %v4083
        %v4316 = vpack.c.b16 %v4100, %v4092
        %v4317 = vpack.c.b16 %v4101, %v4093
        %v4318 = vpack.c.b16 %v4102, %v4094
        %v4319 = vpack.c.b16 %v4103, %v4095
        %v4320 = vpack.c.b16 %v4104, %v4096
        %v4321 = vpack.c.b16 %v4105, %v4097
        %v4322 = vpack.c.b16 %v4106, %v4098
        %v4323 = vpack.c.b16 %v4107, %v4099
        %v4324 = vpack.c.b16 %v4116, %v4108
        %v4325 = vpack.c.b16 %v4117, %v4109
        %v4326 = vpack.c.b16 %v4118, %v4110
        %v4327 = vpack.c.b16 %v4119, %v4111
        %v4328 = vpack.c.b16 %v4120, %v4112
        %v4329 = vpack.c.b16 %v4121, %v4113
        %v4330 = vpack.c.b16 %v4122, %v4114
        %v4331 = vpack.c.b16 %v4123, %v4115
        %v4332 = vpack.c.b16 %v4132, %v4124
        %v4333 = vpack.c.b16 %v4133, %v4125
        %v4334 = vpack.c.b16 %v4134, %v4126
        %v4335 = vpack.c.b16 %v4135, %v4127
        %v4336 = vpack.c.b16 %v4136, %v4128
        %v4337 = vpack.c.b16 %v4137, %v4129
        %v4338 = vpack.c.b16 %v4138, %v4130
        %v4339 = vpack.c.b16 %v4139, %v4131
        %v4340 = vpack.c.b16 %v4148, %v4140
        %v4341 = vpack.c.b16 %v4149, %v4141
        %v4342 = vpack.c.b16 %v4150, %v4142
        %v4343 = vpack.c.b16 %v4151, %v4143
        %v4344 = vpack.c.b16 %v4152, %v4144
        %v4345 = vpack.c.b16 %v4153, %v4145
        %v4346 = vpack.c.b16 %v4154, %v4146
        %v4347 = vpack.c.b16 %v4155, %v4147
        %v4348 = vpack.c.b16 %v4164, %v4156
        %v4349 = vpack.c.b16 %v4165, %v4157
        %v4350 = vpack.c.b16 %v4166, %v4158
        %v4351 = vpack.c.b16 %v4167, %v4159
        %v4352 = vpack.c.b16 %v4168, %v4160
        %v4353 = vpack.c.b16 %v4169, %v4161
        %v4354 = vpack.c.b16 %v4170, %v4162
        %v4355 = vpack.c.b16 %v4171, %v4163
        %v4356 = vpack.c.b16 %v4180, %v4172
        %v4357 = vpack.c.b16 %v4181, %v4173
        %v4358 = vpack.c.b16 %v4182, %v4174
        %v4359 = vpack.c.b16 %v4183, %v4175
        %v4360 = vpack.c.b16 %v4184, %v4176
        %v4361 = vpack.c.b16 %v4185, %v4177
        %v4362 = vpack.c.b16 %v4186, %v4178
        %v4363 = vpack.c.b16 %v4187, %v4179
        %v4364 = vpack.c.b16 %v4196, %v4188
        %v4365 = vpack.c.b16 %v4197, %v4189
        %v4366 = vpack.c.b16 %v4198, %v4190
        %v4367 = vpack.c.b16 %v4199, %v4191
        %v4368 = vpack.c.b16 %v4200, %v4192
        %v4369 = vpack.c.b16 %v4201, %v4193
        %v4370 = vpack.c.b16 %v4202, %v4194
        %v4371 = vpack.c.b16 %v4203, %v4195
        %v4372 = vpack.c.b16 %v4212, %v4204
        %v4373 = vpack.c.b16 %v4213, %v4205
        %v4374 = vpack.c.b16 %v4214, %v4206
        %v4375 = vpack.c.b16 %v4215, %v4207
        %v4376 = vpack.c.b16 %v4216, %v4208
        %v4377 = vpack.c.b16 %v4217, %v4209
        %v4378 = vpack.c.b16 %v4218, %v4210
        %v4379 = vpack.c.b16 %v4219, %v4211
        %v4380 = vpack.c.b16 %v4228, %v4220
        %v4381 = vpack.c.b16 %v4229, %v4221
        %v4382 = vpack.c.b16 %v4230, %v4222
        %v4383 = vpack.c.b16 %v4231, %v4223
        %v4384 = vpack.c.b16 %v4232, %v4224
        %v4385 = vpack.c.b16 %v4233, %v4225
        %v4386 = vpack.c.b16 %v4234, %v4226
        %v4387 = vpack.c.b16 %v4235, %v4227
        %v4388 = vpack.c.b16 %v4244, %v4236
        %v4389 = vpack.c.b16 %v4245, %v4237
        %v4390 = vpack.c.b16 %v4246, %v4238
        %v4391 = vpack.c.b16 %v4247, %v4239
        %v4392 = vpack.c.b16 %v4248, %v4240
        %v4393 = vpack.c.b16 %v4249, %v4241
        %v4394 = vpack.c.b16 %v4250, %v4242
        %v4395 = vpack.c.b16 %v4251, %v4243
        %v4396 = vpack.c.b16 %v4260, %v4252
        %v4397 = vpack.c.b16 %v4261, %v4253
        %v4398 = vpack.c.b16 %v4262, %v4254
        %v4399 = vpack.c.b16 %v4263, %v4255
        %v4400 = vpack.c.b16 %v4264, %v4256
        %v4401 = vpack.c.b16 %v4265, %v4257
        %v4402 = vpack.c.b16 %v4266, %v4258
        %v4403 = vpack.c.b16 %v4267, %v4259
        %v4404 = vpack.c.b16 %v4276, %v4268
        %v4405 = vpack.c.b16 %v4277, %v4269
        %v4406 = vpack.c.b16 %v4278, %v4270
        %v4407 = vpack.c.b16 %v4279, %v4271
        %v4408 = vpack.c.b16 %v4280, %v4272
        %v4409 = vpack.c.b16 %v4281, %v4273
        %v4410 = vpack.c.b16 %v4282, %v4274
        %v4411 = vpack.c.b16 %v4283, %v4275
        %4540 = vmatprep.subr.bf16.mxu0 %v4285
        %4541 = vmatpush1.bf16.msra.mxu0 %v4284
        %4542 = vmatprep.subr.bf16.mxu0 %v4293
        %4543 = vmatpush1.bf16.msra.mxu0 %v4292
        %4544 = vmatprep.subr.bf16.mxu0 %v4301
        %4545 = vmatpush1.bf16.msra.mxu0 %v4300
        %4546 = vmatprep.subr.bf16.mxu0 %v4309
        %4547 = vmatpush1.bf16.msra.mxu0 %v4308
        %4548 = vmatprep.subr.bf16.mxu0 %v4317
        %4549 = vmatpush1.bf16.msra.mxu0 %v4316
        %4550 = vmatprep.subr.bf16.mxu0 %v4325
        %4551 = vmatpush1.bf16.msra.mxu0 %v4324
        %4552 = vmatprep.subr.bf16.mxu0 %v4333
        %4553 = vmatpush1.bf16.msra.mxu0 %v4332
        %4554 = vmatprep.subr.bf16.mxu0 %v4341
        %4555 = vmatpush1.bf16.msra.mxu0 %v4340
        %4556 = vmatprep.subr.bf16.mxu0 %v4349
        %4557 = vmatpush1.bf16.msra.mxu0 %v4348
        %4558 = vmatprep.subr.bf16.mxu0 %v4357
        %4559 = vmatpush1.bf16.msra.mxu0 %v4356
        %4560 = vmatprep.subr.bf16.mxu0 %v4365
        %4561 = vmatpush1.bf16.msra.mxu0 %v4364
        %4562 = vmatprep.subr.bf16.mxu0 %v4373
        %4563 = vmatpush1.bf16.msra.mxu0 %v4372
        %4564 = vmatprep.subr.bf16.mxu0 %v4381
        %4565 = vmatpush1.bf16.msra.mxu0 %v4380
        %4566 = vmatprep.subr.bf16.mxu0 %v4389
        %4567 = vmatpush1.bf16.msra.mxu0 %v4388
        %4568 = vmatprep.subr.bf16.mxu0 %v4397
        %4569 = vmatpush1.bf16.msra.mxu0 %v4396
        %4570 = vmatprep.subr.bf16.mxu0 %v4405
        %4571 = vmatpush1.bf16.msra.mxu0 %v4404
        %4572 = vmatprep.mubr.bf16.mxu0 %v3858
        %4573 = vmatmul.mubr.bf16.gmra.mrb[0].mxu0 %v3857
        %v4574 = vpop.f32.mrb[0].mxu0
        %v4575 = vadd.f32 %v3863, %v4574
        %v4576 = vpop.f32.mrb[0].mxu0
        %v4577 = vadd.f32 %v3867, %v4576
        %v4578 = vpop.f32.mrb[0].mxu0
        %v4579 = vpop.f32.mrb[0].mxu0
        %4580 = vdwg.mxu0
        %4581 = vmatprep.subr.bf16.mxu0 %v4287
        %4582 = vmatpush1.bf16.msra.mxu0 %v4286
        %4583 = vmatprep.subr.bf16.mxu0 %v4295
        %4584 = vmatpush1.bf16.msra.mxu0 %v4294
        %4585 = vmatprep.subr.bf16.mxu0 %v4303
        %4586 = vmatpush1.bf16.msra.mxu0 %v4302
        %4587 = vmatprep.subr.bf16.mxu0 %v4311
        %4588 = vmatpush1.bf16.msra.mxu0 %v4310
        %4589 = vmatprep.subr.bf16.mxu0 %v4319
        %4590 = vmatpush1.bf16.msra.mxu0 %v4318
        %4591 = vmatprep.subr.bf16.mxu0 %v4327
        %4592 = vmatpush1.bf16.msra.mxu0 %v4326
        %4593 = vmatprep.subr.bf16.mxu0 %v4335
        %4594 = vmatpush1.bf16.msra.mxu0 %v4334
        %4595 = vmatprep.subr.bf16.mxu0 %v4343
        %4596 = vmatpush1.bf16.msra.mxu0 %v4342
        %4597 = vmatprep.subr.bf16.mxu0 %v4351
        %4598 = vmatpush1.bf16.msra.mxu0 %v4350
        %4599 = vmatprep.subr.bf16.mxu0 %v4359
        %4600 = vmatpush1.bf16.msra.mxu0 %v4358
        %4601 = vmatprep.subr.bf16.mxu0 %v4367
        %4602 = vmatpush1.bf16.msra.mxu0 %v4366
        %4603 = vmatprep.subr.bf16.mxu0 %v4375
        %4604 = vmatpush1.bf16.msra.mxu0 %v4374
        %4605 = vmatprep.subr.bf16.mxu0 %v4383
        %4606 = vmatpush1.bf16.msra.mxu0 %v4382
        %4607 = vmatprep.subr.bf16.mxu0 %v4391
        %4608 = vmatpush1.bf16.msra.mxu0 %v4390
        %4609 = vmatprep.subr.bf16.mxu0 %v4399
        %4610 = vmatpush1.bf16.msra.mxu0 %v4398
        %4611 = vmatprep.subr.bf16.mxu0 %v4407
        %4612 = vmatpush1.bf16.msra.mxu0 %v4406
        %4613 = vmatprep.mubr.bf16.mxu0 %v3858
        %4614 = vmatmul.mubr.bf16.gmra.mrb[0].mxu0 %v3857
        %v4615 = vpop.f32.mrb[0].mxu0
        %v4616 = vadd.f32 %v3871, %v4615
        %v4617 = vpop.f32.mrb[0].mxu0
        %v4618 = vadd.f32 %v3875, %v4617
        %v4619 = vpop.f32.mrb[0].mxu0
        %v4620 = vpop.f32.mrb[0].mxu0
        %4621 = vdwg.mxu0
        %4622 = vmatprep.subr.bf16.mxu0 %v4289
        %4623 = vmatpush1.bf16.msra.mxu0 %v4288
        %4624 = vmatprep.subr.bf16.mxu0 %v4297
        %4625 = vmatpush1.bf16.msra.mxu0 %v4296
        %4626 = vmatprep.subr.bf16.mxu0 %v4305
        %4627 = vmatpush1.bf16.msra.mxu0 %v4304
        %4628 = vmatprep.subr.bf16.mxu0 %v4313
        %4629 = vmatpush1.bf16.msra.mxu0 %v4312
        %4630 = vmatprep.subr.bf16.mxu0 %v4321
        %4631 = vmatpush1.bf16.msra.mxu0 %v4320
        %4632 = vmatprep.subr.bf16.mxu0 %v4329
        %4633 = vmatpush1.bf16.msra.mxu0 %v4328
        %4634 = vmatprep.subr.bf16.mxu0 %v4337
        %4635 = vmatpush1.bf16.msra.mxu0 %v4336
        %4636 = vmatprep.subr.bf16.mxu0 %v4345
        %4637 = vmatpush1.bf16.msra.mxu0 %v4344
        %4638 = vmatprep.subr.bf16.mxu0 %v4353
        %4639 = vmatpush1.bf16.msra.mxu0 %v4352
        %4640 = vmatprep.subr.bf16.mxu0 %v4361
        %4641 = vmatpush1.bf16.msra.mxu0 %v4360
        %4642 = vmatprep.subr.bf16.mxu0 %v4369
        %4643 = vmatpush1.bf16.msra.mxu0 %v4368
        %4644 = vmatprep.subr.bf16.mxu0 %v4377
        %4645 = vmatpush1.bf16.msra.mxu0 %v4376
        %4646 = vmatprep.subr.bf16.mxu0 %v4385
        %4647 = vmatpush1.bf16.msra.mxu0 %v4384
        %4648 = vmatprep.subr.bf16.mxu0 %v4393
        %4649 = vmatpush1.bf16.msra.mxu0 %v4392
        %4650 = vmatprep.subr.bf16.mxu0 %v4401
        %4651 = vmatpush1.bf16.msra.mxu0 %v4400
        %4652 = vmatprep.subr.bf16.mxu0 %v4409
        %4653 = vmatpush1.bf16.msra.mxu0 %v4408
        %4654 = vmatprep.mubr.bf16.mxu0 %v3858
        %4655 = vmatmul.mubr.bf16.gmra.mrb[0].mxu0 %v3857
        %v4656 = vpop.f32.mrb[0].mxu0
        %v4657 = vadd.f32 %v3879, %v4656
        %v4658 = vpop.f32.mrb[0].mxu0
        %v4659 = vadd.f32 %v3883, %v4658
        %v4660 = vpop.f32.mrb[0].mxu0
        %v4661 = vpop.f32.mrb[0].mxu0
        %4662 = vdwg.mxu0
        %4663 = vmatprep.subr.bf16.mxu0 %v4291
        %4664 = vmatpush1.bf16.msra.mxu0 %v4290
        %4665 = vmatprep.subr.bf16.mxu0 %v4299
        %4666 = vmatpush1.bf16.msra.mxu0 %v4298
        %4667 = vmatprep.subr.bf16.mxu0 %v4307
        %4668 = vmatpush1.bf16.msra.mxu0 %v4306
        %4669 = vmatprep.subr.bf16.mxu0 %v4315
        %4670 = vmatpush1.bf16.msra.mxu0 %v4314
        %4671 = vmatprep.subr.bf16.mxu0 %v4323
        %4672 = vmatpush1.bf16.msra.mxu0 %v4322
        %4673 = vmatprep.subr.bf16.mxu0 %v4331
        %4674 = vmatpush1.bf16.msra.mxu0 %v4330
        %4675 = vmatprep.subr.bf16.mxu0 %v4339
        %4676 = vmatpush1.bf16.msra.mxu0 %v4338
        %4677 = vmatprep.subr.bf16.mxu0 %v4347
        %4678 = vmatpush1.bf16.msra.mxu0 %v4346
        %4679 = vmatprep.subr.bf16.mxu0 %v4355
        %4680 = vmatpush1.bf16.msra.mxu0 %v4354
        %4681 = vmatprep.subr.bf16.mxu0 %v4363
        %4682 = vmatpush1.bf16.msra.mxu0 %v4362
        %4683 = vmatprep.subr.bf16.mxu0 %v4371
        %4684 = vmatpush1.bf16.msra.mxu0 %v4370
        %4685 = vmatprep.subr.bf16.mxu0 %v4379
        %4686 = vmatpush1.bf16.msra.mxu0 %v4378
        %4687 = vmatprep.subr.bf16.mxu0 %v4387
        %4688 = vmatpush1.bf16.msra.mxu0 %v4386
        %4689 = vmatprep.subr.bf16.mxu0 %v4395
        %4690 = vmatpush1.bf16.msra.mxu0 %v4394
        %4691 = vmatprep.subr.bf16.mxu0 %v4403
        %4692 = vmatpush1.bf16.msra.mxu0 %v4402
        %4693 = vmatprep.subr.bf16.mxu0 %v4411
        %4694 = vmatpush1.bf16.msra.mxu0 %v4410
        %4695 = vmatprep.mubr.bf16.mxu0 %v3858
        %4696 = vmatmul.mubr.bf16.gmra.mrb[0].mxu0 %v3857
        %v4697 = vpop.f32.mrb[0].mxu0
        %v4698 = vadd.f32 %v3887, %v4697
        %v4699 = vpop.f32.mrb[0].mxu0
        %v4700 = vadd.f32 %v3891, %v4699
        %v4701 = vpop.f32.mrb[0].mxu0
        %v4702 = vpop.f32.mrb[0].mxu0
        %4703 = vdwg.mxu0
        %v4704 = vadd.f32 %v4575, %v4577
        %v4705 = vadd.f32 %v4704, %v4616
        %v4706 = vadd.f32 %v4705, %v4618
        %v4707 = vadd.f32 %v4706, %v4657
        %v4708 = vadd.f32 %v4707, %v4659
        %v4709 = vadd.f32 %v4708, %v4698
        %v4710 = vadd.f32 %v4709, %v4700
        %4711 = vadd.xlane.f32.xlu0 %v4710
        %v4712 = vpop.xlane.xlu0 %4711
        %v4713 = vmul.f32 %v4712, 0.0009765625
        %v4714 = vmul.f32 %v4575, %v4575
        %v4715 = vmul.f32 %v4577, %v4577
        %v4716 = vmul.f32 %v4616, %v4616
        %v4717 = vmul.f32 %v4618, %v4618
        %v4718 = vmul.f32 %v4657, %v4657
        %v4719 = vmul.f32 %v4659, %v4659
        %v4720 = vmul.f32 %v4698, %v4698
        %v4721 = vmul.f32 %v4700, %v4700
        %v4722 = vadd.f32 %v4714, %v4715
        %v4723 = vadd.f32 %v4722, %v4716
        %v4724 = vadd.f32 %v4723, %v4717
        %v4725 = vadd.f32 %v4724, %v4718
        %v4726 = vadd.f32 %v4725, %v4719
        %v4727 = vadd.f32 %v4726, %v4720
        %v4728 = vadd.f32 %v4727, %v4721
        %4729 = vadd.xlane.f32.xlu0 %v4728
        %v4730 = vpop.xlane.xlu0 %4729
        %v4731 = vmul.f32 %v4730, 0.0009765625
        %v4732 = vmul.f32 %v4713, %v4713
        %v4733 = vsub.f32 %v4731, %v4732
        %v4734 = vmax.f32 %v4733, 0.0
        %v4735 = vsub.f32 %v4575, %v4713
        %v4736 = vsub.f32 %v4577, %v4713
        %v4737 = vsub.f32 %v4616, %v4713
        %v4738 = vsub.f32 %v4618, %v4713
        %v4739 = vsub.f32 %v4657, %v4713
        %v4740 = vsub.f32 %v4659, %v4713
        %v4741 = vsub.f32 %v4698, %v4713
        %v4742 = vsub.f32 %v4700, %v4713
        %v4743 = vadd.f32 %v4734, 1e-05
        %v4744 = vrsqrt.pop %v4743
        %v4745 = vmul.f32 %v4735, %v4744
        %v4746 = vmul.f32 %v4736, %v4744
        %v4747 = vmul.f32 %v4737, %v4744
        %v4748 = vmul.f32 %v4738, %v4744
        %v4749 = vmul.f32 %v4739, %v4744
        %v4750 = vmul.f32 %v4740, %v4744
        %v4751 = vmul.f32 %v4741, %v4744
        %v4752 = vmul.f32 %v4742, %v4744
        %v4754 = vlaneseq
        %v4755 = vshrl.u32 %v4754, 7
        %v4756 = vsub.s32 0, %v4755
        %v4757 = vrot.slane %v3853, %v4756
        %v4758 = vlaneseq
        %v4759 = vshrl.u32 %v4758, 7
        %v4760 = vsub.s32 1, %v4759
        %v4761 = vrot.slane %v3853, %v4760
        %v4762 = vlaneseq
        %v4763 = vshrl.u32 %v4762, 7
        %v4764 = vsub.s32 2, %v4763
        %v4765 = vrot.slane %v3853, %v4764
        %v4766 = vlaneseq
        %v4767 = vshrl.u32 %v4766, 7
        %v4768 = vsub.s32 3, %v4767
        %v4769 = vrot.slane %v3853, %v4768
        %v4770 = vlaneseq
        %v4771 = vshrl.u32 %v4770, 7
        %v4772 = vsub.s32 4, %v4771
        %v4773 = vrot.slane %v3853, %v4772
        %v4774 = vlaneseq
        %v4775 = vshrl.u32 %v4774, 7
        %v4776 = vsub.s32 5, %v4775
        %v4777 = vrot.slane %v3853, %v4776
        %v4778 = vlaneseq
        %v4779 = vshrl.u32 %v4778, 7
        %v4780 = vsub.s32 6, %v4779
        %v4781 = vrot.slane %v3853, %v4780
        %v4782 = vlaneseq
        %v4783 = vshrl.u32 %v4782, 7
        %v4784 = vsub.s32 7, %v4783
        %v4785 = vrot.slane %v3853, %v4784
        %v4794 = vmul.f32 %v4745, %v4757
        %v4795 = vmul.f32 %v4746, %v4761
        %v4796 = vmul.f32 %v4747, %v4765
        %v4797 = vmul.f32 %v4748, %v4769
        %v4798 = vmul.f32 %v4749, %v4773
        %v4799 = vmul.f32 %v4750, %v4777
        %v4800 = vmul.f32 %v4751, %v4781
        %v4801 = vmul.f32 %v4752, %v4785
        %v4803 = vlaneseq
        %v4804 = vshrl.u32 %v4803, 7
        %v4805 = vsub.s32 0, %v4804
        %v4806 = vrot.slane %v3854, %v4805
        %v4807 = vlaneseq
        %v4808 = vshrl.u32 %v4807, 7
        %v4809 = vsub.s32 1, %v4808
        %v4810 = vrot.slane %v3854, %v4809
        %v4811 = vlaneseq
        %v4812 = vshrl.u32 %v4811, 7
        %v4813 = vsub.s32 2, %v4812
        %v4814 = vrot.slane %v3854, %v4813
        %v4815 = vlaneseq
        %v4816 = vshrl.u32 %v4815, 7
        %v4817 = vsub.s32 3, %v4816
        %v4818 = vrot.slane %v3854, %v4817
        %v4819 = vlaneseq
        %v4820 = vshrl.u32 %v4819, 7
        %v4821 = vsub.s32 4, %v4820
        %v4822 = vrot.slane %v3854, %v4821
        %v4823 = vlaneseq
        %v4824 = vshrl.u32 %v4823, 7
        %v4825 = vsub.s32 5, %v4824
        %v4826 = vrot.slane %v3854, %v4825
        %v4827 = vlaneseq
        %v4828 = vshrl.u32 %v4827, 7
        %v4829 = vsub.s32 6, %v4828
        %v4830 = vrot.slane %v3854, %v4829
        %v4831 = vlaneseq
        %v4832 = vshrl.u32 %v4831, 7
        %v4833 = vsub.s32 7, %v4832
        %v4834 = vrot.slane %v3854, %v4833
        %v4843 = vadd.f32 %v4794, %v4806
        %v4844 = vadd.f32 %v4795, %v4810
        %v4845 = vadd.f32 %v4796, %v4814
        %v4846 = vadd.f32 %v4797, %v4818
        %v4847 = vadd.f32 %v4798, %v4822
        %v4848 = vadd.f32 %v4799, %v4826
        %v4849 = vadd.f32 %v4800, %v4830
        %v4850 = vadd.f32 %v4801, %v4834
        %v4851 = vld [vmem:[%s71] sm:$0xf]
        %v4852 = vld [vmem:[%s71 + $0x4] sm:$0xf]
        %v4853 = vld [vmem:[%s71 + $0x8] sm:$0xf]
        %v4854 = vld [vmem:[%s71 + $0xc] sm:$0xf]
        %v4855 = vld [vmem:[%s71 + $0x10] sm:$0xf]
        %v4856 = vld [vmem:[%s71 + $0x14] sm:$0xf]
        %v4857 = vld [vmem:[%s71 + $0x18] sm:$0xf]
        %v4858 = vld [vmem:[%s71 + $0x1c] sm:$0xf]
        %v4859 = vld [vmem:[%s71 + $0x20] sm:$0xf]
        %v4860 = vld [vmem:[%s71 + $0x24] sm:$0xf]
        %v4861 = vld [vmem:[%s71 + $0x28] sm:$0xf]
        %v4862 = vld [vmem:[%s71 + $0x2c] sm:$0xf]
        %v4863 = vld [vmem:[%s71 + $0x30] sm:$0xf]
        %v4864 = vld [vmem:[%s71 + $0x34] sm:$0xf]
        %v4865 = vld [vmem:[%s71 + $0x38] sm:$0xf]
        %v4866 = vld [vmem:[%s71 + $0x3c] sm:$0xf]
        %v4867 = vld [vmem:[%s71 + $0x40] sm:$0xf]
        %v4868 = vld [vmem:[%s71 + $0x44] sm:$0xf]
        %v4869 = vld [vmem:[%s71 + $0x48] sm:$0xf]
        %v4870 = vld [vmem:[%s71 + $0x4c] sm:$0xf]
        %v4871 = vld [vmem:[%s71 + $0x50] sm:$0xf]
        %v4872 = vld [vmem:[%s71 + $0x54] sm:$0xf]
        %v4873 = vld [vmem:[%s71 + $0x58] sm:$0xf]
        %v4874 = vld [vmem:[%s71 + $0x5c] sm:$0xf]
        %v4875 = vld [vmem:[%s71 + $0x60] sm:$0xf]
        %v4876 = vld [vmem:[%s71 + $0x64] sm:$0xf]
        %v4877 = vld [vmem:[%s71 + $0x68] sm:$0xf]
        %v4878 = vld [vmem:[%s71 + $0x6c] sm:$0xf]
        %v4879 = vld [vmem:[%s71 + $0x70] sm:$0xf]
        %v4880 = vld [vmem:[%s71 + $0x74] sm:$0xf]
        %v4881 = vld [vmem:[%s71 + $0x78] sm:$0xf]
        %v4882 = vld [vmem:[%s71 + $0x7c] sm:$0xf]
        %v4883 = vld [vmem:[%s71 + $0x80] sm:$0xf]
        %v4884 = vld [vmem:[%s71 + $0x84] sm:$0xf]
        %v4885 = vld [vmem:[%s71 + $0x88] sm:$0xf]
        %v4886 = vld [vmem:[%s71 + $0x8c] sm:$0xf]
        %v4887 = vld [vmem:[%s71 + $0x90] sm:$0xf]
        %v4888 = vld [vmem:[%s71 + $0x94] sm:$0xf]
        %v4889 = vld [vmem:[%s71 + $0x98] sm:$0xf]
        %v4890 = vld [vmem:[%s71 + $0x9c] sm:$0xf]
        %v4891 = vld [vmem:[%s71 + $0xa0] sm:$0xf]
        %v4892 = vld [vmem:[%s71 + $0xa4] sm:$0xf]
        %v4893 = vld [vmem:[%s71 + $0xa8] sm:$0xf]
        %v4894 = vld [vmem:[%s71 + $0xac] sm:$0xf]
        %v4895 = vld [vmem:[%s71 + $0xb0] sm:$0xf]
        %v4896 = vld [vmem:[%s71 + $0xb4] sm:$0xf]
        %v4897 = vld [vmem:[%s71 + $0xb8] sm:$0xf]
        %v4898 = vld [vmem:[%s71 + $0xbc] sm:$0xf]
        %v4899 = vld [vmem:[%s71 + $0xc0] sm:$0xf]
        %v4900 = vld [vmem:[%s71 + $0xc4] sm:$0xf]
        %v4901 = vld [vmem:[%s71 + $0xc8] sm:$0xf]
        %v4902 = vld [vmem:[%s71 + $0xcc] sm:$0xf]
        %v4903 = vld [vmem:[%s71 + $0xd0] sm:$0xf]
        %v4904 = vld [vmem:[%s71 + $0xd4] sm:$0xf]
        %v4905 = vld [vmem:[%s71 + $0xd8] sm:$0xf]
        %v4906 = vld [vmem:[%s71 + $0xdc] sm:$0xf]
        %v4907 = vld [vmem:[%s71 + $0xe0] sm:$0xf]
        %v4908 = vld [vmem:[%s71 + $0xe4] sm:$0xf]
        %v4909 = vld [vmem:[%s71 + $0xe8] sm:$0xf]
        %v4910 = vld [vmem:[%s71 + $0xec] sm:$0xf]
        %v4911 = vld [vmem:[%s71 + $0xf0] sm:$0xf]
        %v4912 = vld [vmem:[%s71 + $0xf4] sm:$0xf]
        %v4913 = vld [vmem:[%s71 + $0xf8] sm:$0xf]
        %v4914 = vld [vmem:[%s71 + $0xfc] sm:$0xf]
        %v4915 = vld [vmem:[%s71 + $0x100] sm:$0xf]
        %v4916 = vld [vmem:[%s71 + $0x104] sm:$0xf]
        %v4917 = vld [vmem:[%s71 + $0x108] sm:$0xf]
        %v4918 = vld [vmem:[%s71 + $0x10c] sm:$0xf]
        %v4919 = vld [vmem:[%s71 + $0x110] sm:$0xf]
        %v4920 = vld [vmem:[%s71 + $0x114] sm:$0xf]
        %v4921 = vld [vmem:[%s71 + $0x118] sm:$0xf]
        %v4922 = vld [vmem:[%s71 + $0x11c] sm:$0xf]
        %v4923 = vld [vmem:[%s71 + $0x120] sm:$0xf]
        %v4924 = vld [vmem:[%s71 + $0x124] sm:$0xf]
        %v4925 = vld [vmem:[%s71 + $0x128] sm:$0xf]
        %v4926 = vld [vmem:[%s71 + $0x12c] sm:$0xf]
        %v4927 = vld [vmem:[%s71 + $0x130] sm:$0xf]
        %v4928 = vld [vmem:[%s71 + $0x134] sm:$0xf]
        %v4929 = vld [vmem:[%s71 + $0x138] sm:$0xf]
        %v4930 = vld [vmem:[%s71 + $0x13c] sm:$0xf]
        %v4931 = vld [vmem:[%s71 + $0x140] sm:$0xf]
        %v4932 = vld [vmem:[%s71 + $0x144] sm:$0xf]
        %v4933 = vld [vmem:[%s71 + $0x148] sm:$0xf]
        %v4934 = vld [vmem:[%s71 + $0x14c] sm:$0xf]
        %v4935 = vld [vmem:[%s71 + $0x150] sm:$0xf]
        %v4936 = vld [vmem:[%s71 + $0x154] sm:$0xf]
        %v4937 = vld [vmem:[%s71 + $0x158] sm:$0xf]
        %v4938 = vld [vmem:[%s71 + $0x15c] sm:$0xf]
        %v4939 = vld [vmem:[%s71 + $0x160] sm:$0xf]
        %v4940 = vld [vmem:[%s71 + $0x164] sm:$0xf]
        %v4941 = vld [vmem:[%s71 + $0x168] sm:$0xf]
        %v4942 = vld [vmem:[%s71 + $0x16c] sm:$0xf]
        %v4943 = vld [vmem:[%s71 + $0x170] sm:$0xf]
        %v4944 = vld [vmem:[%s71 + $0x174] sm:$0xf]
        %v4945 = vld [vmem:[%s71 + $0x178] sm:$0xf]
        %v4946 = vld [vmem:[%s71 + $0x17c] sm:$0xf]
        %v4947 = vld [vmem:[%s71 + $0x180] sm:$0xf]
        %v4948 = vld [vmem:[%s71 + $0x184] sm:$0xf]
        %v4949 = vld [vmem:[%s71 + $0x188] sm:$0xf]
        %v4950 = vld [vmem:[%s71 + $0x18c] sm:$0xf]
        %v4951 = vld [vmem:[%s71 + $0x190] sm:$0xf]
        %v4952 = vld [vmem:[%s71 + $0x194] sm:$0xf]
        %v4953 = vld [vmem:[%s71 + $0x198] sm:$0xf]
        %v4954 = vld [vmem:[%s71 + $0x19c] sm:$0xf]
        %v4955 = vld [vmem:[%s71 + $0x1a0] sm:$0xf]
        %v4956 = vld [vmem:[%s71 + $0x1a4] sm:$0xf]
        %v4957 = vld [vmem:[%s71 + $0x1a8] sm:$0xf]
        %v4958 = vld [vmem:[%s71 + $0x1ac] sm:$0xf]
        %v4959 = vld [vmem:[%s71 + $0x1b0] sm:$0xf]
        %v4960 = vld [vmem:[%s71 + $0x1b4] sm:$0xf]
        %v4961 = vld [vmem:[%s71 + $0x1b8] sm:$0xf]
        %v4962 = vld [vmem:[%s71 + $0x1bc] sm:$0xf]
        %v4963 = vld [vmem:[%s71 + $0x1c0] sm:$0xf]
        %v4964 = vld [vmem:[%s71 + $0x1c4] sm:$0xf]
        %v4965 = vld [vmem:[%s71 + $0x1c8] sm:$0xf]
        %v4966 = vld [vmem:[%s71 + $0x1cc] sm:$0xf]
        %v4967 = vld [vmem:[%s71 + $0x1d0] sm:$0xf]
        %v4968 = vld [vmem:[%s71 + $0x1d4] sm:$0xf]
        %v4969 = vld [vmem:[%s71 + $0x1d8] sm:$0xf]
        %v4970 = vld [vmem:[%s71 + $0x1dc] sm:$0xf]
        %v4971 = vld [vmem:[%s71 + $0x1e0] sm:$0xf]
        %v4972 = vld [vmem:[%s71 + $0x1e4] sm:$0xf]
        %v4973 = vld [vmem:[%s71 + $0x1e8] sm:$0xf]
        %v4974 = vld [vmem:[%s71 + $0x1ec] sm:$0xf]
        %v4975 = vld [vmem:[%s71 + $0x1f0] sm:$0xf]
        %v4976 = vld [vmem:[%s71 + $0x1f4] sm:$0xf]
        %v4977 = vld [vmem:[%s71 + $0x1f8] sm:$0xf]
        %v4978 = vld [vmem:[%s71 + $0x1fc] sm:$0xf]
        %v4979 = vld [vmem:[%s73] sm:$0x1]
        %v4980 = vmax.f32 %v4843, 0.0
        %v4981 = vmax.f32 %v4844, 0.0
        %v4982 = vmax.f32 %v4845, 0.0
        %v4983 = vmax.f32 %v4846, 0.0
        %v4984 = vmax.f32 %v4847, 0.0
        %v4985 = vmax.f32 %v4848, 0.0
        %v4986 = vmax.f32 %v4849, 0.0
        %v4987 = vmax.f32 %v4850, 0.0
        %v4988 = vpack.c.bf16 %v4980, %v4980
        %v4989 = vpack.c.bf16 %v4981, %v4981
        %v4990 = vpack.c.bf16 %v4982, %v4982
        %v4991 = vpack.c.bf16 %v4983, %v4983
        %v4992 = vpack.c.bf16 %v4984, %v4984
        %v4993 = vpack.c.bf16 %v4985, %v4985
        %v4994 = vpack.c.bf16 %v4986, %v4986
        %v4995 = vpack.c.bf16 %v4987, %v4987
        %v4997 = vlaneseq
        %v4998 = vshrl.u32 %v4997, 7
        %v4999 = vsub.s32 0, %v4998
        %v5000 = vrot.slane %v4979, %v4999
        %v5130 = vunpack.c.l.b16 %v4851
        %v5131 = vunpack.c.l.b16 %v4852
        %v5132 = vunpack.c.l.b16 %v4853
        %v5133 = vunpack.c.l.b16 %v4854
        %v5134 = vunpack.c.l.b16 %v4855
        %v5135 = vunpack.c.l.b16 %v4856
        %v5136 = vunpack.c.l.b16 %v4857
        %v5137 = vunpack.c.l.b16 %v4858
        %v5138 = vunpack.c.l.b16 %v4859
        %v5139 = vunpack.c.l.b16 %v4860
        %v5140 = vunpack.c.l.b16 %v4861
        %v5141 = vunpack.c.l.b16 %v4862
        %v5142 = vunpack.c.l.b16 %v4863
        %v5143 = vunpack.c.l.b16 %v4864
        %v5144 = vunpack.c.l.b16 %v4865
        %v5145 = vunpack.c.l.b16 %v4866
        %v5146 = vunpack.c.l.b16 %v4867
        %v5147 = vunpack.c.l.b16 %v4868
        %v5148 = vunpack.c.l.b16 %v4869
        %v5149 = vunpack.c.l.b16 %v4870
        %v5150 = vunpack.c.l.b16 %v4871
        %v5151 = vunpack.c.l.b16 %v4872
        %v5152 = vunpack.c.l.b16 %v4873
        %v5153 = vunpack.c.l.b16 %v4874
        %v5154 = vunpack.c.l.b16 %v4875
        %v5155 = vunpack.c.l.b16 %v4876
        %v5156 = vunpack.c.l.b16 %v4877
        %v5157 = vunpack.c.l.b16 %v4878
        %v5158 = vunpack.c.l.b16 %v4879
        %v5159 = vunpack.c.l.b16 %v4880
        %v5160 = vunpack.c.l.b16 %v4881
        %v5161 = vunpack.c.l.b16 %v4882
        %v5162 = vunpack.c.l.b16 %v4883
        %v5163 = vunpack.c.l.b16 %v4884
        %v5164 = vunpack.c.l.b16 %v4885
        %v5165 = vunpack.c.l.b16 %v4886
        %v5166 = vunpack.c.l.b16 %v4887
        %v5167 = vunpack.c.l.b16 %v4888
        %v5168 = vunpack.c.l.b16 %v4889
        %v5169 = vunpack.c.l.b16 %v4890
        %v5170 = vunpack.c.l.b16 %v4891
        %v5171 = vunpack.c.l.b16 %v4892
        %v5172 = vunpack.c.l.b16 %v4893
        %v5173 = vunpack.c.l.b16 %v4894
        %v5174 = vunpack.c.l.b16 %v4895
        %v5175 = vunpack.c.l.b16 %v4896
        %v5176 = vunpack.c.l.b16 %v4897
        %v5177 = vunpack.c.l.b16 %v4898
        %v5178 = vunpack.c.l.b16 %v4899
        %v5179 = vunpack.c.l.b16 %v4900
        %v5180 = vunpack.c.l.b16 %v4901
        %v5181 = vunpack.c.l.b16 %v4902
        %v5182 = vunpack.c.l.b16 %v4903
        %v5183 = vunpack.c.l.b16 %v4904
        %v5184 = vunpack.c.l.b16 %v4905
        %v5185 = vunpack.c.l.b16 %v4906
        %v5186 = vunpack.c.l.b16 %v4907
        %v5187 = vunpack.c.l.b16 %v4908
        %v5188 = vunpack.c.l.b16 %v4909
        %v5189 = vunpack.c.l.b16 %v4910
        %v5190 = vunpack.c.l.b16 %v4911
        %v5191 = vunpack.c.l.b16 %v4912
        %v5192 = vunpack.c.l.b16 %v4913
        %v5193 = vunpack.c.l.b16 %v4914
        %v5194 = vunpack.c.l.b16 %v4915
        %v5195 = vunpack.c.l.b16 %v4916
        %v5196 = vunpack.c.l.b16 %v4917
        %v5197 = vunpack.c.l.b16 %v4918
        %v5198 = vunpack.c.l.b16 %v4919
        %v5199 = vunpack.c.l.b16 %v4920
        %v5200 = vunpack.c.l.b16 %v4921
        %v5201 = vunpack.c.l.b16 %v4922
        %v5202 = vunpack.c.l.b16 %v4923
        %v5203 = vunpack.c.l.b16 %v4924
        %v5204 = vunpack.c.l.b16 %v4925
        %v5205 = vunpack.c.l.b16 %v4926
        %v5206 = vunpack.c.l.b16 %v4927
        %v5207 = vunpack.c.l.b16 %v4928
        %v5208 = vunpack.c.l.b16 %v4929
        %v5209 = vunpack.c.l.b16 %v4930
        %v5210 = vunpack.c.l.b16 %v4931
        %v5211 = vunpack.c.l.b16 %v4932
        %v5212 = vunpack.c.l.b16 %v4933
        %v5213 = vunpack.c.l.b16 %v4934
        %v5214 = vunpack.c.l.b16 %v4935
        %v5215 = vunpack.c.l.b16 %v4936
        %v5216 = vunpack.c.l.b16 %v4937
        %v5217 = vunpack.c.l.b16 %v4938
        %v5218 = vunpack.c.l.b16 %v4939
        %v5219 = vunpack.c.l.b16 %v4940
        %v5220 = vunpack.c.l.b16 %v4941
        %v5221 = vunpack.c.l.b16 %v4942
        %v5222 = vunpack.c.l.b16 %v4943
        %v5223 = vunpack.c.l.b16 %v4944
        %v5224 = vunpack.c.l.b16 %v4945
        %v5225 = vunpack.c.l.b16 %v4946
        %v5226 = vunpack.c.l.b16 %v4947
        %v5227 = vunpack.c.l.b16 %v4948
        %v5228 = vunpack.c.l.b16 %v4949
        %v5229 = vunpack.c.l.b16 %v4950
        %v5230 = vunpack.c.l.b16 %v4951
        %v5231 = vunpack.c.l.b16 %v4952
        %v5232 = vunpack.c.l.b16 %v4953
        %v5233 = vunpack.c.l.b16 %v4954
        %v5234 = vunpack.c.l.b16 %v4955
        %v5235 = vunpack.c.l.b16 %v4956
        %v5236 = vunpack.c.l.b16 %v4957
        %v5237 = vunpack.c.l.b16 %v4958
        %v5238 = vunpack.c.l.b16 %v4959
        %v5239 = vunpack.c.l.b16 %v4960
        %v5240 = vunpack.c.l.b16 %v4961
        %v5241 = vunpack.c.l.b16 %v4962
        %v5242 = vunpack.c.l.b16 %v4963
        %v5243 = vunpack.c.l.b16 %v4964
        %v5244 = vunpack.c.l.b16 %v4965
        %v5245 = vunpack.c.l.b16 %v4966
        %v5246 = vunpack.c.l.b16 %v4967
        %v5247 = vunpack.c.l.b16 %v4968
        %v5248 = vunpack.c.l.b16 %v4969
        %v5249 = vunpack.c.l.b16 %v4970
        %v5250 = vunpack.c.l.b16 %v4971
        %v5251 = vunpack.c.l.b16 %v4972
        %v5252 = vunpack.c.l.b16 %v4973
        %v5253 = vunpack.c.l.b16 %v4974
        %v5254 = vunpack.c.l.b16 %v4975
        %v5255 = vunpack.c.l.b16 %v4976
        %v5256 = vunpack.c.l.b16 %v4977
        %v5257 = vunpack.c.l.b16 %v4978
        %v5258 = vpack.c.b16 %v5131, %v5130
        %v5259 = vpack.c.b16 %v5133, %v5132
        %v5260 = vpack.c.b16 %v5135, %v5134
        %v5261 = vpack.c.b16 %v5137, %v5136
        %v5262 = vpack.c.b16 %v5139, %v5138
        %v5263 = vpack.c.b16 %v5141, %v5140
        %v5264 = vpack.c.b16 %v5143, %v5142
        %v5265 = vpack.c.b16 %v5145, %v5144
        %v5266 = vpack.c.b16 %v5147, %v5146
        %v5267 = vpack.c.b16 %v5149, %v5148
        %v5268 = vpack.c.b16 %v5151, %v5150
        %v5269 = vpack.c.b16 %v5153, %v5152
        %v5270 = vpack.c.b16 %v5155, %v5154
        %v5271 = vpack.c.b16 %v5157, %v5156
        %v5272 = vpack.c.b16 %v5159, %v5158
        %v5273 = vpack.c.b16 %v5161, %v5160
        %v5274 = vpack.c.b16 %v5163, %v5162
        %v5275 = vpack.c.b16 %v5165, %v5164
        %v5276 = vpack.c.b16 %v5167, %v5166
        %v5277 = vpack.c.b16 %v5169, %v5168
        %v5278 = vpack.c.b16 %v5171, %v5170
        %v5279 = vpack.c.b16 %v5173, %v5172
        %v5280 = vpack.c.b16 %v5175, %v5174
        %v5281 = vpack.c.b16 %v5177, %v5176
        %v5282 = vpack.c.b16 %v5179, %v5178
        %v5283 = vpack.c.b16 %v5181, %v5180
        %v5284 = vpack.c.b16 %v5183, %v5182
        %v5285 = vpack.c.b16 %v5185, %v5184
        %v5286 = vpack.c.b16 %v5187, %v5186
        %v5287 = vpack.c.b16 %v5189, %v5188
        %v5288 = vpack.c.b16 %v5191, %v5190
        %v5289 = vpack.c.b16 %v5193, %v5192
        %v5290 = vpack.c.b16 %v5195, %v5194
        %v5291 = vpack.c.b16 %v5197, %v5196
        %v5292 = vpack.c.b16 %v5199, %v5198
        %v5293 = vpack.c.b16 %v5201, %v5200
        %v5294 = vpack.c.b16 %v5203, %v5202
        %v5295 = vpack.c.b16 %v5205, %v5204
        %v5296 = vpack.c.b16 %v5207, %v5206
        %v5297 = vpack.c.b16 %v5209, %v5208
        %v5298 = vpack.c.b16 %v5211, %v5210
        %v5299 = vpack.c.b16 %v5213, %v5212
        %v5300 = vpack.c.b16 %v5215, %v5214
        %v5301 = vpack.c.b16 %v5217, %v5216
        %v5302 = vpack.c.b16 %v5219, %v5218
        %v5303 = vpack.c.b16 %v5221, %v5220
        %v5304 = vpack.c.b16 %v5223, %v5222
        %v5305 = vpack.c.b16 %v5225, %v5224
        %v5306 = vpack.c.b16 %v5227, %v5226
        %v5307 = vpack.c.b16 %v5229, %v5228
        %v5308 = vpack.c.b16 %v5231, %v5230
        %v5309 = vpack.c.b16 %v5233, %v5232
        %v5310 = vpack.c.b16 %v5235, %v5234
        %v5311 = vpack.c.b16 %v5237, %v5236
        %v5312 = vpack.c.b16 %v5239, %v5238
        %v5313 = vpack.c.b16 %v5241, %v5240
        %v5314 = vpack.c.b16 %v5243, %v5242
        %v5315 = vpack.c.b16 %v5245, %v5244
        %v5316 = vpack.c.b16 %v5247, %v5246
        %v5317 = vpack.c.b16 %v5249, %v5248
        %v5318 = vpack.c.b16 %v5251, %v5250
        %v5319 = vpack.c.b16 %v5253, %v5252
        %v5320 = vpack.c.b16 %v5255, %v5254
        %v5321 = vpack.c.b16 %v5257, %v5256
        %5386 = vmatprep.subr.bf16.mxu0 0
        %5387 = vmatpush1.bf16.msra.mxu0 %v5258
        %5388 = vmatprep.subr.bf16.mxu0 0
        %5389 = vmatpush1.bf16.msra.mxu0 %v5259
        %5390 = vmatprep.subr.bf16.mxu0 0
        %5391 = vmatpush1.bf16.msra.mxu0 %v5260
        %5392 = vmatprep.subr.bf16.mxu0 0
        %5393 = vmatpush1.bf16.msra.mxu0 %v5261
        %5394 = vmatprep.subr.bf16.mxu0 0
        %5395 = vmatpush1.bf16.msra.mxu0 %v5262
        %5396 = vmatprep.subr.bf16.mxu0 0
        %5397 = vmatpush1.bf16.msra.mxu0 %v5263
        %5398 = vmatprep.subr.bf16.mxu0 0
        %5399 = vmatpush1.bf16.msra.mxu0 %v5264
        %5400 = vmatprep.subr.bf16.mxu0 0
        %5401 = vmatpush1.bf16.msra.mxu0 %v5265
        %5402 = vmatprep.subr.bf16.mxu0 0
        %5403 = vmatpush1.bf16.msra.mxu0 %v5266
        %5404 = vmatprep.subr.bf16.mxu0 0
        %5405 = vmatpush1.bf16.msra.mxu0 %v5267
        %5406 = vmatprep.subr.bf16.mxu0 0
        %5407 = vmatpush1.bf16.msra.mxu0 %v5268
        %5408 = vmatprep.subr.bf16.mxu0 0
        %5409 = vmatpush1.bf16.msra.mxu0 %v5269
        %5410 = vmatprep.subr.bf16.mxu0 0
        %5411 = vmatpush1.bf16.msra.mxu0 %v5270
        %5412 = vmatprep.subr.bf16.mxu0 0
        %5413 = vmatpush1.bf16.msra.mxu0 %v5271
        %5414 = vmatprep.subr.bf16.mxu0 0
        %5415 = vmatpush1.bf16.msra.mxu0 %v5272
        %5416 = vmatprep.subr.bf16.mxu0 0
        %5417 = vmatpush1.bf16.msra.mxu0 %v5273
        %5418 = vmatprep.mubr.bf16.mxu0 %v4989
        %5419 = vmatmul.mubr.bf16.gmra.mrb[0].mxu0 %v4988
        %v5420 = vpop.f32.mrb[0].mxu0
        %v5421 = vadd.f32 %v5000, %v5420
        %v5422 = vpop.f32.mrb[0].mxu0
        %v5423 = vpop.f32.mrb[0].mxu0
        %v5424 = vpop.f32.mrb[0].mxu0
        %5425 = vdwg.mxu0
        %5426 = vmatprep.subr.bf16.mxu0 0
        %5427 = vmatpush1.bf16.msra.mxu0 %v5274
        %5428 = vmatprep.subr.bf16.mxu0 0
        %5429 = vmatpush1.bf16.msra.mxu0 %v5275
        %5430 = vmatprep.subr.bf16.mxu0 0
        %5431 = vmatpush1.bf16.msra.mxu0 %v5276
        %5432 = vmatprep.subr.bf16.mxu0 0
        %5433 = vmatpush1.bf16.msra.mxu0 %v5277
        %5434 = vmatprep.subr.bf16.mxu0 0
        %5435 = vmatpush1.bf16.msra.mxu0 %v5278
        %5436 = vmatprep.subr.bf16.mxu0 0
        %5437 = vmatpush1.bf16.msra.mxu0 %v5279
        %5438 = vmatprep.subr.bf16.mxu0 0
        %5439 = vmatpush1.bf16.msra.mxu0 %v5280
        %5440 = vmatprep.subr.bf16.mxu0 0
        %5441 = vmatpush1.bf16.msra.mxu0 %v5281
        %5442 = vmatprep.subr.bf16.mxu0 0
        %5443 = vmatpush1.bf16.msra.mxu0 %v5282
        %5444 = vmatprep.subr.bf16.mxu0 0
        %5445 = vmatpush1.bf16.msra.mxu0 %v5283
        %5446 = vmatprep.subr.bf16.mxu0 0
        %5447 = vmatpush1.bf16.msra.mxu0 %v5284
        %5448 = vmatprep.subr.bf16.mxu0 0
        %5449 = vmatpush1.bf16.msra.mxu0 %v5285
        %5450 = vmatprep.subr.bf16.mxu0 0
        %5451 = vmatpush1.bf16.msra.mxu0 %v5286
        %5452 = vmatprep.subr.bf16.mxu0 0
        %5453 = vmatpush1.bf16.msra.mxu0 %v5287
        %5454 = vmatprep.subr.bf16.mxu0 0
        %5455 = vmatpush1.bf16.msra.mxu0 %v5288
        %5456 = vmatprep.subr.bf16.mxu0 0
        %5457 = vmatpush1.bf16.msra.mxu0 %v5289
        %5458 = vmatprep.mubr.bf16.mxu0 %v4991
        %5459 = vmatmul.mubr.bf16.gmra.mrb[0].mxu0 %v4990
        %v5460 = vpop.f32.mrb[0].mxu0
        %v5461 = vadd.f32 %v5421, %v5460
        %v5462 = vpop.f32.mrb[0].mxu0
        %v5463 = vpop.f32.mrb[0].mxu0
        %v5464 = vpop.f32.mrb[0].mxu0
        %5465 = vdwg.mxu0
        %5466 = vmatprep.subr.bf16.mxu0 0
        %5467 = vmatpush1.bf16.msra.mxu0 %v5290
        %5468 = vmatprep.subr.bf16.mxu0 0
        %5469 = vmatpush1.bf16.msra.mxu0 %v5291
        %5470 = vmatprep.subr.bf16.mxu0 0
        %5471 = vmatpush1.bf16.msra.mxu0 %v5292
        %5472 = vmatprep.subr.bf16.mxu0 0
        %5473 = vmatpush1.bf16.msra.mxu0 %v5293
        %5474 = vmatprep.subr.bf16.mxu0 0
        %5475 = vmatpush1.bf16.msra.mxu0 %v5294
        %5476 = vmatprep.subr.bf16.mxu0 0
        %5477 = vmatpush1.bf16.msra.mxu0 %v5295
        %5478 = vmatprep.subr.bf16.mxu0 0
        %5479 = vmatpush1.bf16.msra.mxu0 %v5296
        %5480 = vmatprep.subr.bf16.mxu0 0
        %5481 = vmatpush1.bf16.msra.mxu0 %v5297
        %5482 = vmatprep.subr.bf16.mxu0 0
        %5483 = vmatpush1.bf16.msra.mxu0 %v5298
        %5484 = vmatprep.subr.bf16.mxu0 0
        %5485 = vmatpush1.bf16.msra.mxu0 %v5299
        %5486 = vmatprep.subr.bf16.mxu0 0
        %5487 = vmatpush1.bf16.msra.mxu0 %v5300
        %5488 = vmatprep.subr.bf16.mxu0 0
        %5489 = vmatpush1.bf16.msra.mxu0 %v5301
        %5490 = vmatprep.subr.bf16.mxu0 0
        %5491 = vmatpush1.bf16.msra.mxu0 %v5302
        %5492 = vmatprep.subr.bf16.mxu0 0
        %5493 = vmatpush1.bf16.msra.mxu0 %v5303
        %5494 = vmatprep.subr.bf16.mxu0 0
        %5495 = vmatpush1.bf16.msra.mxu0 %v5304
        %5496 = vmatprep.subr.bf16.mxu0 0
        %5497 = vmatpush1.bf16.msra.mxu0 %v5305
        %5498 = vmatprep.mubr.bf16.mxu0 %v4993
        %5499 = vmatmul.mubr.bf16.gmra.mrb[0].mxu0 %v4992
        %v5500 = vpop.f32.mrb[0].mxu0
        %v5501 = vadd.f32 %v5461, %v5500
        %v5502 = vpop.f32.mrb[0].mxu0
        %v5503 = vpop.f32.mrb[0].mxu0
        %v5504 = vpop.f32.mrb[0].mxu0
        %5505 = vdwg.mxu0
        %5506 = vmatprep.subr.bf16.mxu0 0
        %5507 = vmatpush1.bf16.msra.mxu0 %v5306
        %5508 = vmatprep.subr.bf16.mxu0 0
        %5509 = vmatpush1.bf16.msra.mxu0 %v5307
        %5510 = vmatprep.subr.bf16.mxu0 0
        %5511 = vmatpush1.bf16.msra.mxu0 %v5308
        %5512 = vmatprep.subr.bf16.mxu0 0
        %5513 = vmatpush1.bf16.msra.mxu0 %v5309
        %5514 = vmatprep.subr.bf16.mxu0 0
        %5515 = vmatpush1.bf16.msra.mxu0 %v5310
        %5516 = vmatprep.subr.bf16.mxu0 0
        %5517 = vmatpush1.bf16.msra.mxu0 %v5311
        %5518 = vmatprep.subr.bf16.mxu0 0
        %5519 = vmatpush1.bf16.msra.mxu0 %v5312
        %5520 = vmatprep.subr.bf16.mxu0 0
        %5521 = vmatpush1.bf16.msra.mxu0 %v5313
        %5522 = vmatprep.subr.bf16.mxu0 0
        %5523 = vmatpush1.bf16.msra.mxu0 %v5314
        %5524 = vmatprep.subr.bf16.mxu0 0
        %5525 = vmatpush1.bf16.msra.mxu0 %v5315
        %5526 = vmatprep.subr.bf16.mxu0 0
        %5527 = vmatpush1.bf16.msra.mxu0 %v5316
        %5528 = vmatprep.subr.bf16.mxu0 0
        %5529 = vmatpush1.bf16.msra.mxu0 %v5317
        %5530 = vmatprep.subr.bf16.mxu0 0
        %5531 = vmatpush1.bf16.msra.mxu0 %v5318
        %5532 = vmatprep.subr.bf16.mxu0 0
        %5533 = vmatpush1.bf16.msra.mxu0 %v5319
        %5534 = vmatprep.subr.bf16.mxu0 0
        %5535 = vmatpush1.bf16.msra.mxu0 %v5320
        %5536 = vmatprep.subr.bf16.mxu0 0
        %5537 = vmatpush1.bf16.msra.mxu0 %v5321
        %5538 = vmatprep.mubr.bf16.mxu0 %v4995
        %5539 = vmatmul.mubr.bf16.gmra.mrb[0].mxu0 %v4994
        %v5540 = vpop.f32.mrb[0].mxu0
        %v5541 = vadd.f32 %v5501, %v5540
        %v5542 = vpop.f32.mrb[0].mxu0
        %v5543 = vpop.f32.mrb[0].mxu0
        %v5544 = vpop.f32.mrb[0].mxu0
        %5545 = vdwg.mxu0
        %v5546 = vmax.f32 %v5541, 0.0
        %v5547 = vand.u32 2147483647, %v5541
        %v5548 = vsub.f32 0.0, %v5547
        %v5549 = vmul.f32 %v5548, 1.442695
        %v5550 = vpow.pop %v5549
        %v5551 = vadd.f32 %v5550, 1.0
        %v5552 = vlog2.pop %v5551
        %v5553 = vmul.f32 %v5552, 0.6931472
        %v5554 = vadd.f32 %v5546, %v5553
        %5555 = vst [vmem:[%s1117] sm:$0xff] %v5554
        %s5556 = sand.u32 %s879, 1
        %s5557 = scalar_lea.sflag [#allocation3], %s5556
        %s5558 = sand.u32 %s879, 1
        %s5559 = smul.addr %s5558, 8
        %s5560 = scalar_lea.vmem [#allocation2], %s5559
        // Predicated region
        $region169: #{generator_res_ae_forward.1} parent=167 // pred_check
          %p5561 = pneg %p889
        $region170: #{generator_res_ae_forward.1} parent=167 // pred_check_branch
          %5563 = sbr.rel (%p5561) target = $region172
        $region171: #{generator_res_ae_forward.1} parent=167 // pred_region
          %s5565 = ssub.s32 128, 128
          %5566 = vsyncadd %s5557, %s5565
          %s5567 = smul.addr %s89, 128
          %s5568 = scalar_lea.hbm %s75, %s5567
          %s5570 = sshll.u32 %s5560, 4
          %s5571 = int_to_ptr.vmem [resolvable:$true] %s5570
          %5573 = dma.vmem_to_hbm [thread:$0]  %s5571, 128, %s5568, %s5557
        $region172: #{generator_res_ae_forward.1} parent=167 // pred_fallthru
          _
      $region168: #{generator_res_ae_forward.1} parent=5 // pred_fallthru
        _
      %p5574 = scmp.le.s32.totalorder 2, %s84
      // Predicated region
      $region173: #{generator_res_ae_forward.1} parent=5 // pred_check
        %p5575 = pneg %p5574
      $region174: #{generator_res_ae_forward.1} parent=5 // pred_check_branch
        %5577 = sbr.rel (%p5575) target = $region176
      $region175: #{generator_res_ae_forward.1} parent=5 // pred_region
        %s5578 = ssub.s32 %s84, 2
        // Predicated region
        $region177: #{generator_res_ae_forward.1} parent=175 // pred_check
          %p5579 = pneg %p895
        $region178: #{generator_res_ae_forward.1} parent=175 // pred_check_branch
          %5581 = sbr.rel (%p5579) target = $region180
        $region179: #{generator_res_ae_forward.1} parent=175 // pred_region
          %s5582 = sand.u32 %s880, 1
          %s5583 = scalar_lea.sflag [#allocation3], %s5582
          %s5584 = sand.u32 %s880, 1
          %s5585 = smul.addr %s5584, 8
          %s5586 = scalar_lea.vmem [#allocation2], %s5585
          %5587 = dma.done %s5583, 128
        $region180: #{generator_res_ae_forward.1} parent=175 // pred_fallthru
          _
      $region176: #{generator_res_ae_forward.1} parent=5 // pred_fallthru
        _
    $region6: #{generator_res_ae_forward.1} parent=1 // loop_footer
      %s88 = sadd.s32 1, %s84
    $region7: #{generator_res_ae_forward.1} parent=1 // loop_footer_branch
      %83 = sbr.rel target = $region3
    $region8: #{generator_res_ae_forward.1} parent=1 // loop_exit
      _
    %5588 = vsyncpa [#allocation3], 1
    %s5589 = scalar_lea.sflag [#allocation3], 1
    %5590 = vsyncpa %s5589, 1

</llo_original>
